<compile_context>
chip_gen: v6e
topology: v6e:2x2x1
jax: 0.10.0
libtpu: 0.0.40
codegen_flags: <defaults>
</compile_context>

<pallas_src>
import jax
import jax.numpy as jnp
from jax.experimental import pallas as pl
from jax.experimental.pallas import tpu as pltpu

EPS = 1e-5


def bn_relu_conv1x1_kernel(x_ref, gamma_ref, beta_ref, w_ref, o_ref, acc_ref):
    # x_ref:     (tc, M)            f32  C_in tile on sublanes, spatial on lanes
    # gamma_ref: (tc, 1)            f32
    # beta_ref:  (tc, 1)            f32
    # w_ref:     (tc, C_out_blk)    f32  (C_in tile on sublanes)
    # o_ref:     (C_out_blk, M)     f32
    # acc_ref:   (C_out_blk, M)     f32  resident accumulator across the K axis
    k = pl.program_id(1)

    x = x_ref[...]
    inv_m = 1.0 / x.shape[1]                           # static python float

    # --- BatchNorm2d (training mode, biased variance), two-pass for numerical
    #     stability, folded into one per-channel affine ---------------------
    mean = jnp.sum(x, axis=-1, keepdims=True) * inv_m  # (tc, 1)
    xc = x - mean
    var = jnp.sum(xc * xc, axis=-1, keepdims=True) * inv_m
    scale = gamma_ref[...] * jax.lax.rsqrt(var + EPS)  # per-channel scale

    # --- affine + ReLU in one VALU pass ------------------------------------
    y = jnp.maximum(xc * scale + beta_ref[...], 0.0)   # (tc, M)

    # --- partial 1x1 conv: contract this C_in tile on the MXU --------------
    # w_ref is (tc, C_out_blk); contract dim 0 of both operands -> (C_out_blk, M)
    contrib = jax.lax.dot_general(
        w_ref[...], y,
        dimension_numbers=(((0,), (0,)), ((), ())),
        preferred_element_type=jnp.float32)

    @pl.when(k == 0)
    def _():
        acc_ref[...] = jnp.zeros_like(acc_ref)

    acc_ref[...] += contrib

    @pl.when(k == pl.num_programs(1) - 1)
    def _():
        o_ref[...] = acc_ref[...]


def _pick_cin_tile(c_in):
    # 2-4 pipeline steps; each tile must be a multiple of 8 sublanes.
    for steps in (3, 2, 4):
        tc = c_in // steps
        if c_in % steps == 0 and tc % 8 == 0:
            return tc
    return c_in  # single step; full extent is always a legal block


def _num_cout_splits(c_out):
    # Split C_out across the two TensorCores only on v7x (v5e/v6e have 1 TC:
    # the "parallel" axis would become a serial loop that doubles the x read).
    try:
        kind = jax.devices()[0].device_kind.lower()
    except Exception:
        return 1
    dual_tc = ("v7" in kind) or ("7x" in kind)
    if dual_tc and c_out % 2 == 0 and (c_out // 2) % 8 == 0:
        return 2
    return 1


@jax.jit
def bn_relu_conv1x1(x_nchw, gamma, beta, w_oihw):
    """x_nchw: (N, C_in, H, W); gamma/beta: (C_in,); w_oihw: (C_out, C_in, 1, 1)."""
    N, C_in, H, W = x_nchw.shape
    C_out = w_oihw.shape[0]
    M = N * H * W

    tc = _pick_cin_tile(C_in)
    n_k = C_in // tc
    n_split = _num_cout_splits(C_out)
    c_out_blk = C_out // n_split

    # Layout plumbing only. For N == 1 (the module's shape) x stays a pure
    # reshape: no XLA transpose / extra HBM pass over the 2 MiB activation.
    if N == 1:
        x2d = x_nchw.reshape(C_in, M)
    else:
        x2d = jnp.moveaxis(x_nchw, 1, 0).reshape(C_in, M)
    x2d = x2d.astype(jnp.float32)
    gamma2d = gamma.reshape(C_in, 1).astype(jnp.float32)
    beta2d = beta.reshape(C_in, 1).astype(jnp.float32)
    # Only the small (~0.5 MiB) weight is transposed so each C_in tile of it is
    # a sublane-aligned block: (n_split, C_in, C_out_blk).
    w3d = (w_oihw.reshape(C_out, C_in).astype(jnp.float32)
           .reshape(n_split, c_out_blk, C_in)
           .swapaxes(1, 2))

    cost = pl.CostEstimate(
        flops=2 * M * C_in * C_out + 8 * M * C_in,
        transcendentals=C_in,
        bytes_accessed=4 * (n_split * M * C_in + C_in * C_out
                            + M * C_out + 2 * C_in),
    )

    # Total VMEM use (double-buffered tiles + accumulator + temps) is ~5 MiB,
    # well under the scoped default on v5e/v6e/v7x, so no vmem_limit needed;
    # the grid exists purely for DMA/compute overlap, not capacity.
    out3d = pl.pallas_call(
        bn_relu_conv1x1_kernel,
        out_shape=jax.ShapeDtypeStruct((n_split, c_out_blk, M), jnp.float32),
        grid_spec=pltpu.PrefetchScalarGridSpec(
            num_scalar_prefetch=0,
            grid=(n_split, n_k),                      # reduction axis last
            in_specs=[
                pl.BlockSpec((tc, M), lambda c, k: (k, 0)),            # x
                pl.BlockSpec((tc, 1), lambda c, k: (k, 0)),            # gamma
                pl.BlockSpec((tc, 1), lambda c, k: (k, 0)),            # beta
                pl.BlockSpec((None, tc, c_out_blk),
                             lambda c, k: (c, k, 0)),                  # weight
            ],
            out_specs=pl.BlockSpec((None, c_out_blk, M),
                                   lambda c, k: (c, 0, 0)),
            scratch_shapes=[pltpu.VMEM((c_out_blk, M), jnp.float32)],
        ),
        compiler_params=pltpu.CompilerParams(
            dimension_semantics=("parallel", "arbitrary")),
        cost_estimate=cost,
    )(x2d, gamma2d, beta2d, w3d)

    out2d = out3d.reshape(C_out, M)   # pure reshape: C_out split is leading
    if N == 1:
        return out2d.reshape(1, C_out, H, W)
    return jnp.moveaxis(out2d.reshape(C_out, N, H, W), 1, 0)


def reference(x_nchw, gamma, beta, w_oihw):
    mean = jnp.mean(x_nchw, axis=(0, 2, 3), keepdims=True)
    var = jnp.var(x_nchw, axis=(0, 2, 3), keepdims=True)  # biased, like torch BN train
    y = (x_nchw - mean) / jnp.sqrt(var + EPS)
    y = y * gamma[None, :, None, None] + beta[None, :, None, None]
    y = jnp.maximum(y, 0.0)
    return jax.lax.conv_general_dilated(
        y, w_oihw, window_strides=(1, 1), padding="VALID",
        dimension_numbers=("NCHW", "OIHW", "NCHW"))


if __name__ == "__main__":
    N, C_IN, H, W = 1, 672, 28, 28   # matches x122 = randn([1, 672, 28, 28])
    C_OUT = 192

    key = jax.random.PRNGKey(0)
    kx, kg, kb, kw = jax.random.split(key, 4)

    x = jax.random.normal(kx, (N, C_IN, H, W), dtype=jnp.float32)
    # Deterministic parameter init (synthetic; not a checkpoint load).
    gamma = 1.0 + 0.1 * jax.random.normal(kg, (C_IN,), dtype=jnp.float32)
    beta = 0.1 * jax.random.normal(kb, (C_IN,), dtype=jnp.float32)
    conv_w = 0.05 * jax.random.normal(kw, (C_OUT, C_IN, 1, 1), dtype=jnp.float32)

    out = jax.block_until_ready(bn_relu_conv1x1(x, gamma, beta, conv_w))
    assert out.shape == (N, C_OUT, H, W), out.shape

    ref = jax.block_until_ready(reference(x, gamma, beta, conv_w))
    assert jnp.allclose(out, ref, rtol=2e-3, atol=2e-3), float(
        jnp.max(jnp.abs(out - ref)))

    print("KERNEL_OK")
</pallas_src>

<mosaic_0001>
module attributes {stable_mosaic.version = 11 : i64} {
  func.func @bn_relu_conv1x1_kernel(%arg0: i32, %arg1: i32, %arg2: memref<224x784xf32, #tpu.memory_space<vmem>>, %arg3: memref<224x1xf32, #tpu.memory_space<vmem>>, %arg4: memref<224x1xf32, #tpu.memory_space<vmem>>, %arg5: memref<1x224x192xf32, #tpu.memory_space<vmem>>, %arg6: memref<1x192x784xf32, #tpu.memory_space<vmem>>, %arg7: memref<192x784xf32, #tpu.memory_space<vmem>>) attributes {dimension_semantics = [#tpu.dimension_semantics<parallel>, #tpu.dimension_semantics<arbitrary>], iteration_bounds = array<i64: 1, 3>, scalar_prefetch = 0 : i64, scratch_operands = 1 : i64, tpu.core_type = #tpu.core_type<tc>, window_params = [{transform_indices = @transform_0, window_bounds = array<i64: 224, 784>}, {transform_indices = @transform_1, window_bounds = array<i64: 224, 1>}, {transform_indices = @transform_2, window_bounds = array<i64: 224, 1>}, {transform_indices = @transform_3, window_bounds = array<i64: 1, 224, 192>}, {transform_indices = @transform_4, window_bounds = array<i64: 1, 192, 784>}]} {
    %c0 = arith.constant 0 : index
    %c0_0 = arith.constant 0 : index
    %0 = vector.load %arg2[%c0, %c0_0] : memref<224x784xf32, #tpu.memory_space<vmem>>, vector<224x784xf32>
    %cst = arith.constant dense<0.000000e+00> : vector<224xf32>
    %1 = vector.multi_reduction <add>, %0, %cst [1] : vector<224x784xf32> to vector<224xf32>
    %2 = vector.shape_cast %1 : vector<224xf32> to vector<224x1xf32>
    %cst_1 = arith.constant 0.00127551018 : f32
    %3 = vector.broadcast %cst_1 : f32 to vector<224x1xf32>
    %4 = arith.mulf %2, %3 : vector<224x1xf32>
    %5 = vector.broadcast %4 : vector<224x1xf32> to vector<224x784xf32>
    %6 = arith.subf %0, %5 : vector<224x784xf32>
    %7 = arith.mulf %6, %6 : vector<224x784xf32>
    %cst_2 = arith.constant dense<0.000000e+00> : vector<224xf32>
    %8 = vector.multi_reduction <add>, %7, %cst_2 [1] : vector<224x784xf32> to vector<224xf32>
    %9 = vector.shape_cast %8 : vector<224xf32> to vector<224x1xf32>
    %cst_3 = arith.constant 0.00127551018 : f32
    %10 = vector.broadcast %cst_3 : f32 to vector<224x1xf32>
    %11 = arith.mulf %9, %10 : vector<224x1xf32>
    %c0_4 = arith.constant 0 : index
    %c0_5 = arith.constant 0 : index
    %12 = vector.load %arg3[%c0_4, %c0_5] : memref<224x1xf32, #tpu.memory_space<vmem>>, vector<224x1xf32>
    %cst_6 = arith.constant 9.99999974E-6 : f32
    %13 = vector.broadcast %cst_6 : f32 to vector<224x1xf32>
    %14 = arith.addf %11, %13 : vector<224x1xf32>
    %15 = math.rsqrt %14 : vector<224x1xf32>
    %16 = arith.mulf %12, %15 : vector<224x1xf32>
    %17 = vector.broadcast %16 : vector<224x1xf32> to vector<224x784xf32>
    %18 = arith.mulf %6, %17 : vector<224x784xf32>
    %c0_7 = arith.constant 0 : index
    %c0_8 = arith.constant 0 : index
    %19 = vector.load %arg4[%c0_7, %c0_8] : memref<224x1xf32, #tpu.memory_space<vmem>>, vector<224x1xf32>
    %20 = vector.broadcast %19 : vector<224x1xf32> to vector<224x784xf32>
    %21 = arith.addf %18, %20 : vector<224x784xf32>
    %cst_9 = arith.constant 0.000000e+00 : f32
    %22 = vector.broadcast %cst_9 : f32 to vector<224x784xf32>
    %23 = arith.maximumf %21, %22 : vector<224x784xf32>
    %c0_10 = arith.constant 0 : index
    %c0_11 = arith.constant 0 : index
    %c0_12 = arith.constant 0 : index
    %24 = vector.load %arg5[%c0_10, %c0_11, %c0_12] : memref<1x224x192xf32, #tpu.memory_space<vmem>>, vector<1x224x192xf32>
    %25 = vector.shape_cast %24 : vector<1x224x192xf32> to vector<224x192xf32>
    %cst_13 = arith.constant dense<0.000000e+00> : vector<192x784xf32>
    %26 = tpu.matmul %25, %23, %cst_13 {dimension_numbers = #tpu.dot_dimension_numbers<[0], [0], [1], [1], [0, 1, 1, 1], [], []>} : vector<224x192xf32>, vector<224x784xf32>, vector<192x784xf32> -> vector<192x784xf32>
    %c0_i32 = arith.constant 0 : i32
    %27 = arith.cmpi eq, %arg1, %c0_i32 : i32
    %28 = arith.extui %27 : i1 to i32
    %c0_i32_14 = arith.constant 0 : i32
    %29 = arith.cmpi ne, %28, %c0_i32_14 : i32
    scf.if %29 {
      %cst_20 = arith.constant 0.000000e+00 : f32
      %36 = vector.broadcast %cst_20 : f32 to vector<192x784xf32>
      %c0_21 = arith.constant 0 : index
      %c0_22 = arith.constant 0 : index
      %37 = vector.load %arg7[%c0_21, %c0_22] : memref<192x784xf32, #tpu.memory_space<vmem>>, vector<192x784xf32>
      tpu.vector_store %arg7[%c0_21, %c0_22], %36 {strides = array<i32>} : memref<192x784xf32, #tpu.memory_space<vmem>>, vector<192x784xf32>,
    } else {
    }
    %c0_15 = arith.constant 0 : index
    %c0_16 = arith.constant 0 : index
    %30 = vector.load %arg7[%c0_15, %c0_16] : memref<192x784xf32, #tpu.memory_space<vmem>>, vector<192x784xf32>
    %31 = arith.addf %30, %26 : vector<192x784xf32>
    %c0_17 = arith.constant 0 : index
    %c0_18 = arith.constant 0 : index
    %32 = vector.load %arg7[%c0_17, %c0_18] : memref<192x784xf32, #tpu.memory_space<vmem>>, vector<192x784xf32>
    tpu.vector_store %arg7[%c0_17, %c0_18], %31 {strides = array<i32>} : memref<192x784xf32, #tpu.memory_space<vmem>>, vector<192x784xf32>,
    %c2_i32 = arith.constant 2 : i32
    %33 = arith.cmpi eq, %arg1, %c2_i32 : i32
    %34 = arith.extui %33 : i1 to i32
    %c0_i32_19 = arith.constant 0 : i32
    %35 = arith.cmpi ne, %34, %c0_i32_19 : i32
    scf.if %35 {
      %c0_20 = arith.constant 0 : index
      %c0_21 = arith.constant 0 : index
      %36 = vector.load %arg7[%c0_20, %c0_21] : memref<192x784xf32, #tpu.memory_space<vmem>>, vector<192x784xf32>
      %c0_22 = arith.constant 0 : index
      %c0_23 = arith.constant 0 : index
      %c0_24 = arith.constant 0 : index
      %37 = vector.load %arg6[%c0_22, %c0_23, %c0_24] : memref<1x192x784xf32, #tpu.memory_space<vmem>>, vector<1x192x784xf32>
      %38 = vector.shape_cast %37 : vector<1x192x784xf32> to vector<192x784xf32>
      %39 = vector.shape_cast %36 : vector<192x784xf32> to vector<1x192x784xf32>
      tpu.vector_store %arg6[%c0_22, %c0_23, %c0_24], %39 {strides = array<i32>} : memref<1x192x784xf32, #tpu.memory_space<vmem>>, vector<1x192x784xf32>,
    } else {
    }
    return
  }
  func.func @transform_0(%arg0: i32, %arg1: i32) -> (i32, i32) {
    %c0_i32 = arith.constant 0 : i32
    %c0_i32_0 = arith.constant 0 : i32
    return %arg1, %c0_i32 : i32, i32
  }
  func.func @transform_1(%arg0: i32, %arg1: i32) -> (i32, i32) {
    %c0_i32 = arith.constant 0 : i32
    %c0_i32_0 = arith.constant 0 : i32
    return %arg1, %c0_i32 : i32, i32
  }
  func.func @transform_2(%arg0: i32, %arg1: i32) -> (i32, i32) {
    %c0_i32 = arith.constant 0 : i32
    %c0_i32_0 = arith.constant 0 : i32
    return %arg1, %c0_i32 : i32, i32
  }
  func.func @transform_3(%arg0: i32, %arg1: i32) -> (i32, i32, i32) {
    %c0_i32 = arith.constant 0 : i32
    %c0_i32_0 = arith.constant 0 : i32
    return %arg0, %arg1, %c0_i32 : i32, i32, i32
  }
  func.func @transform_4(%arg0: i32, %arg1: i32) -> (i32, i32, i32) {
    %c0_i32 = arith.constant 0 : i32
    %c0_i32_0 = arith.constant 0 : i32
    %c0_i32_1 = arith.constant 0 : i32
    return %arg0, %c0_i32, %c0_i32_0 : i32, i32, i32
  }
}

</mosaic_0001>

<llo_original>
// kernel: bn_relu_conv1x1.1
$region0: #{bn_relu_conv1x1.1}
  #allocation0 [shape = 'u32[]', space=smem, size = 0x4, offset = 0x4, fixed_abs, tag = 'smem constant byte address 0x4 - core index']
  #allocation1 [shape = 'u32[144,128]{1,0:T(1,128)}', space=vmem, size = 0x12000, scoped, tag = 'internal scratch']
  #allocation2 [shape = 'f32[192,784]{1,0:T(8,128)}', space=vmem, size = 0xa8000, scoped, tag = 'scratch operand']
  %s0 = inlined_call_operand.vmem [shape: f32[672,784], index: 0, kind: input, shape index: {}]
  %s1 = inlined_call_operand.vmem [shape: f32[672,1], index: 1, kind: input, shape index: {}]
  %s2 = inlined_call_operand.vmem [shape: f32[672,1], index: 2, kind: input, shape index: {}]
  %s3 = inlined_call_operand.vmem [shape: f32[1,672,192], index: 3, kind: input, shape index: {}]
  %s4 = inlined_call_operand.vmem [shape: f32[1,192,784], index: 4, kind: output, shape index: {}]
  %s5 = sld [smem:[#allocation0]]
  $region57: #{bn_relu_conv1x1.1} parent=0
    _
  %s7 = ssub.s32 1, %s5
  %s8 = scalar_select 0, %s7, %s5
  loop: start=0, step=1, limit=5
  $region2: #{bn_relu_conv1x1.1} parent=0 // loop_pre_header
    _
  $region3: #{bn_relu_conv1x1.1} parent=0 // loop_header
    %s10 = sphi 0, %s14
    %p11 = scmp.ge.s32.totalorder %s10, 5
    %s17 = sphi 0, %s29
    %s18 = sphi 0, %s25
    %s19 = sphi 0, %s17
    %s20 = sphi 0, %s18
    %s21 = sphi 0, %s19
    %s22 = sphi 0, %s20
    %s32 = sphi 0, %s34
    %s35 = sphi 0, %s32
    %s36 = sphi 0, %s35
    %s52 = sphi 0, %s36
    %s58 = sphi 0, %s60
    %s61 = sphi 0, %s58
    %s62 = sphi 0, %s61
    %s78 = sphi 0, %s62
    %s84 = sphi 0, %s86
    %s87 = sphi 0, %s84
    %s88 = sphi 0, %s87
    %s104 = sphi 0, %s88
    %s112 = sphi 0, %s114
    %s115 = sphi 0, %s112
    %s116 = sphi 0, %s115
    %s132 = sphi 0, %s116
    %s138 = sphi 0, %s140
    %s141 = sphi 0, %s138
    %s142 = sphi 0, %s141
    %s158 = sphi 0, %s142
  $region4: #{bn_relu_conv1x1.1} parent=0 // loop_header_branch
    %13 = sbr.rel (%p11) target = $region8
  $region5: #{bn_relu_conv1x1.1} parent=0 // loop_body
    %s15 = ssub.s32 %s10, 1
    %s16 = ssub.s32 %s10, 2
    %s23 = sadd.s32 1, %s18
    %p24 = scmp.ge.s32.totalorder %s23, 3
    %s25 = scalar_select %p24, 0, %s23
    %s26 = sadd.s32 1, %s17
    %s27 = scalar_select %p24, %s26, %s17
    %p28 = scmp.ge.s32.totalorder %s27, 1
    %s29 = scalar_select %p28, 0, %s27
    %s30 = ssub.s32 %s18, %s25
    %p31 = scmp.eq.s32.totalorder %s30, 0
    %s33 = sadd.s32 %s32, 1
    %s34 = scalar_select %p31, %s32, %s33
    %p37 = pneg %p31
    %p38 = scmp.eq.s32.totalorder %s10, 2
    %p39 = por %p37, %p38
    %p40 = scmp.ne.s32.totalorder %s32, %s35
    %p41 = scmp.eq.s32.totalorder %s10, 0
    %p42 = por %p40, %p41
    %p43 = scmp.ne.s32.totalorder %s32, %s35
    %p44 = scmp.eq.s32.totalorder %s15, 2
    %p45 = por %p43, %p44
    %p46 = scmp.ne.s32.totalorder %s35, %s36
    %p47 = scmp.eq.s32.totalorder %s15, 0
    %p48 = por %p46, %p47
    %p49 = scmp.ne.s32.totalorder %s35, %s36
    %p50 = scmp.eq.s32.totalorder %s16, 2
    %p51 = por %p49, %p50
    %p53 = scmp.ne.s32.totalorder %s36, %s52
    %p54 = scmp.eq.s32.totalorder %s16, 0
    %p55 = por %p53, %p54
    %s56 = ssub.s32 %s18, %s25
    %p57 = scmp.eq.s32.totalorder %s56, 0
    %s59 = sadd.s32 %s58, 1
    %s60 = scalar_select %p57, %s58, %s59
    %p63 = pneg %p57
    %p64 = scmp.eq.s32.totalorder %s10, 2
    %p65 = por %p63, %p64
    %p66 = scmp.ne.s32.totalorder %s58, %s61
    %p67 = scmp.eq.s32.totalorder %s10, 0
    %p68 = por %p66, %p67
    %p69 = scmp.ne.s32.totalorder %s58, %s61
    %p70 = scmp.eq.s32.totalorder %s15, 2
    %p71 = por %p69, %p70
    %p72 = scmp.ne.s32.totalorder %s61, %s62
    %p73 = scmp.eq.s32.totalorder %s15, 0
    %p74 = por %p72, %p73
    %p75 = scmp.ne.s32.totalorder %s61, %s62
    %p76 = scmp.eq.s32.totalorder %s16, 2
    %p77 = por %p75, %p76
    %p79 = scmp.ne.s32.totalorder %s62, %s78
    %p80 = scmp.eq.s32.totalorder %s16, 0
    %p81 = por %p79, %p80
    %s82 = ssub.s32 %s18, %s25
    %p83 = scmp.eq.s32.totalorder %s82, 0
    %s85 = sadd.s32 %s84, 1
    %s86 = scalar_select %p83, %s84, %s85
    %p89 = pneg %p83
    %p90 = scmp.eq.s32.totalorder %s10, 2
    %p91 = por %p89, %p90
    %p92 = scmp.ne.s32.totalorder %s84, %s87
    %p93 = scmp.eq.s32.totalorder %s10, 0
    %p94 = por %p92, %p93
    %p95 = scmp.ne.s32.totalorder %s84, %s87
    %p96 = scmp.eq.s32.totalorder %s15, 2
    %p97 = por %p95, %p96
    %p98 = scmp.ne.s32.totalorder %s87, %s88
    %p99 = scmp.eq.s32.totalorder %s15, 0
    %p100 = por %p98, %p99
    %p101 = scmp.ne.s32.totalorder %s87, %s88
    %p102 = scmp.eq.s32.totalorder %s16, 2
    %p103 = por %p101, %p102
    %p105 = scmp.ne.s32.totalorder %s88, %s104
    %p106 = scmp.eq.s32.totalorder %s16, 0
    %p107 = por %p105, %p106
    %s108 = ssub.s32 %s17, %s29
    %s109 = ssub.s32 %s18, %s25
    %s110 = sor.u32 %s108, %s109
    %p111 = scmp.eq.s32.totalorder %s110, 0
    %s113 = sadd.s32 %s112, 1
    %s114 = scalar_select %p111, %s112, %s113
    %p117 = pneg %p111
    %p118 = scmp.eq.s32.totalorder %s10, 2
    %p119 = por %p117, %p118
    %p120 = scmp.ne.s32.totalorder %s112, %s115
    %p121 = scmp.eq.s32.totalorder %s10, 0
    %p122 = por %p120, %p121
    %p123 = scmp.ne.s32.totalorder %s112, %s115
    %p124 = scmp.eq.s32.totalorder %s15, 2
    %p125 = por %p123, %p124
    %p126 = scmp.ne.s32.totalorder %s115, %s116
    %p127 = scmp.eq.s32.totalorder %s15, 0
    %p128 = por %p126, %p127
    %p129 = scmp.ne.s32.totalorder %s115, %s116
    %p130 = scmp.eq.s32.totalorder %s16, 2
    %p131 = por %p129, %p130
    %p133 = scmp.ne.s32.totalorder %s116, %s132
    %p134 = scmp.eq.s32.totalorder %s16, 0
    %p135 = por %p133, %p134
    %s136 = ssub.s32 %s17, %s29
    %p137 = scmp.eq.s32.totalorder %s136, 0
    %s139 = sadd.s32 %s138, 1
    %s140 = scalar_select %p137, %s138, %s139
    %p143 = pneg %p137
    %p144 = scmp.eq.s32.totalorder %s10, 2
    %p145 = por %p143, %p144
    %p146 = scmp.ne.s32.totalorder %s138, %s141
    %p147 = scmp.eq.s32.totalorder %s10, 0
    %p148 = por %p146, %p147
    %p149 = scmp.ne.s32.totalorder %s138, %s141
    %p150 = scmp.eq.s32.totalorder %s15, 2
    %p151 = por %p149, %p150
    %p152 = scmp.ne.s32.totalorder %s141, %s142
    %p153 = scmp.eq.s32.totalorder %s15, 0
    %p154 = por %p152, %p153
    %p155 = scmp.ne.s32.totalorder %s141, %s142
    %p156 = scmp.eq.s32.totalorder %s16, 2
    %p157 = por %p155, %p156
    %p159 = scmp.ne.s32.totalorder %s142, %s158
    %p160 = scmp.eq.s32.totalorder %s16, 0
    %p161 = por %p159, %p160
    %p162 = scmp.le.s32.totalorder 1, %s10
    %p163 = scmp.lt.s32.totalorder %s10, 4
    %p164 = pnand %p162, %p163
    %p165 = pneg %p164
    // Predicated region
    $region9: #{bn_relu_conv1x1.1} parent=5 // pred_check
      _
    $region10: #{bn_relu_conv1x1.1} parent=5 // pred_check_branch
      %167 = sbr.rel (%p164) target = $region12
    $region11: #{bn_relu_conv1x1.1} parent=5 // pred_region
      %s168 = ssub.s32 %s10, 1
    $region12: #{bn_relu_conv1x1.1} parent=5 // pred_fallthru
      _
    %p169 = scmp.lt.s32.totalorder %s10, 3
    // Predicated region
    $region13: #{bn_relu_conv1x1.1} parent=5 // pred_check
      %p170 = pneg %p169
    $region14: #{bn_relu_conv1x1.1} parent=5 // pred_check_branch
      %172 = sbr.rel (%p170) target = $region16
    $region15: #{bn_relu_conv1x1.1} parent=5 // pred_region
      // Predicated region
      $region17: #{bn_relu_conv1x1.1} parent=15 // pred_check
        %p173 = pneg %p42
      $region18: #{bn_relu_conv1x1.1} parent=15 // pred_check_branch
        %175 = sbr.rel (%p173) target = $region20
      $region19: #{bn_relu_conv1x1.1} parent=15 // pred_region
        %s176 = smul.u32 28, %s18
        %p177 = scmp.lt.s32.totalorder %s176, 83
        %s178 = scalar_select %p177, %s176, 83
        %s179 = smul.addr %s178, 7
        %s180 = smul.addr %s179, 8
        %s181 = scalar_lea.vmem %s0, %s180
        %s182 = smul.u32 28, %s18
      $region20: #{bn_relu_conv1x1.1} parent=15 // pred_fallthru
        _
      // Predicated region
      $region21: #{bn_relu_conv1x1.1} parent=15 // pred_check
        %p183 = pneg %p68
      $region22: #{bn_relu_conv1x1.1} parent=15 // pred_check_branch
        %185 = sbr.rel (%p183) target = $region24
      $region23: #{bn_relu_conv1x1.1} parent=15 // pred_region
        %s186 = smul.u32 28, %s18
        %p187 = scmp.lt.s32.totalorder %s186, 83
        %s188 = scalar_select %p187, %s186, 83
        %s189 = smul.addr %s188, 8
        %s190 = scalar_lea.vmem %s1, %s189
        %s191 = smul.u32 28, %s18
      $region24: #{bn_relu_conv1x1.1} parent=15 // pred_fallthru
        _
      // Predicated region
      $region25: #{bn_relu_conv1x1.1} parent=15 // pred_check
        %p192 = pneg %p94
      $region26: #{bn_relu_conv1x1.1} parent=15 // pred_check_branch
        %194 = sbr.rel (%p192) target = $region28
      $region27: #{bn_relu_conv1x1.1} parent=15 // pred_region
        %s195 = smul.u32 28, %s18
        %p196 = scmp.lt.s32.totalorder %s195, 83
        %s197 = scalar_select %p196, %s195, 83
        %s198 = smul.addr %s197, 8
        %s199 = scalar_lea.vmem %s2, %s198
        %s200 = smul.u32 28, %s18
      $region28: #{bn_relu_conv1x1.1} parent=15 // pred_fallthru
        _
      // Predicated region
      $region29: #{bn_relu_conv1x1.1} parent=15 // pred_check
        %p201 = pneg %p122
      $region30: #{bn_relu_conv1x1.1} parent=15 // pred_check_branch
        %203 = sbr.rel (%p201) target = $region32
      $region31: #{bn_relu_conv1x1.1} parent=15 // pred_region
        %s204 = smul.u32 28, %s18
        %p205 = scmp.lt.s32.totalorder %s17, 0
        %s206 = scalar_select %p205, %s17, 0
        %p207 = scmp.lt.s32.totalorder %s204, 83
        %s208 = scalar_select %p207, %s204, 83
        %s209 = smul.addr %s208, 2
        %s210 = smul.addr %s206, 168
        %s211 = sadd.s32 %s209, %s210
        %s212 = smul.addr %s211, 8
        %s213 = scalar_lea.vmem %s3, %s212
        %s214 = smul.u32 28, %s18
      $region32: #{bn_relu_conv1x1.1} parent=15 // pred_fallthru
        _
    $region16: #{bn_relu_conv1x1.1} parent=5 // pred_fallthru
      _
    %p215 = scmp.le.s32.totalorder 1, %s10
    %p216 = scmp.lt.s32.totalorder %s10, 4
    %p217 = pnand %p215, %p216
    %p218 = pneg %p217
    // Predicated region
    $region33: #{bn_relu_conv1x1.1} parent=5 // pred_check
      _
    $region34: #{bn_relu_conv1x1.1} parent=5 // pred_check_branch
      %220 = sbr.rel (%p217) target = $region36
    $region35: #{bn_relu_conv1x1.1} parent=5 // pred_region
      %s221 = ssub.s32 %s10, 1
      %s222 = smul.u32 28, %s20
      %p223 = scmp.lt.s32.totalorder %s222, 83
      %s224 = scalar_select %p223, %s222, 83
      %s225 = smul.addr %s224, 7
      %s226 = smul.addr %s225, 8
      %s227 = scalar_lea.vmem %s0, %s226
      %p228 = pneg %p48
      %p229 = pneg %p45
      %s230 = smul.u32 28, %s20
      %p231 = scmp.lt.s32.totalorder %s230, 83
      %s232 = scalar_select %p231, %s230, 83
      %s233 = smul.addr %s232, 8
      %s234 = scalar_lea.vmem %s1, %s233
      %p235 = pneg %p74
      %p236 = pneg %p71
      %s237 = smul.u32 28, %s20
      %p238 = scmp.lt.s32.totalorder %s237, 83
      %s239 = scalar_select %p238, %s237, 83
      %s240 = smul.addr %s239, 8
      %s241 = scalar_lea.vmem %s2, %s240
      %p242 = pneg %p100
      %p243 = pneg %p97
      %s244 = smul.u32 28, %s20
      %p245 = scmp.lt.s32.totalorder %s19, 0
      %s246 = scalar_select %p245, %s19, 0
      %p247 = scmp.lt.s32.totalorder %s244, 83
      %s248 = scalar_select %p247, %s244, 83
      %s249 = smul.addr %s248, 2
      %s250 = smul.addr %s246, 168
      %s251 = sadd.s32 %s249, %s250
      %s252 = smul.addr %s251, 8
      %s253 = scalar_lea.vmem %s3, %s252
      %p254 = pneg %p128
      %p255 = pneg %p125
      %p256 = pneg %p154
      %p257 = pneg %p151
      %p258 = scmp.lt.s32.totalorder %s19, 0
      %s259 = scalar_select %p258, %s19, 0
      %s260 = smul.addr %s259, 168
      %s261 = smul.addr %s260, 8
      %s262 = scalar_lea.vmem %s4, %s261
      %s263 = smul.u32 28, %s20
      %p264 = scmp.lt.s32.totalorder %s263, 83
      %s265 = scalar_select %p264, %s263, 83
      %s266 = smul.addr %s265, 7
      %s267 = smul.addr %s266, 8
      %s268 = scalar_lea.vmem %s0, %s267
      %s269 = smul.u32 28, %s20
      %s270 = smul.u32 28, %s20
      %p271 = scmp.lt.s32.totalorder %s270, 83
      %s272 = scalar_select %p271, %s270, 83
      %s273 = smul.addr %s272, 8
      %s274 = scalar_lea.vmem %s1, %s273
      %s275 = smul.u32 28, %s20
      %s276 = smul.u32 28, %s20
      %p277 = scmp.lt.s32.totalorder %s276, 83
      %s278 = scalar_select %p277, %s276, 83
      %s279 = smul.addr %s278, 8
      %s280 = scalar_lea.vmem %s2, %s279
      %s281 = smul.u32 28, %s20
      %s282 = smul.u32 28, %s20
      %p283 = scmp.lt.s32.totalorder %s19, 0
      %s284 = scalar_select %p283, %s19, 0
      %p285 = scmp.lt.s32.totalorder %s282, 83
      %s286 = scalar_select %p285, %s282, 83
      %s287 = smul.addr %s286, 2
      %s288 = smul.addr %s284, 168
      %s289 = sadd.s32 %s287, %s288
      %s290 = smul.addr %s289, 8
      %s291 = scalar_lea.vmem %s3, %s290
      %s292 = smul.u32 28, %s20
      %p293 = scmp.lt.s32.totalorder %s19, 0
      %s294 = scalar_select %p293, %s19, 0
      %s295 = smul.addr %s294, 168
      %s296 = smul.addr %s295, 8
      %s297 = scalar_lea.vmem %s4, %s296
      %v298 = vld [vmem:[%s268] sm:$0xff]
      %v299 = vld [vmem:[%s268 + $0x8] sm:$0xff]
      %v300 = vld [vmem:[%s268 + $0x10] sm:$0xff]
      %v301 = vld [vmem:[%s268 + $0x18] sm:$0xff]
      %v302 = vld [vmem:[%s268 + $0x20] sm:$0xff]
      %v303 = vld [vmem:[%s268 + $0x28] sm:$0xff]
      %v304 = vld [vmem:[%s268 + $0x30] sm:$0xff]
      %v305 = vld [vmem:[%s268 + $0x38] sm:$0xff]
      %v306 = vld [vmem:[%s268 + $0x40] sm:$0xff]
      %v307 = vld [vmem:[%s268 + $0x48] sm:$0xff]
      %v308 = vld [vmem:[%s268 + $0x50] sm:$0xff]
      %v309 = vld [vmem:[%s268 + $0x58] sm:$0xff]
      %v310 = vld [vmem:[%s268 + $0x60] sm:$0xff]
      %v311 = vld [vmem:[%s268 + $0x68] sm:$0xff]
      %v312 = vld [vmem:[%s268 + $0x70] sm:$0xff]
      %v313 = vld [vmem:[%s268 + $0x78] sm:$0xff]
      %v314 = vld [vmem:[%s268 + $0x80] sm:$0xff]
      %v315 = vld [vmem:[%s268 + $0x88] sm:$0xff]
      %v316 = vld [vmem:[%s268 + $0x90] sm:$0xff]
      %v317 = vld [vmem:[%s268 + $0x98] sm:$0xff]
      %v318 = vld [vmem:[%s268 + $0xa0] sm:$0xff]
      %v319 = vld [vmem:[%s268 + $0xa8] sm:$0xff]
      %v320 = vld [vmem:[%s268 + $0xb0] sm:$0xff]
      %v321 = vld [vmem:[%s268 + $0xb8] sm:$0xff]
      %v322 = vld [vmem:[%s268 + $0xc0] sm:$0xff]
      %v323 = vld [vmem:[%s268 + $0xc8] sm:$0xff]
      %v324 = vld [vmem:[%s268 + $0xd0] sm:$0xff]
      %v325 = vld [vmem:[%s268 + $0xd8] sm:$0xff]
      %v326 = vld [vmem:[%s268 + $0xe0] sm:$0xff]
      %v327 = vld [vmem:[%s268 + $0xe8] sm:$0xff]
      %v328 = vld [vmem:[%s268 + $0xf0] sm:$0xff]
      %v329 = vld [vmem:[%s268 + $0xf8] sm:$0xff]
      %v330 = vld [vmem:[%s268 + $0x100] sm:$0xff]
      %v331 = vld [vmem:[%s268 + $0x108] sm:$0xff]
      %v332 = vld [vmem:[%s268 + $0x110] sm:$0xff]
      %v333 = vld [vmem:[%s268 + $0x118] sm:$0xff]
      %v334 = vld [vmem:[%s268 + $0x120] sm:$0xff]
      %v335 = vld [vmem:[%s268 + $0x128] sm:$0xff]
      %v336 = vld [vmem:[%s268 + $0x130] sm:$0xff]
      %v337 = vld [vmem:[%s268 + $0x138] sm:$0xff]
      %v338 = vld [vmem:[%s268 + $0x140] sm:$0xff]
      %v339 = vld [vmem:[%s268 + $0x148] sm:$0xff]
      %v340 = vld [vmem:[%s268 + $0x150] sm:$0xff]
      %v341 = vld [vmem:[%s268 + $0x158] sm:$0xff]
      %v342 = vld [vmem:[%s268 + $0x160] sm:$0xff]
      %v343 = vld [vmem:[%s268 + $0x168] sm:$0xff]
      %v344 = vld [vmem:[%s268 + $0x170] sm:$0xff]
      %v345 = vld [vmem:[%s268 + $0x178] sm:$0xff]
      %v346 = vld [vmem:[%s268 + $0x180] sm:$0xff]
      %v347 = vld [vmem:[%s268 + $0x188] sm:$0xff]
      %v348 = vld [vmem:[%s268 + $0x190] sm:$0xff]
      %v349 = vld [vmem:[%s268 + $0x198] sm:$0xff]
      %v350 = vld [vmem:[%s268 + $0x1a0] sm:$0xff]
      %v351 = vld [vmem:[%s268 + $0x1a8] sm:$0xff]
      %v352 = vld [vmem:[%s268 + $0x1b0] sm:$0xff]
      %v353 = vld [vmem:[%s268 + $0x1b8] sm:$0xff]
      %v354 = vld [vmem:[%s268 + $0x1c0] sm:$0xff]
      %v355 = vld [vmem:[%s268 + $0x1c8] sm:$0xff]
      %v356 = vld [vmem:[%s268 + $0x1d0] sm:$0xff]
      %v357 = vld [vmem:[%s268 + $0x1d8] sm:$0xff]
      %v358 = vld [vmem:[%s268 + $0x1e0] sm:$0xff]
      %v359 = vld [vmem:[%s268 + $0x1e8] sm:$0xff]
      %v360 = vld [vmem:[%s268 + $0x1f0] sm:$0xff]
      %v361 = vld [vmem:[%s268 + $0x1f8] sm:$0xff]
      %v362 = vld [vmem:[%s268 + $0x200] sm:$0xff]
      %v363 = vld [vmem:[%s268 + $0x208] sm:$0xff]
      %v364 = vld [vmem:[%s268 + $0x210] sm:$0xff]
      %v365 = vld [vmem:[%s268 + $0x218] sm:$0xff]
      %v366 = vld [vmem:[%s268 + $0x220] sm:$0xff]
      %v367 = vld [vmem:[%s268 + $0x228] sm:$0xff]
      %v368 = vld [vmem:[%s268 + $0x230] sm:$0xff]
      %v369 = vld [vmem:[%s268 + $0x238] sm:$0xff]
      %v370 = vld [vmem:[%s268 + $0x240] sm:$0xff]
      %v371 = vld [vmem:[%s268 + $0x248] sm:$0xff]
      %v372 = vld [vmem:[%s268 + $0x250] sm:$0xff]
      %v373 = vld [vmem:[%s268 + $0x258] sm:$0xff]
      %v374 = vld [vmem:[%s268 + $0x260] sm:$0xff]
      %v375 = vld [vmem:[%s268 + $0x268] sm:$0xff]
      %v376 = vld [vmem:[%s268 + $0x270] sm:$0xff]
      %v377 = vld [vmem:[%s268 + $0x278] sm:$0xff]
      %v378 = vld [vmem:[%s268 + $0x280] sm:$0xff]
      %v379 = vld [vmem:[%s268 + $0x288] sm:$0xff]
      %v380 = vld [vmem:[%s268 + $0x290] sm:$0xff]
      %v381 = vld [vmem:[%s268 + $0x298] sm:$0xff]
      %v382 = vld [vmem:[%s268 + $0x2a0] sm:$0xff]
      %v383 = vld [vmem:[%s268 + $0x2a8] sm:$0xff]
      %v384 = vld [vmem:[%s268 + $0x2b0] sm:$0xff]
      %v385 = vld [vmem:[%s268 + $0x2b8] sm:$0xff]
      %v386 = vld [vmem:[%s268 + $0x2c0] sm:$0xff]
      %v387 = vld [vmem:[%s268 + $0x2c8] sm:$0xff]
      %v388 = vld [vmem:[%s268 + $0x2d0] sm:$0xff]
      %v389 = vld [vmem:[%s268 + $0x2d8] sm:$0xff]
      %v390 = vld [vmem:[%s268 + $0x2e0] sm:$0xff]
      %v391 = vld [vmem:[%s268 + $0x2e8] sm:$0xff]
      %v392 = vld [vmem:[%s268 + $0x2f0] sm:$0xff]
      %v393 = vld [vmem:[%s268 + $0x2f8] sm:$0xff]
      %v394 = vld [vmem:[%s268 + $0x300] sm:$0xff]
      %v395 = vld [vmem:[%s268 + $0x308] sm:$0xff]
      %v396 = vld [vmem:[%s268 + $0x310] sm:$0xff]
      %v397 = vld [vmem:[%s268 + $0x318] sm:$0xff]
      %v398 = vld [vmem:[%s268 + $0x320] sm:$0xff]
      %v399 = vld [vmem:[%s268 + $0x328] sm:$0xff]
      %v400 = vld [vmem:[%s268 + $0x330] sm:$0xff]
      %v401 = vld [vmem:[%s268 + $0x338] sm:$0xff]
      %v402 = vld [vmem:[%s268 + $0x340] sm:$0xff]
      %v403 = vld [vmem:[%s268 + $0x348] sm:$0xff]
      %v404 = vld [vmem:[%s268 + $0x350] sm:$0xff]
      %v405 = vld [vmem:[%s268 + $0x358] sm:$0xff]
      %v406 = vld [vmem:[%s268 + $0x360] sm:$0xff]
      %v407 = vld [vmem:[%s268 + $0x368] sm:$0xff]
      %v408 = vld [vmem:[%s268 + $0x370] sm:$0xff]
      %v409 = vld [vmem:[%s268 + $0x378] sm:$0xff]
      %v410 = vld [vmem:[%s268 + $0x380] sm:$0xff]
      %v411 = vld [vmem:[%s268 + $0x388] sm:$0xff]
      %v412 = vld [vmem:[%s268 + $0x390] sm:$0xff]
      %v413 = vld [vmem:[%s268 + $0x398] sm:$0xff]
      %v414 = vld [vmem:[%s268 + $0x3a0] sm:$0xff]
      %v415 = vld [vmem:[%s268 + $0x3a8] sm:$0xff]
      %v416 = vld [vmem:[%s268 + $0x3b0] sm:$0xff]
      %v417 = vld [vmem:[%s268 + $0x3b8] sm:$0xff]
      %v418 = vld [vmem:[%s268 + $0x3c0] sm:$0xff]
      %v419 = vld [vmem:[%s268 + $0x3c8] sm:$0xff]
      %v420 = vld [vmem:[%s268 + $0x3d0] sm:$0xff]
      %v421 = vld [vmem:[%s268 + $0x3d8] sm:$0xff]
      %v422 = vld [vmem:[%s268 + $0x3e0] sm:$0xff]
      %v423 = vld [vmem:[%s268 + $0x3e8] sm:$0xff]
      %v424 = vld [vmem:[%s268 + $0x3f0] sm:$0xff]
      %v425 = vld [vmem:[%s268 + $0x3f8] sm:$0xff]
      %v426 = vld [vmem:[%s268 + $0x400] sm:$0xff]
      %v427 = vld [vmem:[%s268 + $0x408] sm:$0xff]
      %v428 = vld [vmem:[%s268 + $0x410] sm:$0xff]
      %v429 = vld [vmem:[%s268 + $0x418] sm:$0xff]
      %v430 = vld [vmem:[%s268 + $0x420] sm:$0xff]
      %v431 = vld [vmem:[%s268 + $0x428] sm:$0xff]
      %v432 = vld [vmem:[%s268 + $0x430] sm:$0xff]
      %v433 = vld [vmem:[%s268 + $0x438] sm:$0xff]
      %v434 = vld [vmem:[%s268 + $0x440] sm:$0xff]
      %v435 = vld [vmem:[%s268 + $0x448] sm:$0xff]
      %v436 = vld [vmem:[%s268 + $0x450] sm:$0xff]
      %v437 = vld [vmem:[%s268 + $0x458] sm:$0xff]
      %v438 = vld [vmem:[%s268 + $0x460] sm:$0xff]
      %v439 = vld [vmem:[%s268 + $0x468] sm:$0xff]
      %v440 = vld [vmem:[%s268 + $0x470] sm:$0xff]
      %v441 = vld [vmem:[%s268 + $0x478] sm:$0xff]
      %v442 = vld [vmem:[%s268 + $0x480] sm:$0xff]
      %v443 = vld [vmem:[%s268 + $0x488] sm:$0xff]
      %v444 = vld [vmem:[%s268 + $0x490] sm:$0xff]
      %v445 = vld [vmem:[%s268 + $0x498] sm:$0xff]
      %v446 = vld [vmem:[%s268 + $0x4a0] sm:$0xff]
      %v447 = vld [vmem:[%s268 + $0x4a8] sm:$0xff]
      %v448 = vld [vmem:[%s268 + $0x4b0] sm:$0xff]
      %v449 = vld [vmem:[%s268 + $0x4b8] sm:$0xff]
      %v450 = vld [vmem:[%s268 + $0x4c0] sm:$0xff]
      %v451 = vld [vmem:[%s268 + $0x4c8] sm:$0xff]
      %v452 = vld [vmem:[%s268 + $0x4d0] sm:$0xff]
      %v453 = vld [vmem:[%s268 + $0x4d8] sm:$0xff]
      %v454 = vld [vmem:[%s268 + $0x4e0] sm:$0xff]
      %v455 = vld [vmem:[%s268 + $0x4e8] sm:$0xff]
      %v456 = vld [vmem:[%s268 + $0x4f0] sm:$0xff]
      %v457 = vld [vmem:[%s268 + $0x4f8] sm:$0xff]
      %v458 = vld [vmem:[%s268 + $0x500] sm:$0xff]
      %v459 = vld [vmem:[%s268 + $0x508] sm:$0xff]
      %v460 = vld [vmem:[%s268 + $0x510] sm:$0xff]
      %v461 = vld [vmem:[%s268 + $0x518] sm:$0xff]
      %v462 = vld [vmem:[%s268 + $0x520] sm:$0xff]
      %v463 = vld [vmem:[%s268 + $0x528] sm:$0xff]
      %v464 = vld [vmem:[%s268 + $0x530] sm:$0xff]
      %v465 = vld [vmem:[%s268 + $0x538] sm:$0xff]
      %v466 = vld [vmem:[%s268 + $0x540] sm:$0xff]
      %v467 = vld [vmem:[%s268 + $0x548] sm:$0xff]
      %v468 = vld [vmem:[%s268 + $0x550] sm:$0xff]
      %v469 = vld [vmem:[%s268 + $0x558] sm:$0xff]
      %v470 = vld [vmem:[%s268 + $0x560] sm:$0xff]
      %v471 = vld [vmem:[%s268 + $0x568] sm:$0xff]
      %v472 = vld [vmem:[%s268 + $0x570] sm:$0xff]
      %v473 = vld [vmem:[%s268 + $0x578] sm:$0xff]
      %v474 = vld [vmem:[%s268 + $0x580] sm:$0xff]
      %v475 = vld [vmem:[%s268 + $0x588] sm:$0xff]
      %v476 = vld [vmem:[%s268 + $0x590] sm:$0xff]
      %v477 = vld [vmem:[%s268 + $0x598] sm:$0xff]
      %v478 = vld [vmem:[%s268 + $0x5a0] sm:$0xff]
      %v479 = vld [vmem:[%s268 + $0x5a8] sm:$0xff]
      %v480 = vld [vmem:[%s268 + $0x5b0] sm:$0xff]
      %v481 = vld [vmem:[%s268 + $0x5b8] sm:$0xff]
      %v482 = vld [vmem:[%s268 + $0x5c0] sm:$0xff]
      %v483 = vld [vmem:[%s268 + $0x5c8] sm:$0xff]
      %v484 = vld [vmem:[%s268 + $0x5d0] sm:$0xff]
      %v485 = vld [vmem:[%s268 + $0x5d8] sm:$0xff]
      %v486 = vld [vmem:[%s268 + $0x5e0] sm:$0xff]
      %v487 = vld [vmem:[%s268 + $0x5e8] sm:$0xff]
      %v488 = vld [vmem:[%s268 + $0x5f0] sm:$0xff]
      %v489 = vld [vmem:[%s268 + $0x5f8] sm:$0xff]
      %v490 = vld [vmem:[%s268 + $0x600] sm:$0xff]
      %v491 = vld [vmem:[%s268 + $0x608] sm:$0xff]
      %v492 = vld [vmem:[%s268 + $0x610] sm:$0xff]
      %v493 = vld [vmem:[%s268 + $0x618] sm:$0xff]
      %v494 = vadd.f32 %v298, %v299
      %v495 = vadd.f32 %v494, %v300
      %v496 = vadd.f32 %v495, %v301
      %v497 = vadd.f32 %v496, %v302
      %v498 = vadd.f32 %v497, %v303
      %vm499 = vcmask 130048
      %v500 = vsel %vm499, %v304, 0.0
      %v501 = vadd.f32 %v498, %v500
      %502 = vadd.xlane.f32.xlu0 %v501
      %v503 = vpop.xlane.xlu0 %502
      %v504 = vadd.f32 %v305, %v306
      %v505 = vadd.f32 %v504, %v307
      %v506 = vadd.f32 %v505, %v308
      %v507 = vadd.f32 %v506, %v309
      %v508 = vadd.f32 %v507, %v310
      %v509 = vsel %vm499, %v311, 0.0
      %v510 = vadd.f32 %v508, %v509
      %511 = vadd.xlane.f32.xlu0 %v510
      %v512 = vpop.xlane.xlu0 %511
      %v513 = vadd.f32 %v312, %v313
      %v514 = vadd.f32 %v513, %v314
      %v515 = vadd.f32 %v514, %v315
      %v516 = vadd.f32 %v515, %v316
      %v517 = vadd.f32 %v516, %v317
      %v518 = vsel %vm499, %v318, 0.0
      %v519 = vadd.f32 %v517, %v518
      %520 = vadd.xlane.f32.xlu0 %v519
      %v521 = vpop.xlane.xlu0 %520
      %v522 = vadd.f32 %v319, %v320
      %v523 = vadd.f32 %v522, %v321
      %v524 = vadd.f32 %v523, %v322
      %v525 = vadd.f32 %v524, %v323
      %v526 = vadd.f32 %v525, %v324
      %v527 = vsel %vm499, %v325, 0.0
      %v528 = vadd.f32 %v526, %v527
      %529 = vadd.xlane.f32.xlu0 %v528
      %v530 = vpop.xlane.xlu0 %529
      %v531 = vadd.f32 %v326, %v327
      %v532 = vadd.f32 %v531, %v328
      %v533 = vadd.f32 %v532, %v329
      %v534 = vadd.f32 %v533, %v330
      %v535 = vadd.f32 %v534, %v331
      %v536 = vsel %vm499, %v332, 0.0
      %v537 = vadd.f32 %v535, %v536
      %538 = vadd.xlane.f32.xlu0 %v537
      %v539 = vpop.xlane.xlu0 %538
      %v540 = vadd.f32 %v333, %v334
      %v541 = vadd.f32 %v540, %v335
      %v542 = vadd.f32 %v541, %v336
      %v543 = vadd.f32 %v542, %v337
      %v544 = vadd.f32 %v543, %v338
      %v545 = vsel %vm499, %v339, 0.0
      %v546 = vadd.f32 %v544, %v545
      %547 = vadd.xlane.f32.xlu0 %v546
      %v548 = vpop.xlane.xlu0 %547
      %v549 = vadd.f32 %v340, %v341
      %v550 = vadd.f32 %v549, %v342
      %v551 = vadd.f32 %v550, %v343
      %v552 = vadd.f32 %v551, %v344
      %v553 = vadd.f32 %v552, %v345
      %v554 = vsel %vm499, %v346, 0.0
      %v555 = vadd.f32 %v553, %v554
      %556 = vadd.xlane.f32.xlu0 %v555
      %v557 = vpop.xlane.xlu0 %556
      %v558 = vadd.f32 %v347, %v348
      %v559 = vadd.f32 %v558, %v349
      %v560 = vadd.f32 %v559, %v350
      %v561 = vadd.f32 %v560, %v351
      %v562 = vadd.f32 %v561, %v352
      %v563 = vsel %vm499, %v353, 0.0
      %v564 = vadd.f32 %v562, %v563
      %565 = vadd.xlane.f32.xlu0 %v564
      %v566 = vpop.xlane.xlu0 %565
      %v567 = vadd.f32 %v354, %v355
      %v568 = vadd.f32 %v567, %v356
      %v569 = vadd.f32 %v568, %v357
      %v570 = vadd.f32 %v569, %v358
      %v571 = vadd.f32 %v570, %v359
      %v572 = vsel %vm499, %v360, 0.0
      %v573 = vadd.f32 %v571, %v572
      %574 = vadd.xlane.f32.xlu0 %v573
      %v575 = vpop.xlane.xlu0 %574
      %v576 = vadd.f32 %v361, %v362
      %v577 = vadd.f32 %v576, %v363
      %v578 = vadd.f32 %v577, %v364
      %v579 = vadd.f32 %v578, %v365
      %v580 = vadd.f32 %v579, %v366
      %v581 = vsel %vm499, %v367, 0.0
      %v582 = vadd.f32 %v580, %v581
      %583 = vadd.xlane.f32.xlu0 %v582
      %v584 = vpop.xlane.xlu0 %583
      %v585 = vadd.f32 %v368, %v369
      %v586 = vadd.f32 %v585, %v370
      %v587 = vadd.f32 %v586, %v371
      %v588 = vadd.f32 %v587, %v372
      %v589 = vadd.f32 %v588, %v373
      %v590 = vsel %vm499, %v374, 0.0
      %v591 = vadd.f32 %v589, %v590
      %592 = vadd.xlane.f32.xlu0 %v591
      %v593 = vpop.xlane.xlu0 %592
      %v594 = vadd.f32 %v375, %v376
      %v595 = vadd.f32 %v594, %v377
      %v596 = vadd.f32 %v595, %v378
      %v597 = vadd.f32 %v596, %v379
      %v598 = vadd.f32 %v597, %v380
      %v599 = vsel %vm499, %v381, 0.0
      %v600 = vadd.f32 %v598, %v599
      %601 = vadd.xlane.f32.xlu0 %v600
      %v602 = vpop.xlane.xlu0 %601
      %v603 = vadd.f32 %v382, %v383
      %v604 = vadd.f32 %v603, %v384
      %v605 = vadd.f32 %v604, %v385
      %v606 = vadd.f32 %v605, %v386
      %v607 = vadd.f32 %v606, %v387
      %v608 = vsel %vm499, %v388, 0.0
      %v609 = vadd.f32 %v607, %v608
      %610 = vadd.xlane.f32.xlu0 %v609
      %v611 = vpop.xlane.xlu0 %610
      %v612 = vadd.f32 %v389, %v390
      %v613 = vadd.f32 %v612, %v391
      %v614 = vadd.f32 %v613, %v392
      %v615 = vadd.f32 %v614, %v393
      %v616 = vadd.f32 %v615, %v394
      %v617 = vsel %vm499, %v395, 0.0
      %v618 = vadd.f32 %v616, %v617
      %619 = vadd.xlane.f32.xlu0 %v618
      %v620 = vpop.xlane.xlu0 %619
      %v621 = vadd.f32 %v396, %v397
      %v622 = vadd.f32 %v621, %v398
      %v623 = vadd.f32 %v622, %v399
      %v624 = vadd.f32 %v623, %v400
      %v625 = vadd.f32 %v624, %v401
      %v626 = vsel %vm499, %v402, 0.0
      %v627 = vadd.f32 %v625, %v626
      %628 = vadd.xlane.f32.xlu0 %v627
      %v629 = vpop.xlane.xlu0 %628
      %v630 = vadd.f32 %v403, %v404
      %v631 = vadd.f32 %v630, %v405
      %v632 = vadd.f32 %v631, %v406
      %v633 = vadd.f32 %v632, %v407
      %v634 = vadd.f32 %v633, %v408
      %v635 = vsel %vm499, %v409, 0.0
      %v636 = vadd.f32 %v634, %v635
      %637 = vadd.xlane.f32.xlu0 %v636
      %v638 = vpop.xlane.xlu0 %637
      %v639 = vadd.f32 %v410, %v411
      %v640 = vadd.f32 %v639, %v412
      %v641 = vadd.f32 %v640, %v413
      %v642 = vadd.f32 %v641, %v414
      %v643 = vadd.f32 %v642, %v415
      %v644 = vsel %vm499, %v416, 0.0
      %v645 = vadd.f32 %v643, %v644
      %646 = vadd.xlane.f32.xlu0 %v645
      %v647 = vpop.xlane.xlu0 %646
      %v648 = vadd.f32 %v417, %v418
      %v649 = vadd.f32 %v648, %v419
      %v650 = vadd.f32 %v649, %v420
      %v651 = vadd.f32 %v650, %v421
      %v652 = vadd.f32 %v651, %v422
      %v653 = vsel %vm499, %v423, 0.0
      %v654 = vadd.f32 %v652, %v653
      %655 = vadd.xlane.f32.xlu0 %v654
      %v656 = vpop.xlane.xlu0 %655
      %v657 = vadd.f32 %v424, %v425
      %v658 = vadd.f32 %v657, %v426
      %v659 = vadd.f32 %v658, %v427
      %v660 = vadd.f32 %v659, %v428
      %v661 = vadd.f32 %v660, %v429
      %v662 = vsel %vm499, %v430, 0.0
      %v663 = vadd.f32 %v661, %v662
      %664 = vadd.xlane.f32.xlu0 %v663
      %v665 = vpop.xlane.xlu0 %664
      %v666 = vadd.f32 %v431, %v432
      %v667 = vadd.f32 %v666, %v433
      %v668 = vadd.f32 %v667, %v434
      %v669 = vadd.f32 %v668, %v435
      %v670 = vadd.f32 %v669, %v436
      %v671 = vsel %vm499, %v437, 0.0
      %v672 = vadd.f32 %v670, %v671
      %673 = vadd.xlane.f32.xlu0 %v672
      %v674 = vpop.xlane.xlu0 %673
      %v675 = vadd.f32 %v438, %v439
      %v676 = vadd.f32 %v675, %v440
      %v677 = vadd.f32 %v676, %v441
      %v678 = vadd.f32 %v677, %v442
      %v679 = vadd.f32 %v678, %v443
      %v680 = vsel %vm499, %v444, 0.0
      %v681 = vadd.f32 %v679, %v680
      %682 = vadd.xlane.f32.xlu0 %v681
      %v683 = vpop.xlane.xlu0 %682
      %v684 = vadd.f32 %v445, %v446
      %v685 = vadd.f32 %v684, %v447
      %v686 = vadd.f32 %v685, %v448
      %v687 = vadd.f32 %v686, %v449
      %v688 = vadd.f32 %v687, %v450
      %v689 = vsel %vm499, %v451, 0.0
      %v690 = vadd.f32 %v688, %v689
      %691 = vadd.xlane.f32.xlu0 %v690
      %v692 = vpop.xlane.xlu0 %691
      %v693 = vadd.f32 %v452, %v453
      %v694 = vadd.f32 %v693, %v454
      %v695 = vadd.f32 %v694, %v455
      %v696 = vadd.f32 %v695, %v456
      %v697 = vadd.f32 %v696, %v457
      %v698 = vsel %vm499, %v458, 0.0
      %v699 = vadd.f32 %v697, %v698
      %700 = vadd.xlane.f32.xlu0 %v699
      %v701 = vpop.xlane.xlu0 %700
      %v702 = vadd.f32 %v459, %v460
      %v703 = vadd.f32 %v702, %v461
      %v704 = vadd.f32 %v703, %v462
      %v705 = vadd.f32 %v704, %v463
      %v706 = vadd.f32 %v705, %v464
      %v707 = vsel %vm499, %v465, 0.0
      %v708 = vadd.f32 %v706, %v707
      %709 = vadd.xlane.f32.xlu0 %v708
      %v710 = vpop.xlane.xlu0 %709
      %v711 = vadd.f32 %v466, %v467
      %v712 = vadd.f32 %v711, %v468
      %v713 = vadd.f32 %v712, %v469
      %v714 = vadd.f32 %v713, %v470
      %v715 = vadd.f32 %v714, %v471
      %v716 = vsel %vm499, %v472, 0.0
      %v717 = vadd.f32 %v715, %v716
      %718 = vadd.xlane.f32.xlu0 %v717
      %v719 = vpop.xlane.xlu0 %718
      %v720 = vadd.f32 %v473, %v474
      %v721 = vadd.f32 %v720, %v475
      %v722 = vadd.f32 %v721, %v476
      %v723 = vadd.f32 %v722, %v477
      %v724 = vadd.f32 %v723, %v478
      %v725 = vsel %vm499, %v479, 0.0
      %v726 = vadd.f32 %v724, %v725
      %727 = vadd.xlane.f32.xlu0 %v726
      %v728 = vpop.xlane.xlu0 %727
      %v729 = vadd.f32 %v480, %v481
      %v730 = vadd.f32 %v729, %v482
      %v731 = vadd.f32 %v730, %v483
      %v732 = vadd.f32 %v731, %v484
      %v733 = vadd.f32 %v732, %v485
      %v734 = vsel %vm499, %v486, 0.0
      %v735 = vadd.f32 %v733, %v734
      %736 = vadd.xlane.f32.xlu0 %v735
      %v737 = vpop.xlane.xlu0 %736
      %v738 = vadd.f32 %v487, %v488
      %v739 = vadd.f32 %v738, %v489
      %v740 = vadd.f32 %v739, %v490
      %v741 = vadd.f32 %v740, %v491
      %v742 = vadd.f32 %v741, %v492
      %v743 = vsel %vm499, %v493, 0.0
      %v744 = vadd.f32 %v742, %v743
      %745 = vadd.xlane.f32.xlu0 %v744
      %v746 = vpop.xlane.xlu0 %745
      %v747 = vmul.f32 %v503, 0.0012755102
      %v748 = vmul.f32 %v512, 0.0012755102
      %v749 = vmul.f32 %v521, 0.0012755102
      %v750 = vmul.f32 %v530, 0.0012755102
      %v751 = vmul.f32 %v539, 0.0012755102
      %v752 = vmul.f32 %v548, 0.0012755102
      %v753 = vmul.f32 %v557, 0.0012755102
      %v754 = vmul.f32 %v566, 0.0012755102
      %v755 = vmul.f32 %v575, 0.0012755102
      %v756 = vmul.f32 %v584, 0.0012755102
      %v757 = vmul.f32 %v593, 0.0012755102
      %v758 = vmul.f32 %v602, 0.0012755102
      %v759 = vmul.f32 %v611, 0.0012755102
      %v760 = vmul.f32 %v620, 0.0012755102
      %v761 = vmul.f32 %v629, 0.0012755102
      %v762 = vmul.f32 %v638, 0.0012755102
      %v763 = vmul.f32 %v647, 0.0012755102
      %v764 = vmul.f32 %v656, 0.0012755102
      %v765 = vmul.f32 %v665, 0.0012755102
      %v766 = vmul.f32 %v674, 0.0012755102
      %v767 = vmul.f32 %v683, 0.0012755102
      %v768 = vmul.f32 %v692, 0.0012755102
      %v769 = vmul.f32 %v701, 0.0012755102
      %v770 = vmul.f32 %v710, 0.0012755102
      %v771 = vmul.f32 %v719, 0.0012755102
      %v772 = vmul.f32 %v728, 0.0012755102
      %v773 = vmul.f32 %v737, 0.0012755102
      %v774 = vmul.f32 %v746, 0.0012755102
      %v775 = vsub.f32 %v298, %v747
      %v776 = vsub.f32 %v299, %v747
      %v777 = vsub.f32 %v300, %v747
      %v778 = vsub.f32 %v301, %v747
      %v779 = vsub.f32 %v302, %v747
      %v780 = vsub.f32 %v303, %v747
      %v781 = vsub.f32 %v304, %v747
      %v782 = vsub.f32 %v305, %v748
      %v783 = vsub.f32 %v306, %v748
      %v784 = vsub.f32 %v307, %v748
      %v785 = vsub.f32 %v308, %v748
      %v786 = vsub.f32 %v309, %v748
      %v787 = vsub.f32 %v310, %v748
      %v788 = vsub.f32 %v311, %v748
      %v789 = vsub.f32 %v312, %v749
      %v790 = vsub.f32 %v313, %v749
      %v791 = vsub.f32 %v314, %v749
      %v792 = vsub.f32 %v315, %v749
      %v793 = vsub.f32 %v316, %v749
      %v794 = vsub.f32 %v317, %v749
      %v795 = vsub.f32 %v318, %v749
      %v796 = vsub.f32 %v319, %v750
      %v797 = vsub.f32 %v320, %v750
      %v798 = vsub.f32 %v321, %v750
      %v799 = vsub.f32 %v322, %v750
      %v800 = vsub.f32 %v323, %v750
      %v801 = vsub.f32 %v324, %v750
      %v802 = vsub.f32 %v325, %v750
      %v803 = vsub.f32 %v326, %v751
      %v804 = vsub.f32 %v327, %v751
      %v805 = vsub.f32 %v328, %v751
      %v806 = vsub.f32 %v329, %v751
      %v807 = vsub.f32 %v330, %v751
      %v808 = vsub.f32 %v331, %v751
      %v809 = vsub.f32 %v332, %v751
      %v810 = vsub.f32 %v333, %v752
      %v811 = vsub.f32 %v334, %v752
      %v812 = vsub.f32 %v335, %v752
      %v813 = vsub.f32 %v336, %v752
      %v814 = vsub.f32 %v337, %v752
      %v815 = vsub.f32 %v338, %v752
      %v816 = vsub.f32 %v339, %v752
      %v817 = vsub.f32 %v340, %v753
      %v818 = vsub.f32 %v341, %v753
      %v819 = vsub.f32 %v342, %v753
      %v820 = vsub.f32 %v343, %v753
      %v821 = vsub.f32 %v344, %v753
      %v822 = vsub.f32 %v345, %v753
      %v823 = vsub.f32 %v346, %v753
      %v824 = vsub.f32 %v347, %v754
      %v825 = vsub.f32 %v348, %v754
      %v826 = vsub.f32 %v349, %v754
      %v827 = vsub.f32 %v350, %v754
      %v828 = vsub.f32 %v351, %v754
      %v829 = vsub.f32 %v352, %v754
      %v830 = vsub.f32 %v353, %v754
      %v831 = vsub.f32 %v354, %v755
      %v832 = vsub.f32 %v355, %v755
      %v833 = vsub.f32 %v356, %v755
      %v834 = vsub.f32 %v357, %v755
      %v835 = vsub.f32 %v358, %v755
      %v836 = vsub.f32 %v359, %v755
      %v837 = vsub.f32 %v360, %v755
      %v838 = vsub.f32 %v361, %v756
      %v839 = vsub.f32 %v362, %v756
      %v840 = vsub.f32 %v363, %v756
      %v841 = vsub.f32 %v364, %v756
      %v842 = vsub.f32 %v365, %v756
      %v843 = vsub.f32 %v366, %v756
      %v844 = vsub.f32 %v367, %v756
      %v845 = vsub.f32 %v368, %v757
      %v846 = vsub.f32 %v369, %v757
      %v847 = vsub.f32 %v370, %v757
      %v848 = vsub.f32 %v371, %v757
      %v849 = vsub.f32 %v372, %v757
      %v850 = vsub.f32 %v373, %v757
      %v851 = vsub.f32 %v374, %v757
      %v852 = vsub.f32 %v375, %v758
      %v853 = vsub.f32 %v376, %v758
      %v854 = vsub.f32 %v377, %v758
      %v855 = vsub.f32 %v378, %v758
      %v856 = vsub.f32 %v379, %v758
      %v857 = vsub.f32 %v380, %v758
      %v858 = vsub.f32 %v381, %v758
      %v859 = vsub.f32 %v382, %v759
      %v860 = vsub.f32 %v383, %v759
      %v861 = vsub.f32 %v384, %v759
      %v862 = vsub.f32 %v385, %v759
      %v863 = vsub.f32 %v386, %v759
      %v864 = vsub.f32 %v387, %v759
      %v865 = vsub.f32 %v388, %v759
      %v866 = vsub.f32 %v389, %v760
      %v867 = vsub.f32 %v390, %v760
      %v868 = vsub.f32 %v391, %v760
      %v869 = vsub.f32 %v392, %v760
      %v870 = vsub.f32 %v393, %v760
      %v871 = vsub.f32 %v394, %v760
      %v872 = vsub.f32 %v395, %v760
      %v873 = vsub.f32 %v396, %v761
      %v874 = vsub.f32 %v397, %v761
      %v875 = vsub.f32 %v398, %v761
      %v876 = vsub.f32 %v399, %v761
      %v877 = vsub.f32 %v400, %v761
      %v878 = vsub.f32 %v401, %v761
      %v879 = vsub.f32 %v402, %v761
      %v880 = vsub.f32 %v403, %v762
      %v881 = vsub.f32 %v404, %v762
      %v882 = vsub.f32 %v405, %v762
      %v883 = vsub.f32 %v406, %v762
      %v884 = vsub.f32 %v407, %v762
      %v885 = vsub.f32 %v408, %v762
      %v886 = vsub.f32 %v409, %v762
      %v887 = vsub.f32 %v410, %v763
      %v888 = vsub.f32 %v411, %v763
      %v889 = vsub.f32 %v412, %v763
      %v890 = vsub.f32 %v413, %v763
      %v891 = vsub.f32 %v414, %v763
      %v892 = vsub.f32 %v415, %v763
      %v893 = vsub.f32 %v416, %v763
      %v894 = vsub.f32 %v417, %v764
      %v895 = vsub.f32 %v418, %v764
      %v896 = vsub.f32 %v419, %v764
      %v897 = vsub.f32 %v420, %v764
      %v898 = vsub.f32 %v421, %v764
      %v899 = vsub.f32 %v422, %v764
      %v900 = vsub.f32 %v423, %v764
      %v901 = vsub.f32 %v424, %v765
      %v902 = vsub.f32 %v425, %v765
      %v903 = vsub.f32 %v426, %v765
      %v904 = vsub.f32 %v427, %v765
      %v905 = vsub.f32 %v428, %v765
      %v906 = vsub.f32 %v429, %v765
      %v907 = vsub.f32 %v430, %v765
      %v908 = vsub.f32 %v431, %v766
      %v909 = vsub.f32 %v432, %v766
      %v910 = vsub.f32 %v433, %v766
      %v911 = vsub.f32 %v434, %v766
      %v912 = vsub.f32 %v435, %v766
      %v913 = vsub.f32 %v436, %v766
      %v914 = vsub.f32 %v437, %v766
      %v915 = vsub.f32 %v438, %v767
      %v916 = vsub.f32 %v439, %v767
      %v917 = vsub.f32 %v440, %v767
      %v918 = vsub.f32 %v441, %v767
      %v919 = vsub.f32 %v442, %v767
      %v920 = vsub.f32 %v443, %v767
      %v921 = vsub.f32 %v444, %v767
      %v922 = vsub.f32 %v445, %v768
      %v923 = vsub.f32 %v446, %v768
      %v924 = vsub.f32 %v447, %v768
      %v925 = vsub.f32 %v448, %v768
      %v926 = vsub.f32 %v449, %v768
      %v927 = vsub.f32 %v450, %v768
      %v928 = vsub.f32 %v451, %v768
      %v929 = vsub.f32 %v452, %v769
      %v930 = vsub.f32 %v453, %v769
      %v931 = vsub.f32 %v454, %v769
      %v932 = vsub.f32 %v455, %v769
      %v933 = vsub.f32 %v456, %v769
      %v934 = vsub.f32 %v457, %v769
      %v935 = vsub.f32 %v458, %v769
      %v936 = vsub.f32 %v459, %v770
      %v937 = vsub.f32 %v460, %v770
      %v938 = vsub.f32 %v461, %v770
      %v939 = vsub.f32 %v462, %v770
      %v940 = vsub.f32 %v463, %v770
      %v941 = vsub.f32 %v464, %v770
      %v942 = vsub.f32 %v465, %v770
      %v943 = vsub.f32 %v466, %v771
      %v944 = vsub.f32 %v467, %v771
      %v945 = vsub.f32 %v468, %v771
      %v946 = vsub.f32 %v469, %v771
      %v947 = vsub.f32 %v470, %v771
      %v948 = vsub.f32 %v471, %v771
      %v949 = vsub.f32 %v472, %v771
      %v950 = vsub.f32 %v473, %v772
      %v951 = vsub.f32 %v474, %v772
      %v952 = vsub.f32 %v475, %v772
      %v953 = vsub.f32 %v476, %v772
      %v954 = vsub.f32 %v477, %v772
      %v955 = vsub.f32 %v478, %v772
      %v956 = vsub.f32 %v479, %v772
      %v957 = vsub.f32 %v480, %v773
      %v958 = vsub.f32 %v481, %v773
      %v959 = vsub.f32 %v482, %v773
      %v960 = vsub.f32 %v483, %v773
      %v961 = vsub.f32 %v484, %v773
      %v962 = vsub.f32 %v485, %v773
      %v963 = vsub.f32 %v486, %v773
      %v964 = vsub.f32 %v487, %v774
      %v965 = vsub.f32 %v488, %v774
      %v966 = vsub.f32 %v489, %v774
      %v967 = vsub.f32 %v490, %v774
      %v968 = vsub.f32 %v491, %v774
      %v969 = vsub.f32 %v492, %v774
      %v970 = vsub.f32 %v493, %v774
      %v971 = vmul.f32 %v775, %v775
      %v972 = vmul.f32 %v776, %v776
      %v973 = vmul.f32 %v777, %v777
      %v974 = vmul.f32 %v778, %v778
      %v975 = vmul.f32 %v779, %v779
      %v976 = vmul.f32 %v780, %v780
      %v977 = vmul.f32 %v781, %v781
      %v978 = vmul.f32 %v782, %v782
      %v979 = vmul.f32 %v783, %v783
      %v980 = vmul.f32 %v784, %v784
      %v981 = vmul.f32 %v785, %v785
      %v982 = vmul.f32 %v786, %v786
      %v983 = vmul.f32 %v787, %v787
      %v984 = vmul.f32 %v788, %v788
      %v985 = vmul.f32 %v789, %v789
      %v986 = vmul.f32 %v790, %v790
      %v987 = vmul.f32 %v791, %v791
      %v988 = vmul.f32 %v792, %v792
      %v989 = vmul.f32 %v793, %v793
      %v990 = vmul.f32 %v794, %v794
      %v991 = vmul.f32 %v795, %v795
      %v992 = vmul.f32 %v796, %v796
      %v993 = vmul.f32 %v797, %v797
      %v994 = vmul.f32 %v798, %v798
      %v995 = vmul.f32 %v799, %v799
      %v996 = vmul.f32 %v800, %v800
      %v997 = vmul.f32 %v801, %v801
      %v998 = vmul.f32 %v802, %v802
      %v999 = vmul.f32 %v803, %v803
      %v1000 = vmul.f32 %v804, %v804
      %v1001 = vmul.f32 %v805, %v805
      %v1002 = vmul.f32 %v806, %v806
      %v1003 = vmul.f32 %v807, %v807
      %v1004 = vmul.f32 %v808, %v808
      %v1005 = vmul.f32 %v809, %v809
      %v1006 = vmul.f32 %v810, %v810
      %v1007 = vmul.f32 %v811, %v811
      %v1008 = vmul.f32 %v812, %v812
      %v1009 = vmul.f32 %v813, %v813
      %v1010 = vmul.f32 %v814, %v814
      %v1011 = vmul.f32 %v815, %v815
      %v1012 = vmul.f32 %v816, %v816
      %v1013 = vmul.f32 %v817, %v817
      %v1014 = vmul.f32 %v818, %v818
      %v1015 = vmul.f32 %v819, %v819
      %v1016 = vmul.f32 %v820, %v820
      %v1017 = vmul.f32 %v821, %v821
      %v1018 = vmul.f32 %v822, %v822
      %v1019 = vmul.f32 %v823, %v823
      %v1020 = vmul.f32 %v824, %v824
      %v1021 = vmul.f32 %v825, %v825
      %v1022 = vmul.f32 %v826, %v826
      %v1023 = vmul.f32 %v827, %v827
      %v1024 = vmul.f32 %v828, %v828
      %v1025 = vmul.f32 %v829, %v829
      %v1026 = vmul.f32 %v830, %v830
      %v1027 = vmul.f32 %v831, %v831
      %v1028 = vmul.f32 %v832, %v832
      %v1029 = vmul.f32 %v833, %v833
      %v1030 = vmul.f32 %v834, %v834
      %v1031 = vmul.f32 %v835, %v835
      %v1032 = vmul.f32 %v836, %v836
      %v1033 = vmul.f32 %v837, %v837
      %v1034 = vmul.f32 %v838, %v838
      %v1035 = vmul.f32 %v839, %v839
      %v1036 = vmul.f32 %v840, %v840
      %v1037 = vmul.f32 %v841, %v841
      %v1038 = vmul.f32 %v842, %v842
      %v1039 = vmul.f32 %v843, %v843
      %v1040 = vmul.f32 %v844, %v844
      %v1041 = vmul.f32 %v845, %v845
      %v1042 = vmul.f32 %v846, %v846
      %v1043 = vmul.f32 %v847, %v847
      %v1044 = vmul.f32 %v848, %v848
      %v1045 = vmul.f32 %v849, %v849
      %v1046 = vmul.f32 %v850, %v850
      %v1047 = vmul.f32 %v851, %v851
      %v1048 = vmul.f32 %v852, %v852
      %v1049 = vmul.f32 %v853, %v853
      %v1050 = vmul.f32 %v854, %v854
      %v1051 = vmul.f32 %v855, %v855
      %v1052 = vmul.f32 %v856, %v856
      %v1053 = vmul.f32 %v857, %v857
      %v1054 = vmul.f32 %v858, %v858
      %v1055 = vmul.f32 %v859, %v859
      %v1056 = vmul.f32 %v860, %v860
      %v1057 = vmul.f32 %v861, %v861
      %v1058 = vmul.f32 %v862, %v862
      %v1059 = vmul.f32 %v863, %v863
      %v1060 = vmul.f32 %v864, %v864
      %v1061 = vmul.f32 %v865, %v865
      %v1062 = vmul.f32 %v866, %v866
      %v1063 = vmul.f32 %v867, %v867
      %v1064 = vmul.f32 %v868, %v868
      %v1065 = vmul.f32 %v869, %v869
      %v1066 = vmul.f32 %v870, %v870
      %v1067 = vmul.f32 %v871, %v871
      %v1068 = vmul.f32 %v872, %v872
      %v1069 = vmul.f32 %v873, %v873
      %v1070 = vmul.f32 %v874, %v874
      %v1071 = vmul.f32 %v875, %v875
      %v1072 = vmul.f32 %v876, %v876
      %v1073 = vmul.f32 %v877, %v877
      %v1074 = vmul.f32 %v878, %v878
      %v1075 = vmul.f32 %v879, %v879
      %v1076 = vmul.f32 %v880, %v880
      %v1077 = vmul.f32 %v881, %v881
      %v1078 = vmul.f32 %v882, %v882
      %v1079 = vmul.f32 %v883, %v883
      %v1080 = vmul.f32 %v884, %v884
      %v1081 = vmul.f32 %v885, %v885
      %v1082 = vmul.f32 %v886, %v886
      %v1083 = vmul.f32 %v887, %v887
      %v1084 = vmul.f32 %v888, %v888
      %v1085 = vmul.f32 %v889, %v889
      %v1086 = vmul.f32 %v890, %v890
      %v1087 = vmul.f32 %v891, %v891
      %v1088 = vmul.f32 %v892, %v892
      %v1089 = vmul.f32 %v893, %v893
      %v1090 = vmul.f32 %v894, %v894
      %v1091 = vmul.f32 %v895, %v895
      %v1092 = vmul.f32 %v896, %v896
      %v1093 = vmul.f32 %v897, %v897
      %v1094 = vmul.f32 %v898, %v898
      %v1095 = vmul.f32 %v899, %v899
      %v1096 = vmul.f32 %v900, %v900
      %v1097 = vmul.f32 %v901, %v901
      %v1098 = vmul.f32 %v902, %v902
      %v1099 = vmul.f32 %v903, %v903
      %v1100 = vmul.f32 %v904, %v904
      %v1101 = vmul.f32 %v905, %v905
      %v1102 = vmul.f32 %v906, %v906
      %v1103 = vmul.f32 %v907, %v907
      %v1104 = vmul.f32 %v908, %v908
      %v1105 = vmul.f32 %v909, %v909
      %v1106 = vmul.f32 %v910, %v910
      %v1107 = vmul.f32 %v911, %v911
      %v1108 = vmul.f32 %v912, %v912
      %v1109 = vmul.f32 %v913, %v913
      %v1110 = vmul.f32 %v914, %v914
      %v1111 = vmul.f32 %v915, %v915
      %v1112 = vmul.f32 %v916, %v916
      %v1113 = vmul.f32 %v917, %v917
      %v1114 = vmul.f32 %v918, %v918
      %v1115 = vmul.f32 %v919, %v919
      %v1116 = vmul.f32 %v920, %v920
      %v1117 = vmul.f32 %v921, %v921
      %v1118 = vmul.f32 %v922, %v922
      %v1119 = vmul.f32 %v923, %v923
      %v1120 = vmul.f32 %v924, %v924
      %v1121 = vmul.f32 %v925, %v925
      %v1122 = vmul.f32 %v926, %v926
      %v1123 = vmul.f32 %v927, %v927
      %v1124 = vmul.f32 %v928, %v928
      %v1125 = vmul.f32 %v929, %v929
      %v1126 = vmul.f32 %v930, %v930
      %v1127 = vmul.f32 %v931, %v931
      %v1128 = vmul.f32 %v932, %v932
      %v1129 = vmul.f32 %v933, %v933
      %v1130 = vmul.f32 %v934, %v934
      %v1131 = vmul.f32 %v935, %v935
      %v1132 = vmul.f32 %v936, %v936
      %v1133 = vmul.f32 %v937, %v937
      %v1134 = vmul.f32 %v938, %v938
      %v1135 = vmul.f32 %v939, %v939
      %v1136 = vmul.f32 %v940, %v940
      %v1137 = vmul.f32 %v941, %v941
      %v1138 = vmul.f32 %v942, %v942
      %v1139 = vmul.f32 %v943, %v943
      %v1140 = vmul.f32 %v944, %v944
      %v1141 = vmul.f32 %v945, %v945
      %v1142 = vmul.f32 %v946, %v946
      %v1143 = vmul.f32 %v947, %v947
      %v1144 = vmul.f32 %v948, %v948
      %v1145 = vmul.f32 %v949, %v949
      %v1146 = vmul.f32 %v950, %v950
      %v1147 = vmul.f32 %v951, %v951
      %v1148 = vmul.f32 %v952, %v952
      %v1149 = vmul.f32 %v953, %v953
      %v1150 = vmul.f32 %v954, %v954
      %v1151 = vmul.f32 %v955, %v955
      %v1152 = vmul.f32 %v956, %v956
      %v1153 = vmul.f32 %v957, %v957
      %v1154 = vmul.f32 %v958, %v958
      %v1155 = vmul.f32 %v959, %v959
      %v1156 = vmul.f32 %v960, %v960
      %v1157 = vmul.f32 %v961, %v961
      %v1158 = vmul.f32 %v962, %v962
      %v1159 = vmul.f32 %v963, %v963
      %v1160 = vmul.f32 %v964, %v964
      %v1161 = vmul.f32 %v965, %v965
      %v1162 = vmul.f32 %v966, %v966
      %v1163 = vmul.f32 %v967, %v967
      %v1164 = vmul.f32 %v968, %v968
      %v1165 = vmul.f32 %v969, %v969
      %v1166 = vmul.f32 %v970, %v970
      %v1167 = vadd.f32 %v971, %v972
      %v1168 = vadd.f32 %v1167, %v973
      %v1169 = vadd.f32 %v1168, %v974
      %v1170 = vadd.f32 %v1169, %v975
      %v1171 = vadd.f32 %v1170, %v976
      %v1172 = vsel %vm499, %v977, 0.0
      %v1173 = vadd.f32 %v1171, %v1172
      %1174 = vadd.xlane.f32.xlu0 %v1173
      %v1175 = vpop.xlane.xlu0 %1174
      %v1176 = vadd.f32 %v978, %v979
      %v1177 = vadd.f32 %v1176, %v980
      %v1178 = vadd.f32 %v1177, %v981
      %v1179 = vadd.f32 %v1178, %v982
      %v1180 = vadd.f32 %v1179, %v983
      %v1181 = vsel %vm499, %v984, 0.0
      %v1182 = vadd.f32 %v1180, %v1181
      %1183 = vadd.xlane.f32.xlu0 %v1182
      %v1184 = vpop.xlane.xlu0 %1183
      %v1185 = vadd.f32 %v985, %v986
      %v1186 = vadd.f32 %v1185, %v987
      %v1187 = vadd.f32 %v1186, %v988
      %v1188 = vadd.f32 %v1187, %v989
      %v1189 = vadd.f32 %v1188, %v990
      %v1190 = vsel %vm499, %v991, 0.0
      %v1191 = vadd.f32 %v1189, %v1190
      %1192 = vadd.xlane.f32.xlu0 %v1191
      %v1193 = vpop.xlane.xlu0 %1192
      %v1194 = vadd.f32 %v992, %v993
      %v1195 = vadd.f32 %v1194, %v994
      %v1196 = vadd.f32 %v1195, %v995
      %v1197 = vadd.f32 %v1196, %v996
      %v1198 = vadd.f32 %v1197, %v997
      %v1199 = vsel %vm499, %v998, 0.0
      %v1200 = vadd.f32 %v1198, %v1199
      %1201 = vadd.xlane.f32.xlu0 %v1200
      %v1202 = vpop.xlane.xlu0 %1201
      %v1203 = vadd.f32 %v999, %v1000
      %v1204 = vadd.f32 %v1203, %v1001
      %v1205 = vadd.f32 %v1204, %v1002
      %v1206 = vadd.f32 %v1205, %v1003
      %v1207 = vadd.f32 %v1206, %v1004
      %v1208 = vsel %vm499, %v1005, 0.0
      %v1209 = vadd.f32 %v1207, %v1208
      %1210 = vadd.xlane.f32.xlu0 %v1209
      %v1211 = vpop.xlane.xlu0 %1210
      %v1212 = vadd.f32 %v1006, %v1007
      %v1213 = vadd.f32 %v1212, %v1008
      %v1214 = vadd.f32 %v1213, %v1009
      %v1215 = vadd.f32 %v1214, %v1010
      %v1216 = vadd.f32 %v1215, %v1011
      %v1217 = vsel %vm499, %v1012, 0.0
      %v1218 = vadd.f32 %v1216, %v1217
      %1219 = vadd.xlane.f32.xlu0 %v1218
      %v1220 = vpop.xlane.xlu0 %1219
      %v1221 = vadd.f32 %v1013, %v1014
      %v1222 = vadd.f32 %v1221, %v1015
      %v1223 = vadd.f32 %v1222, %v1016
      %v1224 = vadd.f32 %v1223, %v1017
      %v1225 = vadd.f32 %v1224, %v1018
      %v1226 = vsel %vm499, %v1019, 0.0
      %v1227 = vadd.f32 %v1225, %v1226
      %1228 = vadd.xlane.f32.xlu0 %v1227
      %v1229 = vpop.xlane.xlu0 %1228
      %v1230 = vadd.f32 %v1020, %v1021
      %v1231 = vadd.f32 %v1230, %v1022
      %v1232 = vadd.f32 %v1231, %v1023
      %v1233 = vadd.f32 %v1232, %v1024
      %v1234 = vadd.f32 %v1233, %v1025
      %v1235 = vsel %vm499, %v1026, 0.0
      %v1236 = vadd.f32 %v1234, %v1235
      %1237 = vadd.xlane.f32.xlu0 %v1236
      %v1238 = vpop.xlane.xlu0 %1237
      %v1239 = vadd.f32 %v1027, %v1028
      %v1240 = vadd.f32 %v1239, %v1029
      %v1241 = vadd.f32 %v1240, %v1030
      %v1242 = vadd.f32 %v1241, %v1031
      %v1243 = vadd.f32 %v1242, %v1032
      %v1244 = vsel %vm499, %v1033, 0.0
      %v1245 = vadd.f32 %v1243, %v1244
      %1246 = vadd.xlane.f32.xlu0 %v1245
      %v1247 = vpop.xlane.xlu0 %1246
      %v1248 = vadd.f32 %v1034, %v1035
      %v1249 = vadd.f32 %v1248, %v1036
      %v1250 = vadd.f32 %v1249, %v1037
      %v1251 = vadd.f32 %v1250, %v1038
      %v1252 = vadd.f32 %v1251, %v1039
      %v1253 = vsel %vm499, %v1040, 0.0
      %v1254 = vadd.f32 %v1252, %v1253
      %1255 = vadd.xlane.f32.xlu0 %v1254
      %v1256 = vpop.xlane.xlu0 %1255
      %v1257 = vadd.f32 %v1041, %v1042
      %v1258 = vadd.f32 %v1257, %v1043
      %v1259 = vadd.f32 %v1258, %v1044
      %v1260 = vadd.f32 %v1259, %v1045
      %v1261 = vadd.f32 %v1260, %v1046
      %v1262 = vsel %vm499, %v1047, 0.0
      %v1263 = vadd.f32 %v1261, %v1262
      %1264 = vadd.xlane.f32.xlu0 %v1263
      %v1265 = vpop.xlane.xlu0 %1264
      %v1266 = vadd.f32 %v1048, %v1049
      %v1267 = vadd.f32 %v1266, %v1050
      %v1268 = vadd.f32 %v1267, %v1051
      %v1269 = vadd.f32 %v1268, %v1052
      %v1270 = vadd.f32 %v1269, %v1053
      %v1271 = vsel %vm499, %v1054, 0.0
      %v1272 = vadd.f32 %v1270, %v1271
      %1273 = vadd.xlane.f32.xlu0 %v1272
      %v1274 = vpop.xlane.xlu0 %1273
      %v1275 = vadd.f32 %v1055, %v1056
      %v1276 = vadd.f32 %v1275, %v1057
      %v1277 = vadd.f32 %v1276, %v1058
      %v1278 = vadd.f32 %v1277, %v1059
      %v1279 = vadd.f32 %v1278, %v1060
      %v1280 = vsel %vm499, %v1061, 0.0
      %v1281 = vadd.f32 %v1279, %v1280
      %1282 = vadd.xlane.f32.xlu0 %v1281
      %v1283 = vpop.xlane.xlu0 %1282
      %v1284 = vadd.f32 %v1062, %v1063
      %v1285 = vadd.f32 %v1284, %v1064
      %v1286 = vadd.f32 %v1285, %v1065
      %v1287 = vadd.f32 %v1286, %v1066
      %v1288 = vadd.f32 %v1287, %v1067
      %v1289 = vsel %vm499, %v1068, 0.0
      %v1290 = vadd.f32 %v1288, %v1289
      %1291 = vadd.xlane.f32.xlu0 %v1290
      %v1292 = vpop.xlane.xlu0 %1291
      %v1293 = vadd.f32 %v1069, %v1070
      %v1294 = vadd.f32 %v1293, %v1071
      %v1295 = vadd.f32 %v1294, %v1072
      %v1296 = vadd.f32 %v1295, %v1073
      %v1297 = vadd.f32 %v1296, %v1074
      %v1298 = vsel %vm499, %v1075, 0.0
      %v1299 = vadd.f32 %v1297, %v1298
      %1300 = vadd.xlane.f32.xlu0 %v1299
      %v1301 = vpop.xlane.xlu0 %1300
      %v1302 = vadd.f32 %v1076, %v1077
      %v1303 = vadd.f32 %v1302, %v1078
      %v1304 = vadd.f32 %v1303, %v1079
      %v1305 = vadd.f32 %v1304, %v1080
      %v1306 = vadd.f32 %v1305, %v1081
      %v1307 = vsel %vm499, %v1082, 0.0
      %v1308 = vadd.f32 %v1306, %v1307
      %1309 = vadd.xlane.f32.xlu0 %v1308
      %v1310 = vpop.xlane.xlu0 %1309
      %v1311 = vadd.f32 %v1083, %v1084
      %v1312 = vadd.f32 %v1311, %v1085
      %v1313 = vadd.f32 %v1312, %v1086
      %v1314 = vadd.f32 %v1313, %v1087
      %v1315 = vadd.f32 %v1314, %v1088
      %v1316 = vsel %vm499, %v1089, 0.0
      %v1317 = vadd.f32 %v1315, %v1316
      %1318 = vadd.xlane.f32.xlu0 %v1317
      %v1319 = vpop.xlane.xlu0 %1318
      %v1320 = vadd.f32 %v1090, %v1091
      %v1321 = vadd.f32 %v1320, %v1092
      %v1322 = vadd.f32 %v1321, %v1093
      %v1323 = vadd.f32 %v1322, %v1094
      %v1324 = vadd.f32 %v1323, %v1095
      %v1325 = vsel %vm499, %v1096, 0.0
      %v1326 = vadd.f32 %v1324, %v1325
      %1327 = vadd.xlane.f32.xlu0 %v1326
      %v1328 = vpop.xlane.xlu0 %1327
      %v1329 = vadd.f32 %v1097, %v1098
      %v1330 = vadd.f32 %v1329, %v1099
      %v1331 = vadd.f32 %v1330, %v1100
      %v1332 = vadd.f32 %v1331, %v1101
      %v1333 = vadd.f32 %v1332, %v1102
      %v1334 = vsel %vm499, %v1103, 0.0
      %v1335 = vadd.f32 %v1333, %v1334
      %1336 = vadd.xlane.f32.xlu0 %v1335
      %v1337 = vpop.xlane.xlu0 %1336
      %v1338 = vadd.f32 %v1104, %v1105
      %v1339 = vadd.f32 %v1338, %v1106
      %v1340 = vadd.f32 %v1339, %v1107
      %v1341 = vadd.f32 %v1340, %v1108
      %v1342 = vadd.f32 %v1341, %v1109
      %v1343 = vsel %vm499, %v1110, 0.0
      %v1344 = vadd.f32 %v1342, %v1343
      %1345 = vadd.xlane.f32.xlu0 %v1344
      %v1346 = vpop.xlane.xlu0 %1345
      %v1347 = vadd.f32 %v1111, %v1112
      %v1348 = vadd.f32 %v1347, %v1113
      %v1349 = vadd.f32 %v1348, %v1114
      %v1350 = vadd.f32 %v1349, %v1115
      %v1351 = vadd.f32 %v1350, %v1116
      %v1352 = vsel %vm499, %v1117, 0.0
      %v1353 = vadd.f32 %v1351, %v1352
      %1354 = vadd.xlane.f32.xlu0 %v1353
      %v1355 = vpop.xlane.xlu0 %1354
      %v1356 = vadd.f32 %v1118, %v1119
      %v1357 = vadd.f32 %v1356, %v1120
      %v1358 = vadd.f32 %v1357, %v1121
      %v1359 = vadd.f32 %v1358, %v1122
      %v1360 = vadd.f32 %v1359, %v1123
      %v1361 = vsel %vm499, %v1124, 0.0
      %v1362 = vadd.f32 %v1360, %v1361
      %1363 = vadd.xlane.f32.xlu0 %v1362
      %v1364 = vpop.xlane.xlu0 %1363
      %v1365 = vadd.f32 %v1125, %v1126
      %v1366 = vadd.f32 %v1365, %v1127
      %v1367 = vadd.f32 %v1366, %v1128
      %v1368 = vadd.f32 %v1367, %v1129
      %v1369 = vadd.f32 %v1368, %v1130
      %v1370 = vsel %vm499, %v1131, 0.0
      %v1371 = vadd.f32 %v1369, %v1370
      %1372 = vadd.xlane.f32.xlu0 %v1371
      %v1373 = vpop.xlane.xlu0 %1372
      %v1374 = vadd.f32 %v1132, %v1133
      %v1375 = vadd.f32 %v1374, %v1134
      %v1376 = vadd.f32 %v1375, %v1135
      %v1377 = vadd.f32 %v1376, %v1136
      %v1378 = vadd.f32 %v1377, %v1137
      %v1379 = vsel %vm499, %v1138, 0.0
      %v1380 = vadd.f32 %v1378, %v1379
      %1381 = vadd.xlane.f32.xlu0 %v1380
      %v1382 = vpop.xlane.xlu0 %1381
      %v1383 = vadd.f32 %v1139, %v1140
      %v1384 = vadd.f32 %v1383, %v1141
      %v1385 = vadd.f32 %v1384, %v1142
      %v1386 = vadd.f32 %v1385, %v1143
      %v1387 = vadd.f32 %v1386, %v1144
      %v1388 = vsel %vm499, %v1145, 0.0
      %v1389 = vadd.f32 %v1387, %v1388
      %1390 = vadd.xlane.f32.xlu0 %v1389
      %v1391 = vpop.xlane.xlu0 %1390
      %v1392 = vadd.f32 %v1146, %v1147
      %v1393 = vadd.f32 %v1392, %v1148
      %v1394 = vadd.f32 %v1393, %v1149
      %v1395 = vadd.f32 %v1394, %v1150
      %v1396 = vadd.f32 %v1395, %v1151
      %v1397 = vsel %vm499, %v1152, 0.0
      %v1398 = vadd.f32 %v1396, %v1397
      %1399 = vadd.xlane.f32.xlu0 %v1398
      %v1400 = vpop.xlane.xlu0 %1399
      %v1401 = vadd.f32 %v1153, %v1154
      %v1402 = vadd.f32 %v1401, %v1155
      %v1403 = vadd.f32 %v1402, %v1156
      %v1404 = vadd.f32 %v1403, %v1157
      %v1405 = vadd.f32 %v1404, %v1158
      %v1406 = vsel %vm499, %v1159, 0.0
      %v1407 = vadd.f32 %v1405, %v1406
      %1408 = vadd.xlane.f32.xlu0 %v1407
      %v1409 = vpop.xlane.xlu0 %1408
      %v1410 = vadd.f32 %v1160, %v1161
      %v1411 = vadd.f32 %v1410, %v1162
      %v1412 = vadd.f32 %v1411, %v1163
      %v1413 = vadd.f32 %v1412, %v1164
      %v1414 = vadd.f32 %v1413, %v1165
      %v1415 = vsel %vm499, %v1166, 0.0
      %v1416 = vadd.f32 %v1414, %v1415
      %1417 = vadd.xlane.f32.xlu0 %v1416
      %v1418 = vpop.xlane.xlu0 %1417
      %v1419 = vmul.f32 %v1175, 0.0012755102
      %v1420 = vmul.f32 %v1184, 0.0012755102
      %v1421 = vmul.f32 %v1193, 0.0012755102
      %v1422 = vmul.f32 %v1202, 0.0012755102
      %v1423 = vmul.f32 %v1211, 0.0012755102
      %v1424 = vmul.f32 %v1220, 0.0012755102
      %v1425 = vmul.f32 %v1229, 0.0012755102
      %v1426 = vmul.f32 %v1238, 0.0012755102
      %v1427 = vmul.f32 %v1247, 0.0012755102
      %v1428 = vmul.f32 %v1256, 0.0012755102
      %v1429 = vmul.f32 %v1265, 0.0012755102
      %v1430 = vmul.f32 %v1274, 0.0012755102
      %v1431 = vmul.f32 %v1283, 0.0012755102
      %v1432 = vmul.f32 %v1292, 0.0012755102
      %v1433 = vmul.f32 %v1301, 0.0012755102
      %v1434 = vmul.f32 %v1310, 0.0012755102
      %v1435 = vmul.f32 %v1319, 0.0012755102
      %v1436 = vmul.f32 %v1328, 0.0012755102
      %v1437 = vmul.f32 %v1337, 0.0012755102
      %v1438 = vmul.f32 %v1346, 0.0012755102
      %v1439 = vmul.f32 %v1355, 0.0012755102
      %v1440 = vmul.f32 %v1364, 0.0012755102
      %v1441 = vmul.f32 %v1373, 0.0012755102
      %v1442 = vmul.f32 %v1382, 0.0012755102
      %v1443 = vmul.f32 %v1391, 0.0012755102
      %v1444 = vmul.f32 %v1400, 0.0012755102
      %v1445 = vmul.f32 %v1409, 0.0012755102
      %v1446 = vmul.f32 %v1418, 0.0012755102
      %v1447 = vld [vmem:[%s274] sm:$0xff]
      %v1448 = vld [vmem:[%s274 + $0x8] sm:$0xff]
      %v1449 = vld [vmem:[%s274 + $0x10] sm:$0xff]
      %v1450 = vld [vmem:[%s274 + $0x18] sm:$0xff]
      %v1451 = vld [vmem:[%s274 + $0x20] sm:$0xff]
      %v1452 = vld [vmem:[%s274 + $0x28] sm:$0xff]
      %v1453 = vld [vmem:[%s274 + $0x30] sm:$0xff]
      %v1454 = vld [vmem:[%s274 + $0x38] sm:$0xff]
      %v1455 = vld [vmem:[%s274 + $0x40] sm:$0xff]
      %v1456 = vld [vmem:[%s274 + $0x48] sm:$0xff]
      %v1457 = vld [vmem:[%s274 + $0x50] sm:$0xff]
      %v1458 = vld [vmem:[%s274 + $0x58] sm:$0xff]
      %v1459 = vld [vmem:[%s274 + $0x60] sm:$0xff]
      %v1460 = vld [vmem:[%s274 + $0x68] sm:$0xff]
      %v1461 = vld [vmem:[%s274 + $0x70] sm:$0xff]
      %v1462 = vld [vmem:[%s274 + $0x78] sm:$0xff]
      %v1463 = vld [vmem:[%s274 + $0x80] sm:$0xff]
      %v1464 = vld [vmem:[%s274 + $0x88] sm:$0xff]
      %v1465 = vld [vmem:[%s274 + $0x90] sm:$0xff]
      %v1466 = vld [vmem:[%s274 + $0x98] sm:$0xff]
      %v1467 = vld [vmem:[%s274 + $0xa0] sm:$0xff]
      %v1468 = vld [vmem:[%s274 + $0xa8] sm:$0xff]
      %v1469 = vld [vmem:[%s274 + $0xb0] sm:$0xff]
      %v1470 = vld [vmem:[%s274 + $0xb8] sm:$0xff]
      %v1471 = vld [vmem:[%s274 + $0xc0] sm:$0xff]
      %v1472 = vld [vmem:[%s274 + $0xc8] sm:$0xff]
      %v1473 = vld [vmem:[%s274 + $0xd0] sm:$0xff]
      %v1474 = vld [vmem:[%s274 + $0xd8] sm:$0xff]
      %v1475 = vadd.f32 %v1419, 1e-05
      %v1476 = vadd.f32 %v1420, 1e-05
      %v1477 = vadd.f32 %v1421, 1e-05
      %v1478 = vadd.f32 %v1422, 1e-05
      %v1479 = vadd.f32 %v1423, 1e-05
      %v1480 = vadd.f32 %v1424, 1e-05
      %v1481 = vadd.f32 %v1425, 1e-05
      %v1482 = vadd.f32 %v1426, 1e-05
      %v1483 = vadd.f32 %v1427, 1e-05
      %v1484 = vadd.f32 %v1428, 1e-05
      %v1485 = vadd.f32 %v1429, 1e-05
      %v1486 = vadd.f32 %v1430, 1e-05
      %v1487 = vadd.f32 %v1431, 1e-05
      %v1488 = vadd.f32 %v1432, 1e-05
      %v1489 = vadd.f32 %v1433, 1e-05
      %v1490 = vadd.f32 %v1434, 1e-05
      %v1491 = vadd.f32 %v1435, 1e-05
      %v1492 = vadd.f32 %v1436, 1e-05
      %v1493 = vadd.f32 %v1437, 1e-05
      %v1494 = vadd.f32 %v1438, 1e-05
      %v1495 = vadd.f32 %v1439, 1e-05
      %v1496 = vadd.f32 %v1440, 1e-05
      %v1497 = vadd.f32 %v1441, 1e-05
      %v1498 = vadd.f32 %v1442, 1e-05
      %v1499 = vadd.f32 %v1443, 1e-05
      %v1500 = vadd.f32 %v1444, 1e-05
      %v1501 = vadd.f32 %v1445, 1e-05
      %v1502 = vadd.f32 %v1446, 1e-05
      %v1503 = vrsqrt.pop %v1475
      %v1504 = vrsqrt.pop %v1476
      %v1505 = vrsqrt.pop %v1477
      %v1506 = vrsqrt.pop %v1478
      %v1507 = vrsqrt.pop %v1479
      %v1508 = vrsqrt.pop %v1480
      %v1509 = vrsqrt.pop %v1481
      %v1510 = vrsqrt.pop %v1482
      %v1511 = vrsqrt.pop %v1483
      %v1512 = vrsqrt.pop %v1484
      %v1513 = vrsqrt.pop %v1485
      %v1514 = vrsqrt.pop %v1486
      %v1515 = vrsqrt.pop %v1487
      %v1516 = vrsqrt.pop %v1488
      %v1517 = vrsqrt.pop %v1489
      %v1518 = vrsqrt.pop %v1490
      %v1519 = vrsqrt.pop %v1491
      %v1520 = vrsqrt.pop %v1492
      %v1521 = vrsqrt.pop %v1493
      %v1522 = vrsqrt.pop %v1494
      %v1523 = vrsqrt.pop %v1495
      %v1524 = vrsqrt.pop %v1496
      %v1525 = vrsqrt.pop %v1497
      %v1526 = vrsqrt.pop %v1498
      %v1527 = vrsqrt.pop %v1499
      %v1528 = vrsqrt.pop %v1500
      %v1529 = vrsqrt.pop %v1501
      %v1530 = vrsqrt.pop %v1502
      %v1531 = vmul.f32 %v1447, %v1503
      %v1532 = vmul.f32 %v1448, %v1504
      %v1533 = vmul.f32 %v1449, %v1505
      %v1534 = vmul.f32 %v1450, %v1506
      %v1535 = vmul.f32 %v1451, %v1507
      %v1536 = vmul.f32 %v1452, %v1508
      %v1537 = vmul.f32 %v1453, %v1509
      %v1538 = vmul.f32 %v1454, %v1510
      %v1539 = vmul.f32 %v1455, %v1511
      %v1540 = vmul.f32 %v1456, %v1512
      %v1541 = vmul.f32 %v1457, %v1513
      %v1542 = vmul.f32 %v1458, %v1514
      %v1543 = vmul.f32 %v1459, %v1515
      %v1544 = vmul.f32 %v1460, %v1516
      %v1545 = vmul.f32 %v1461, %v1517
      %v1546 = vmul.f32 %v1462, %v1518
      %v1547 = vmul.f32 %v1463, %v1519
      %v1548 = vmul.f32 %v1464, %v1520
      %v1549 = vmul.f32 %v1465, %v1521
      %v1550 = vmul.f32 %v1466, %v1522
      %v1551 = vmul.f32 %v1467, %v1523
      %v1552 = vmul.f32 %v1468, %v1524
      %v1553 = vmul.f32 %v1469, %v1525
      %v1554 = vmul.f32 %v1470, %v1526
      %v1555 = vmul.f32 %v1471, %v1527
      %v1556 = vmul.f32 %v1472, %v1528
      %v1557 = vmul.f32 %v1473, %v1529
      %v1558 = vmul.f32 %v1474, %v1530
      %1560 = vset.pattern.permute.xlu0 0
      %1561 = vperm.xlu0 %1560, %v1531
      %v1562 = vpop.permute.xlu0 %1561
      %1565 = vset.pattern.permute.xlu0 0
      %1566 = vperm.xlu0 %1565, %v1532
      %v1567 = vpop.permute.xlu0 %1566
      %1570 = vset.pattern.permute.xlu0 0
      %1571 = vperm.xlu0 %1570, %v1533
      %v1572 = vpop.permute.xlu0 %1571
      %1575 = vset.pattern.permute.xlu0 0
      %1576 = vperm.xlu0 %1575, %v1534
      %v1577 = vpop.permute.xlu0 %1576
      %1580 = vset.pattern.permute.xlu0 0
      %1581 = vperm.xlu0 %1580, %v1535
      %v1582 = vpop.permute.xlu0 %1581
      %1585 = vset.pattern.permute.xlu0 0
      %1586 = vperm.xlu0 %1585, %v1536
      %v1587 = vpop.permute.xlu0 %1586
      %1590 = vset.pattern.permute.xlu0 0
      %1591 = vperm.xlu0 %1590, %v1537
      %v1592 = vpop.permute.xlu0 %1591
      %1595 = vset.pattern.permute.xlu0 0
      %1596 = vperm.xlu0 %1595, %v1538
      %v1597 = vpop.permute.xlu0 %1596
      %1600 = vset.pattern.permute.xlu0 0
      %1601 = vperm.xlu0 %1600, %v1539
      %v1602 = vpop.permute.xlu0 %1601
      %1605 = vset.pattern.permute.xlu0 0
      %1606 = vperm.xlu0 %1605, %v1540
      %v1607 = vpop.permute.xlu0 %1606
      %1610 = vset.pattern.permute.xlu0 0
      %1611 = vperm.xlu0 %1610, %v1541
      %v1612 = vpop.permute.xlu0 %1611
      %1615 = vset.pattern.permute.xlu0 0
      %1616 = vperm.xlu0 %1615, %v1542
      %v1617 = vpop.permute.xlu0 %1616
      %1620 = vset.pattern.permute.xlu0 0
      %1621 = vperm.xlu0 %1620, %v1543
      %v1622 = vpop.permute.xlu0 %1621
      %1625 = vset.pattern.permute.xlu0 0
      %1626 = vperm.xlu0 %1625, %v1544
      %v1627 = vpop.permute.xlu0 %1626
      %1630 = vset.pattern.permute.xlu0 0
      %1631 = vperm.xlu0 %1630, %v1545
      %v1632 = vpop.permute.xlu0 %1631
      %1635 = vset.pattern.permute.xlu0 0
      %1636 = vperm.xlu0 %1635, %v1546
      %v1637 = vpop.permute.xlu0 %1636
      %1640 = vset.pattern.permute.xlu0 0
      %1641 = vperm.xlu0 %1640, %v1547
      %v1642 = vpop.permute.xlu0 %1641
      %1645 = vset.pattern.permute.xlu0 0
      %1646 = vperm.xlu0 %1645, %v1548
      %v1647 = vpop.permute.xlu0 %1646
      %1650 = vset.pattern.permute.xlu0 0
      %1651 = vperm.xlu0 %1650, %v1549
      %v1652 = vpop.permute.xlu0 %1651
      %1655 = vset.pattern.permute.xlu0 0
      %1656 = vperm.xlu0 %1655, %v1550
      %v1657 = vpop.permute.xlu0 %1656
      %1660 = vset.pattern.permute.xlu0 0
      %1661 = vperm.xlu0 %1660, %v1551
      %v1662 = vpop.permute.xlu0 %1661
      %1665 = vset.pattern.permute.xlu0 0
      %1666 = vperm.xlu0 %1665, %v1552
      %v1667 = vpop.permute.xlu0 %1666
      %1670 = vset.pattern.permute.xlu0 0
      %1671 = vperm.xlu0 %1670, %v1553
      %v1672 = vpop.permute.xlu0 %1671
      %1675 = vset.pattern.permute.xlu0 0
      %1676 = vperm.xlu0 %1675, %v1554
      %v1677 = vpop.permute.xlu0 %1676
      %1680 = vset.pattern.permute.xlu0 0
      %1681 = vperm.xlu0 %1680, %v1555
      %v1682 = vpop.permute.xlu0 %1681
      %1685 = vset.pattern.permute.xlu0 0
      %1686 = vperm.xlu0 %1685, %v1556
      %v1687 = vpop.permute.xlu0 %1686
      %1690 = vset.pattern.permute.xlu0 0
      %1691 = vperm.xlu0 %1690, %v1557
      %v1692 = vpop.permute.xlu0 %1691
      %1695 = vset.pattern.permute.xlu0 0
      %1696 = vperm.xlu0 %1695, %v1558
      %v1697 = vpop.permute.xlu0 %1696
      %v1699 = vmul.f32 %v775, %v1562
      %v1700 = vmul.f32 %v776, %v1562
      %v1701 = vmul.f32 %v777, %v1562
      %v1702 = vmul.f32 %v778, %v1562
      %v1703 = vmul.f32 %v779, %v1562
      %v1704 = vmul.f32 %v780, %v1562
      %v1705 = vmul.f32 %v781, %v1562
      %v1706 = vmul.f32 %v782, %v1567
      %v1707 = vmul.f32 %v783, %v1567
      %v1708 = vmul.f32 %v784, %v1567
      %v1709 = vmul.f32 %v785, %v1567
      %v1710 = vmul.f32 %v786, %v1567
      %v1711 = vmul.f32 %v787, %v1567
      %v1712 = vmul.f32 %v788, %v1567
      %v1713 = vmul.f32 %v789, %v1572
      %v1714 = vmul.f32 %v790, %v1572
      %v1715 = vmul.f32 %v791, %v1572
      %v1716 = vmul.f32 %v792, %v1572
      %v1717 = vmul.f32 %v793, %v1572
      %v1718 = vmul.f32 %v794, %v1572
      %v1719 = vmul.f32 %v795, %v1572
      %v1720 = vmul.f32 %v796, %v1577
      %v1721 = vmul.f32 %v797, %v1577
      %v1722 = vmul.f32 %v798, %v1577
      %v1723 = vmul.f32 %v799, %v1577
      %v1724 = vmul.f32 %v800, %v1577
      %v1725 = vmul.f32 %v801, %v1577
      %v1726 = vmul.f32 %v802, %v1577
      %v1727 = vmul.f32 %v803, %v1582
      %v1728 = vmul.f32 %v804, %v1582
      %v1729 = vmul.f32 %v805, %v1582
      %v1730 = vmul.f32 %v806, %v1582
      %v1731 = vmul.f32 %v807, %v1582
      %v1732 = vmul.f32 %v808, %v1582
      %v1733 = vmul.f32 %v809, %v1582
      %v1734 = vmul.f32 %v810, %v1587
      %v1735 = vmul.f32 %v811, %v1587
      %v1736 = vmul.f32 %v812, %v1587
      %v1737 = vmul.f32 %v813, %v1587
      %v1738 = vmul.f32 %v814, %v1587
      %v1739 = vmul.f32 %v815, %v1587
      %v1740 = vmul.f32 %v816, %v1587
      %v1741 = vmul.f32 %v817, %v1592
      %v1742 = vmul.f32 %v818, %v1592
      %v1743 = vmul.f32 %v819, %v1592
      %v1744 = vmul.f32 %v820, %v1592
      %v1745 = vmul.f32 %v821, %v1592
      %v1746 = vmul.f32 %v822, %v1592
      %v1747 = vmul.f32 %v823, %v1592
      %v1748 = vmul.f32 %v824, %v1597
      %v1749 = vmul.f32 %v825, %v1597
      %v1750 = vmul.f32 %v826, %v1597
      %v1751 = vmul.f32 %v827, %v1597
      %v1752 = vmul.f32 %v828, %v1597
      %v1753 = vmul.f32 %v829, %v1597
      %v1754 = vmul.f32 %v830, %v1597
      %v1755 = vmul.f32 %v831, %v1602
      %v1756 = vmul.f32 %v832, %v1602
      %v1757 = vmul.f32 %v833, %v1602
      %v1758 = vmul.f32 %v834, %v1602
      %v1759 = vmul.f32 %v835, %v1602
      %v1760 = vmul.f32 %v836, %v1602
      %v1761 = vmul.f32 %v837, %v1602
      %v1762 = vmul.f32 %v838, %v1607
      %v1763 = vmul.f32 %v839, %v1607
      %v1764 = vmul.f32 %v840, %v1607
      %v1765 = vmul.f32 %v841, %v1607
      %v1766 = vmul.f32 %v842, %v1607
      %v1767 = vmul.f32 %v843, %v1607
      %v1768 = vmul.f32 %v844, %v1607
      %v1769 = vmul.f32 %v845, %v1612
      %v1770 = vmul.f32 %v846, %v1612
      %v1771 = vmul.f32 %v847, %v1612
      %v1772 = vmul.f32 %v848, %v1612
      %v1773 = vmul.f32 %v849, %v1612
      %v1774 = vmul.f32 %v850, %v1612
      %v1775 = vmul.f32 %v851, %v1612
      %v1776 = vmul.f32 %v852, %v1617
      %v1777 = vmul.f32 %v853, %v1617
      %v1778 = vmul.f32 %v854, %v1617
      %v1779 = vmul.f32 %v855, %v1617
      %v1780 = vmul.f32 %v856, %v1617
      %v1781 = vmul.f32 %v857, %v1617
      %v1782 = vmul.f32 %v858, %v1617
      %v1783 = vmul.f32 %v859, %v1622
      %v1784 = vmul.f32 %v860, %v1622
      %v1785 = vmul.f32 %v861, %v1622
      %v1786 = vmul.f32 %v862, %v1622
      %v1787 = vmul.f32 %v863, %v1622
      %v1788 = vmul.f32 %v864, %v1622
      %v1789 = vmul.f32 %v865, %v1622
      %v1790 = vmul.f32 %v866, %v1627
      %v1791 = vmul.f32 %v867, %v1627
      %v1792 = vmul.f32 %v868, %v1627
      %v1793 = vmul.f32 %v869, %v1627
      %v1794 = vmul.f32 %v870, %v1627
      %v1795 = vmul.f32 %v871, %v1627
      %v1796 = vmul.f32 %v872, %v1627
      %v1797 = vmul.f32 %v873, %v1632
      %v1798 = vmul.f32 %v874, %v1632
      %v1799 = vmul.f32 %v875, %v1632
      %v1800 = vmul.f32 %v876, %v1632
      %v1801 = vmul.f32 %v877, %v1632
      %v1802 = vmul.f32 %v878, %v1632
      %v1803 = vmul.f32 %v879, %v1632
      %v1804 = vmul.f32 %v880, %v1637
      %v1805 = vmul.f32 %v881, %v1637
      %v1806 = vmul.f32 %v882, %v1637
      %v1807 = vmul.f32 %v883, %v1637
      %v1808 = vmul.f32 %v884, %v1637
      %v1809 = vmul.f32 %v885, %v1637
      %v1810 = vmul.f32 %v886, %v1637
      %v1811 = vmul.f32 %v887, %v1642
      %v1812 = vmul.f32 %v888, %v1642
      %v1813 = vmul.f32 %v889, %v1642
      %v1814 = vmul.f32 %v890, %v1642
      %v1815 = vmul.f32 %v891, %v1642
      %v1816 = vmul.f32 %v892, %v1642
      %v1817 = vmul.f32 %v893, %v1642
      %v1818 = vmul.f32 %v894, %v1647
      %v1819 = vmul.f32 %v895, %v1647
      %v1820 = vmul.f32 %v896, %v1647
      %v1821 = vmul.f32 %v897, %v1647
      %v1822 = vmul.f32 %v898, %v1647
      %v1823 = vmul.f32 %v899, %v1647
      %v1824 = vmul.f32 %v900, %v1647
      %v1825 = vmul.f32 %v901, %v1652
      %v1826 = vmul.f32 %v902, %v1652
      %v1827 = vmul.f32 %v903, %v1652
      %v1828 = vmul.f32 %v904, %v1652
      %v1829 = vmul.f32 %v905, %v1652
      %v1830 = vmul.f32 %v906, %v1652
      %v1831 = vmul.f32 %v907, %v1652
      %v1832 = vmul.f32 %v908, %v1657
      %v1833 = vmul.f32 %v909, %v1657
      %v1834 = vmul.f32 %v910, %v1657
      %v1835 = vmul.f32 %v911, %v1657
      %v1836 = vmul.f32 %v912, %v1657
      %v1837 = vmul.f32 %v913, %v1657
      %v1838 = vmul.f32 %v914, %v1657
      %v1839 = vmul.f32 %v915, %v1662
      %v1840 = vmul.f32 %v916, %v1662
      %v1841 = vmul.f32 %v917, %v1662
      %v1842 = vmul.f32 %v918, %v1662
      %v1843 = vmul.f32 %v919, %v1662
      %v1844 = vmul.f32 %v920, %v1662
      %v1845 = vmul.f32 %v921, %v1662
      %v1846 = vmul.f32 %v922, %v1667
      %v1847 = vmul.f32 %v923, %v1667
      %v1848 = vmul.f32 %v924, %v1667
      %v1849 = vmul.f32 %v925, %v1667
      %v1850 = vmul.f32 %v926, %v1667
      %v1851 = vmul.f32 %v927, %v1667
      %v1852 = vmul.f32 %v928, %v1667
      %v1853 = vmul.f32 %v929, %v1672
      %v1854 = vmul.f32 %v930, %v1672
      %v1855 = vmul.f32 %v931, %v1672
      %v1856 = vmul.f32 %v932, %v1672
      %v1857 = vmul.f32 %v933, %v1672
      %v1858 = vmul.f32 %v934, %v1672
      %v1859 = vmul.f32 %v935, %v1672
      %v1860 = vmul.f32 %v936, %v1677
      %v1861 = vmul.f32 %v937, %v1677
      %v1862 = vmul.f32 %v938, %v1677
      %v1863 = vmul.f32 %v939, %v1677
      %v1864 = vmul.f32 %v940, %v1677
      %v1865 = vmul.f32 %v941, %v1677
      %v1866 = vmul.f32 %v942, %v1677
      %v1867 = vmul.f32 %v943, %v1682
      %v1868 = vmul.f32 %v944, %v1682
      %v1869 = vmul.f32 %v945, %v1682
      %v1870 = vmul.f32 %v946, %v1682
      %v1871 = vmul.f32 %v947, %v1682
      %v1872 = vmul.f32 %v948, %v1682
      %v1873 = vmul.f32 %v949, %v1682
      %v1874 = vmul.f32 %v950, %v1687
      %v1875 = vmul.f32 %v951, %v1687
      %v1876 = vmul.f32 %v952, %v1687
      %v1877 = vmul.f32 %v953, %v1687
      %v1878 = vmul.f32 %v954, %v1687
      %v1879 = vmul.f32 %v955, %v1687
      %v1880 = vmul.f32 %v956, %v1687
      %v1881 = vmul.f32 %v957, %v1692
      %v1882 = vmul.f32 %v958, %v1692
      %v1883 = vmul.f32 %v959, %v1692
      %v1884 = vmul.f32 %v960, %v1692
      %v1885 = vmul.f32 %v961, %v1692
      %v1886 = vmul.f32 %v962, %v1692
      %v1887 = vmul.f32 %v963, %v1692
      %v1888 = vmul.f32 %v964, %v1697
      %v1889 = vmul.f32 %v965, %v1697
      %v1890 = vmul.f32 %v966, %v1697
      %v1891 = vmul.f32 %v967, %v1697
      %v1892 = vmul.f32 %v968, %v1697
      %v1893 = vmul.f32 %v969, %v1697
      %v1894 = vmul.f32 %v970, %v1697
      %v1895 = vld [vmem:[%s280] sm:$0xff]
      %v1896 = vld [vmem:[%s280 + $0x8] sm:$0xff]
      %v1897 = vld [vmem:[%s280 + $0x10] sm:$0xff]
      %v1898 = vld [vmem:[%s280 + $0x18] sm:$0xff]
      %v1899 = vld [vmem:[%s280 + $0x20] sm:$0xff]
      %v1900 = vld [vmem:[%s280 + $0x28] sm:$0xff]
      %v1901 = vld [vmem:[%s280 + $0x30] sm:$0xff]
      %v1902 = vld [vmem:[%s280 + $0x38] sm:$0xff]
      %v1903 = vld [vmem:[%s280 + $0x40] sm:$0xff]
      %v1904 = vld [vmem:[%s280 + $0x48] sm:$0xff]
      %v1905 = vld [vmem:[%s280 + $0x50] sm:$0xff]
      %v1906 = vld [vmem:[%s280 + $0x58] sm:$0xff]
      %v1907 = vld [vmem:[%s280 + $0x60] sm:$0xff]
      %v1908 = vld [vmem:[%s280 + $0x68] sm:$0xff]
      %v1909 = vld [vmem:[%s280 + $0x70] sm:$0xff]
      %v1910 = vld [vmem:[%s280 + $0x78] sm:$0xff]
      %v1911 = vld [vmem:[%s280 + $0x80] sm:$0xff]
      %v1912 = vld [vmem:[%s280 + $0x88] sm:$0xff]
      %v1913 = vld [vmem:[%s280 + $0x90] sm:$0xff]
      %v1914 = vld [vmem:[%s280 + $0x98] sm:$0xff]
      %v1915 = vld [vmem:[%s280 + $0xa0] sm:$0xff]
      %v1916 = vld [vmem:[%s280 + $0xa8] sm:$0xff]
      %v1917 = vld [vmem:[%s280 + $0xb0] sm:$0xff]
      %v1918 = vld [vmem:[%s280 + $0xb8] sm:$0xff]
      %v1919 = vld [vmem:[%s280 + $0xc0] sm:$0xff]
      %v1920 = vld [vmem:[%s280 + $0xc8] sm:$0xff]
      %v1921 = vld [vmem:[%s280 + $0xd0] sm:$0xff]
      %v1922 = vld [vmem:[%s280 + $0xd8] sm:$0xff]
      %1924 = vset.pattern.permute.xlu0 0
      %1925 = vperm.xlu0 %1924, %v1895
      %v1926 = vpop.permute.xlu0 %1925
      %1929 = vset.pattern.permute.xlu0 0
      %1930 = vperm.xlu0 %1929, %v1896
      %v1931 = vpop.permute.xlu0 %1930
      %1934 = vset.pattern.permute.xlu0 0
      %1935 = vperm.xlu0 %1934, %v1897
      %v1936 = vpop.permute.xlu0 %1935
      %1939 = vset.pattern.permute.xlu0 0
      %1940 = vperm.xlu0 %1939, %v1898
      %v1941 = vpop.permute.xlu0 %1940
      %1944 = vset.pattern.permute.xlu0 0
      %1945 = vperm.xlu0 %1944, %v1899
      %v1946 = vpop.permute.xlu0 %1945
      %1949 = vset.pattern.permute.xlu0 0
      %1950 = vperm.xlu0 %1949, %v1900
      %v1951 = vpop.permute.xlu0 %1950
      %1954 = vset.pattern.permute.xlu0 0
      %1955 = vperm.xlu0 %1954, %v1901
      %v1956 = vpop.permute.xlu0 %1955
      %1959 = vset.pattern.permute.xlu0 0
      %1960 = vperm.xlu0 %1959, %v1902
      %v1961 = vpop.permute.xlu0 %1960
      %1964 = vset.pattern.permute.xlu0 0
      %1965 = vperm.xlu0 %1964, %v1903
      %v1966 = vpop.permute.xlu0 %1965
      %1969 = vset.pattern.permute.xlu0 0
      %1970 = vperm.xlu0 %1969, %v1904
      %v1971 = vpop.permute.xlu0 %1970
      %1974 = vset.pattern.permute.xlu0 0
      %1975 = vperm.xlu0 %1974, %v1905
      %v1976 = vpop.permute.xlu0 %1975
      %1979 = vset.pattern.permute.xlu0 0
      %1980 = vperm.xlu0 %1979, %v1906
      %v1981 = vpop.permute.xlu0 %1980
      %1984 = vset.pattern.permute.xlu0 0
      %1985 = vperm.xlu0 %1984, %v1907
      %v1986 = vpop.permute.xlu0 %1985
      %1989 = vset.pattern.permute.xlu0 0
      %1990 = vperm.xlu0 %1989, %v1908
      %v1991 = vpop.permute.xlu0 %1990
      %1994 = vset.pattern.permute.xlu0 0
      %1995 = vperm.xlu0 %1994, %v1909
      %v1996 = vpop.permute.xlu0 %1995
      %1999 = vset.pattern.permute.xlu0 0
      %2000 = vperm.xlu0 %1999, %v1910
      %v2001 = vpop.permute.xlu0 %2000
      %2004 = vset.pattern.permute.xlu0 0
      %2005 = vperm.xlu0 %2004, %v1911
      %v2006 = vpop.permute.xlu0 %2005
      %2009 = vset.pattern.permute.xlu0 0
      %2010 = vperm.xlu0 %2009, %v1912
      %v2011 = vpop.permute.xlu0 %2010
      %2014 = vset.pattern.permute.xlu0 0
      %2015 = vperm.xlu0 %2014, %v1913
      %v2016 = vpop.permute.xlu0 %2015
      %2019 = vset.pattern.permute.xlu0 0
      %2020 = vperm.xlu0 %2019, %v1914
      %v2021 = vpop.permute.xlu0 %2020
      %2024 = vset.pattern.permute.xlu0 0
      %2025 = vperm.xlu0 %2024, %v1915
      %v2026 = vpop.permute.xlu0 %2025
      %2029 = vset.pattern.permute.xlu0 0
      %2030 = vperm.xlu0 %2029, %v1916
      %v2031 = vpop.permute.xlu0 %2030
      %2034 = vset.pattern.permute.xlu0 0
      %2035 = vperm.xlu0 %2034, %v1917
      %v2036 = vpop.permute.xlu0 %2035
      %2039 = vset.pattern.permute.xlu0 0
      %2040 = vperm.xlu0 %2039, %v1918
      %v2041 = vpop.permute.xlu0 %2040
      %2044 = vset.pattern.permute.xlu0 0
      %2045 = vperm.xlu0 %2044, %v1919
      %v2046 = vpop.permute.xlu0 %2045
      %2049 = vset.pattern.permute.xlu0 0
      %2050 = vperm.xlu0 %2049, %v1920
      %v2051 = vpop.permute.xlu0 %2050
      %2054 = vset.pattern.permute.xlu0 0
      %2055 = vperm.xlu0 %2054, %v1921
      %v2056 = vpop.permute.xlu0 %2055
      %2059 = vset.pattern.permute.xlu0 0
      %2060 = vperm.xlu0 %2059, %v1922
      %v2061 = vpop.permute.xlu0 %2060
      %v2063 = vadd.f32 %v1699, %v1926
      %v2064 = vadd.f32 %v1700, %v1926
      %v2065 = vadd.f32 %v1701, %v1926
      %v2066 = vadd.f32 %v1702, %v1926
      %v2067 = vadd.f32 %v1703, %v1926
      %v2068 = vadd.f32 %v1704, %v1926
      %v2069 = vadd.f32 %v1705, %v1926
      %v2070 = vadd.f32 %v1706, %v1931
      %v2071 = vadd.f32 %v1707, %v1931
      %v2072 = vadd.f32 %v1708, %v1931
      %v2073 = vadd.f32 %v1709, %v1931
      %v2074 = vadd.f32 %v1710, %v1931
      %v2075 = vadd.f32 %v1711, %v1931
      %v2076 = vadd.f32 %v1712, %v1931
      %v2077 = vadd.f32 %v1713, %v1936
      %v2078 = vadd.f32 %v1714, %v1936
      %v2079 = vadd.f32 %v1715, %v1936
      %v2080 = vadd.f32 %v1716, %v1936
      %v2081 = vadd.f32 %v1717, %v1936
      %v2082 = vadd.f32 %v1718, %v1936
      %v2083 = vadd.f32 %v1719, %v1936
      %v2084 = vadd.f32 %v1720, %v1941
      %v2085 = vadd.f32 %v1721, %v1941
      %v2086 = vadd.f32 %v1722, %v1941
      %v2087 = vadd.f32 %v1723, %v1941
      %v2088 = vadd.f32 %v1724, %v1941
      %v2089 = vadd.f32 %v1725, %v1941
      %v2090 = vadd.f32 %v1726, %v1941
      %v2091 = vadd.f32 %v1727, %v1946
      %v2092 = vadd.f32 %v1728, %v1946
      %v2093 = vadd.f32 %v1729, %v1946
      %v2094 = vadd.f32 %v1730, %v1946
      %v2095 = vadd.f32 %v1731, %v1946
      %v2096 = vadd.f32 %v1732, %v1946
      %v2097 = vadd.f32 %v1733, %v1946
      %v2098 = vadd.f32 %v1734, %v1951
      %v2099 = vadd.f32 %v1735, %v1951
      %v2100 = vadd.f32 %v1736, %v1951
      %v2101 = vadd.f32 %v1737, %v1951
      %v2102 = vadd.f32 %v1738, %v1951
      %v2103 = vadd.f32 %v1739, %v1951
      %v2104 = vadd.f32 %v1740, %v1951
      %v2105 = vadd.f32 %v1741, %v1956
      %v2106 = vadd.f32 %v1742, %v1956
      %v2107 = vadd.f32 %v1743, %v1956
      %v2108 = vadd.f32 %v1744, %v1956
      %v2109 = vadd.f32 %v1745, %v1956
      %v2110 = vadd.f32 %v1746, %v1956
      %v2111 = vadd.f32 %v1747, %v1956
      %v2112 = vadd.f32 %v1748, %v1961
      %v2113 = vadd.f32 %v1749, %v1961
      %v2114 = vadd.f32 %v1750, %v1961
      %v2115 = vadd.f32 %v1751, %v1961
      %v2116 = vadd.f32 %v1752, %v1961
      %v2117 = vadd.f32 %v1753, %v1961
      %v2118 = vadd.f32 %v1754, %v1961
      %v2119 = vadd.f32 %v1755, %v1966
      %v2120 = vadd.f32 %v1756, %v1966
      %v2121 = vadd.f32 %v1757, %v1966
      %v2122 = vadd.f32 %v1758, %v1966
      %v2123 = vadd.f32 %v1759, %v1966
      %v2124 = vadd.f32 %v1760, %v1966
      %v2125 = vadd.f32 %v1761, %v1966
      %v2126 = vadd.f32 %v1762, %v1971
      %v2127 = vadd.f32 %v1763, %v1971
      %v2128 = vadd.f32 %v1764, %v1971
      %v2129 = vadd.f32 %v1765, %v1971
      %v2130 = vadd.f32 %v1766, %v1971
      %v2131 = vadd.f32 %v1767, %v1971
      %v2132 = vadd.f32 %v1768, %v1971
      %v2133 = vadd.f32 %v1769, %v1976
      %v2134 = vadd.f32 %v1770, %v1976
      %v2135 = vadd.f32 %v1771, %v1976
      %v2136 = vadd.f32 %v1772, %v1976
      %v2137 = vadd.f32 %v1773, %v1976
      %v2138 = vadd.f32 %v1774, %v1976
      %v2139 = vadd.f32 %v1775, %v1976
      %v2140 = vadd.f32 %v1776, %v1981
      %v2141 = vadd.f32 %v1777, %v1981
      %v2142 = vadd.f32 %v1778, %v1981
      %v2143 = vadd.f32 %v1779, %v1981
      %v2144 = vadd.f32 %v1780, %v1981
      %v2145 = vadd.f32 %v1781, %v1981
      %v2146 = vadd.f32 %v1782, %v1981
      %v2147 = vadd.f32 %v1783, %v1986
      %v2148 = vadd.f32 %v1784, %v1986
      %v2149 = vadd.f32 %v1785, %v1986
      %v2150 = vadd.f32 %v1786, %v1986
      %v2151 = vadd.f32 %v1787, %v1986
      %v2152 = vadd.f32 %v1788, %v1986
      %v2153 = vadd.f32 %v1789, %v1986
      %v2154 = vadd.f32 %v1790, %v1991
      %v2155 = vadd.f32 %v1791, %v1991
      %v2156 = vadd.f32 %v1792, %v1991
      %v2157 = vadd.f32 %v1793, %v1991
      %v2158 = vadd.f32 %v1794, %v1991
      %v2159 = vadd.f32 %v1795, %v1991
      %v2160 = vadd.f32 %v1796, %v1991
      %v2161 = vadd.f32 %v1797, %v1996
      %v2162 = vadd.f32 %v1798, %v1996
      %v2163 = vadd.f32 %v1799, %v1996
      %v2164 = vadd.f32 %v1800, %v1996
      %v2165 = vadd.f32 %v1801, %v1996
      %v2166 = vadd.f32 %v1802, %v1996
      %v2167 = vadd.f32 %v1803, %v1996
      %v2168 = vadd.f32 %v1804, %v2001
      %v2169 = vadd.f32 %v1805, %v2001
      %v2170 = vadd.f32 %v1806, %v2001
      %v2171 = vadd.f32 %v1807, %v2001
      %v2172 = vadd.f32 %v1808, %v2001
      %v2173 = vadd.f32 %v1809, %v2001
      %v2174 = vadd.f32 %v1810, %v2001
      %v2175 = vadd.f32 %v1811, %v2006
      %v2176 = vadd.f32 %v1812, %v2006
      %v2177 = vadd.f32 %v1813, %v2006
      %v2178 = vadd.f32 %v1814, %v2006
      %v2179 = vadd.f32 %v1815, %v2006
      %v2180 = vadd.f32 %v1816, %v2006
      %v2181 = vadd.f32 %v1817, %v2006
      %v2182 = vadd.f32 %v1818, %v2011
      %v2183 = vadd.f32 %v1819, %v2011
      %v2184 = vadd.f32 %v1820, %v2011
      %v2185 = vadd.f32 %v1821, %v2011
      %v2186 = vadd.f32 %v1822, %v2011
      %v2187 = vadd.f32 %v1823, %v2011
      %v2188 = vadd.f32 %v1824, %v2011
      %v2189 = vadd.f32 %v1825, %v2016
      %v2190 = vadd.f32 %v1826, %v2016
      %v2191 = vadd.f32 %v1827, %v2016
      %v2192 = vadd.f32 %v1828, %v2016
      %v2193 = vadd.f32 %v1829, %v2016
      %v2194 = vadd.f32 %v1830, %v2016
      %v2195 = vadd.f32 %v1831, %v2016
      %v2196 = vadd.f32 %v1832, %v2021
      %v2197 = vadd.f32 %v1833, %v2021
      %v2198 = vadd.f32 %v1834, %v2021
      %v2199 = vadd.f32 %v1835, %v2021
      %v2200 = vadd.f32 %v1836, %v2021
      %v2201 = vadd.f32 %v1837, %v2021
      %v2202 = vadd.f32 %v1838, %v2021
      %v2203 = vadd.f32 %v1839, %v2026
      %v2204 = vadd.f32 %v1840, %v2026
      %v2205 = vadd.f32 %v1841, %v2026
      %v2206 = vadd.f32 %v1842, %v2026
      %v2207 = vadd.f32 %v1843, %v2026
      %v2208 = vadd.f32 %v1844, %v2026
      %v2209 = vadd.f32 %v1845, %v2026
      %v2210 = vadd.f32 %v1846, %v2031
      %v2211 = vadd.f32 %v1847, %v2031
      %v2212 = vadd.f32 %v1848, %v2031
      %v2213 = vadd.f32 %v1849, %v2031
      %v2214 = vadd.f32 %v1850, %v2031
      %v2215 = vadd.f32 %v1851, %v2031
      %v2216 = vadd.f32 %v1852, %v2031
      %v2217 = vadd.f32 %v1853, %v2036
      %v2218 = vadd.f32 %v1854, %v2036
      %v2219 = vadd.f32 %v1855, %v2036
      %v2220 = vadd.f32 %v1856, %v2036
      %v2221 = vadd.f32 %v1857, %v2036
      %v2222 = vadd.f32 %v1858, %v2036
      %v2223 = vadd.f32 %v1859, %v2036
      %v2224 = vadd.f32 %v1860, %v2041
      %v2225 = vadd.f32 %v1861, %v2041
      %v2226 = vadd.f32 %v1862, %v2041
      %v2227 = vadd.f32 %v1863, %v2041
      %v2228 = vadd.f32 %v1864, %v2041
      %v2229 = vadd.f32 %v1865, %v2041
      %v2230 = vadd.f32 %v1866, %v2041
      %v2231 = vadd.f32 %v1867, %v2046
      %v2232 = vadd.f32 %v1868, %v2046
      %v2233 = vadd.f32 %v1869, %v2046
      %v2234 = vadd.f32 %v1870, %v2046
      %v2235 = vadd.f32 %v1871, %v2046
      %v2236 = vadd.f32 %v1872, %v2046
      %v2237 = vadd.f32 %v1873, %v2046
      %v2238 = vadd.f32 %v1874, %v2051
      %v2239 = vadd.f32 %v1875, %v2051
      %v2240 = vadd.f32 %v1876, %v2051
      %v2241 = vadd.f32 %v1877, %v2051
      %v2242 = vadd.f32 %v1878, %v2051
      %v2243 = vadd.f32 %v1879, %v2051
      %v2244 = vadd.f32 %v1880, %v2051
      %v2245 = vadd.f32 %v1881, %v2056
      %v2246 = vadd.f32 %v1882, %v2056
      %v2247 = vadd.f32 %v1883, %v2056
      %v2248 = vadd.f32 %v1884, %v2056
      %v2249 = vadd.f32 %v1885, %v2056
      %v2250 = vadd.f32 %v1886, %v2056
      %v2251 = vadd.f32 %v1887, %v2056
      %v2252 = vadd.f32 %v1888, %v2061
      %v2253 = vadd.f32 %v1889, %v2061
      %v2254 = vadd.f32 %v1890, %v2061
      %v2255 = vadd.f32 %v1891, %v2061
      %v2256 = vadd.f32 %v1892, %v2061
      %v2257 = vadd.f32 %v1893, %v2061
      %v2258 = vadd.f32 %v1894, %v2061
      %v2259 = vmax.f32 %v2063, 0.0
      %v2260 = vmax.f32 %v2064, 0.0
      %v2261 = vmax.f32 %v2065, 0.0
      %v2262 = vmax.f32 %v2066, 0.0
      %v2263 = vmax.f32 %v2067, 0.0
      %v2264 = vmax.f32 %v2068, 0.0
      %v2265 = vmax.f32 %v2069, 0.0
      %v2266 = vmax.f32 %v2070, 0.0
      %v2267 = vmax.f32 %v2071, 0.0
      %v2268 = vmax.f32 %v2072, 0.0
      %v2269 = vmax.f32 %v2073, 0.0
      %v2270 = vmax.f32 %v2074, 0.0
      %v2271 = vmax.f32 %v2075, 0.0
      %v2272 = vmax.f32 %v2076, 0.0
      %v2273 = vmax.f32 %v2077, 0.0
      %v2274 = vmax.f32 %v2078, 0.0
      %v2275 = vmax.f32 %v2079, 0.0
      %v2276 = vmax.f32 %v2080, 0.0
      %v2277 = vmax.f32 %v2081, 0.0
      %v2278 = vmax.f32 %v2082, 0.0
      %v2279 = vmax.f32 %v2083, 0.0
      %v2280 = vmax.f32 %v2084, 0.0
      %v2281 = vmax.f32 %v2085, 0.0
      %v2282 = vmax.f32 %v2086, 0.0
      %v2283 = vmax.f32 %v2087, 0.0
      %v2284 = vmax.f32 %v2088, 0.0
      %v2285 = vmax.f32 %v2089, 0.0
      %v2286 = vmax.f32 %v2090, 0.0
      %v2287 = vmax.f32 %v2091, 0.0
      %v2288 = vmax.f32 %v2092, 0.0
      %v2289 = vmax.f32 %v2093, 0.0
      %v2290 = vmax.f32 %v2094, 0.0
      %v2291 = vmax.f32 %v2095, 0.0
      %v2292 = vmax.f32 %v2096, 0.0
      %v2293 = vmax.f32 %v2097, 0.0
      %v2294 = vmax.f32 %v2098, 0.0
      %v2295 = vmax.f32 %v2099, 0.0
      %v2296 = vmax.f32 %v2100, 0.0
      %v2297 = vmax.f32 %v2101, 0.0
      %v2298 = vmax.f32 %v2102, 0.0
      %v2299 = vmax.f32 %v2103, 0.0
      %v2300 = vmax.f32 %v2104, 0.0
      %v2301 = vmax.f32 %v2105, 0.0
      %v2302 = vmax.f32 %v2106, 0.0
      %v2303 = vmax.f32 %v2107, 0.0
      %v2304 = vmax.f32 %v2108, 0.0
      %v2305 = vmax.f32 %v2109, 0.0
      %v2306 = vmax.f32 %v2110, 0.0
      %v2307 = vmax.f32 %v2111, 0.0
      %v2308 = vmax.f32 %v2112, 0.0
      %v2309 = vmax.f32 %v2113, 0.0
      %v2310 = vmax.f32 %v2114, 0.0
      %v2311 = vmax.f32 %v2115, 0.0
      %v2312 = vmax.f32 %v2116, 0.0
      %v2313 = vmax.f32 %v2117, 0.0
      %v2314 = vmax.f32 %v2118, 0.0
      %v2315 = vmax.f32 %v2119, 0.0
      %v2316 = vmax.f32 %v2120, 0.0
      %v2317 = vmax.f32 %v2121, 0.0
      %v2318 = vmax.f32 %v2122, 0.0
      %v2319 = vmax.f32 %v2123, 0.0
      %v2320 = vmax.f32 %v2124, 0.0
      %v2321 = vmax.f32 %v2125, 0.0
      %v2322 = vmax.f32 %v2126, 0.0
      %v2323 = vmax.f32 %v2127, 0.0
      %v2324 = vmax.f32 %v2128, 0.0
      %v2325 = vmax.f32 %v2129, 0.0
      %v2326 = vmax.f32 %v2130, 0.0
      %v2327 = vmax.f32 %v2131, 0.0
      %v2328 = vmax.f32 %v2132, 0.0
      %v2329 = vmax.f32 %v2133, 0.0
      %v2330 = vmax.f32 %v2134, 0.0
      %v2331 = vmax.f32 %v2135, 0.0
      %v2332 = vmax.f32 %v2136, 0.0
      %v2333 = vmax.f32 %v2137, 0.0
      %v2334 = vmax.f32 %v2138, 0.0
      %v2335 = vmax.f32 %v2139, 0.0
      %v2336 = vmax.f32 %v2140, 0.0
      %v2337 = vmax.f32 %v2141, 0.0
      %v2338 = vmax.f32 %v2142, 0.0
      %v2339 = vmax.f32 %v2143, 0.0
      %v2340 = vmax.f32 %v2144, 0.0
      %v2341 = vmax.f32 %v2145, 0.0
      %v2342 = vmax.f32 %v2146, 0.0
      %v2343 = vmax.f32 %v2147, 0.0
      %v2344 = vmax.f32 %v2148, 0.0
      %v2345 = vmax.f32 %v2149, 0.0
      %v2346 = vmax.f32 %v2150, 0.0
      %v2347 = vmax.f32 %v2151, 0.0
      %v2348 = vmax.f32 %v2152, 0.0
      %v2349 = vmax.f32 %v2153, 0.0
      %v2350 = vmax.f32 %v2154, 0.0
      %v2351 = vmax.f32 %v2155, 0.0
      %v2352 = vmax.f32 %v2156, 0.0
      %v2353 = vmax.f32 %v2157, 0.0
      %v2354 = vmax.f32 %v2158, 0.0
      %v2355 = vmax.f32 %v2159, 0.0
      %v2356 = vmax.f32 %v2160, 0.0
      %v2357 = vmax.f32 %v2161, 0.0
      %v2358 = vmax.f32 %v2162, 0.0
      %v2359 = vmax.f32 %v2163, 0.0
      %v2360 = vmax.f32 %v2164, 0.0
      %v2361 = vmax.f32 %v2165, 0.0
      %v2362 = vmax.f32 %v2166, 0.0
      %v2363 = vmax.f32 %v2167, 0.0
      %v2364 = vmax.f32 %v2168, 0.0
      %v2365 = vmax.f32 %v2169, 0.0
      %v2366 = vmax.f32 %v2170, 0.0
      %v2367 = vmax.f32 %v2171, 0.0
      %v2368 = vmax.f32 %v2172, 0.0
      %v2369 = vmax.f32 %v2173, 0.0
      %v2370 = vmax.f32 %v2174, 0.0
      %v2371 = vmax.f32 %v2175, 0.0
      %v2372 = vmax.f32 %v2176, 0.0
      %v2373 = vmax.f32 %v2177, 0.0
      %v2374 = vmax.f32 %v2178, 0.0
      %v2375 = vmax.f32 %v2179, 0.0
      %v2376 = vmax.f32 %v2180, 0.0
      %v2377 = vmax.f32 %v2181, 0.0
      %v2378 = vmax.f32 %v2182, 0.0
      %v2379 = vmax.f32 %v2183, 0.0
      %v2380 = vmax.f32 %v2184, 0.0
      %v2381 = vmax.f32 %v2185, 0.0
      %v2382 = vmax.f32 %v2186, 0.0
      %v2383 = vmax.f32 %v2187, 0.0
      %v2384 = vmax.f32 %v2188, 0.0
      %v2385 = vmax.f32 %v2189, 0.0
      %v2386 = vmax.f32 %v2190, 0.0
      %v2387 = vmax.f32 %v2191, 0.0
      %v2388 = vmax.f32 %v2192, 0.0
      %v2389 = vmax.f32 %v2193, 0.0
      %v2390 = vmax.f32 %v2194, 0.0
      %v2391 = vmax.f32 %v2195, 0.0
      %v2392 = vmax.f32 %v2196, 0.0
      %v2393 = vmax.f32 %v2197, 0.0
      %v2394 = vmax.f32 %v2198, 0.0
      %v2395 = vmax.f32 %v2199, 0.0
      %v2396 = vmax.f32 %v2200, 0.0
      %v2397 = vmax.f32 %v2201, 0.0
      %v2398 = vmax.f32 %v2202, 0.0
      %v2399 = vmax.f32 %v2203, 0.0
      %v2400 = vmax.f32 %v2204, 0.0
      %v2401 = vmax.f32 %v2205, 0.0
      %v2402 = vmax.f32 %v2206, 0.0
      %v2403 = vmax.f32 %v2207, 0.0
      %v2404 = vmax.f32 %v2208, 0.0
      %v2405 = vmax.f32 %v2209, 0.0
      %v2406 = vmax.f32 %v2210, 0.0
      %v2407 = vmax.f32 %v2211, 0.0
      %v2408 = vmax.f32 %v2212, 0.0
      %v2409 = vmax.f32 %v2213, 0.0
      %v2410 = vmax.f32 %v2214, 0.0
      %v2411 = vmax.f32 %v2215, 0.0
      %v2412 = vmax.f32 %v2216, 0.0
      %v2413 = vmax.f32 %v2217, 0.0
      %v2414 = vmax.f32 %v2218, 0.0
      %v2415 = vmax.f32 %v2219, 0.0
      %v2416 = vmax.f32 %v2220, 0.0
      %v2417 = vmax.f32 %v2221, 0.0
      %v2418 = vmax.f32 %v2222, 0.0
      %v2419 = vmax.f32 %v2223, 0.0
      %v2420 = vmax.f32 %v2224, 0.0
      %v2421 = vmax.f32 %v2225, 0.0
      %v2422 = vmax.f32 %v2226, 0.0
      %v2423 = vmax.f32 %v2227, 0.0
      %v2424 = vmax.f32 %v2228, 0.0
      %v2425 = vmax.f32 %v2229, 0.0
      %v2426 = vmax.f32 %v2230, 0.0
      %v2427 = vmax.f32 %v2231, 0.0
      %v2428 = vmax.f32 %v2232, 0.0
      %v2429 = vmax.f32 %v2233, 0.0
      %v2430 = vmax.f32 %v2234, 0.0
      %v2431 = vmax.f32 %v2235, 0.0
      %v2432 = vmax.f32 %v2236, 0.0
      %v2433 = vmax.f32 %v2237, 0.0
      %v2434 = vmax.f32 %v2238, 0.0
      %v2435 = vmax.f32 %v2239, 0.0
      %v2436 = vmax.f32 %v2240, 0.0
      %v2437 = vmax.f32 %v2241, 0.0
      %v2438 = vmax.f32 %v2242, 0.0
      %v2439 = vmax.f32 %v2243, 0.0
      %v2440 = vmax.f32 %v2244, 0.0
      %v2441 = vmax.f32 %v2245, 0.0
      %v2442 = vmax.f32 %v2246, 0.0
      %v2443 = vmax.f32 %v2247, 0.0
      %v2444 = vmax.f32 %v2248, 0.0
      %v2445 = vmax.f32 %v2249, 0.0
      %v2446 = vmax.f32 %v2250, 0.0
      %v2447 = vmax.f32 %v2251, 0.0
      %v2448 = vmax.f32 %v2252, 0.0
      %v2449 = vmax.f32 %v2253, 0.0
      %v2450 = vmax.f32 %v2254, 0.0
      %v2451 = vmax.f32 %v2255, 0.0
      %v2452 = vmax.f32 %v2256, 0.0
      %v2453 = vmax.f32 %v2257, 0.0
      %v2454 = vmax.f32 %v2258, 0.0
      %v2455 = vld [vmem:[%s291] sm:$0xff]
      %v2456 = vld [vmem:[%s291 + $0x8] sm:$0xff]
      %v2457 = vld [vmem:[%s291 + $0x10] sm:$0xff]
      %v2458 = vld [vmem:[%s291 + $0x18] sm:$0xff]
      %v2459 = vld [vmem:[%s291 + $0x20] sm:$0xff]
      %v2460 = vld [vmem:[%s291 + $0x28] sm:$0xff]
      %v2461 = vld [vmem:[%s291 + $0x30] sm:$0xff]
      %v2462 = vld [vmem:[%s291 + $0x38] sm:$0xff]
      %v2463 = vld [vmem:[%s291 + $0x40] sm:$0xff]
      %v2464 = vld [vmem:[%s291 + $0x48] sm:$0xff]
      %v2465 = vld [vmem:[%s291 + $0x50] sm:$0xff]
      %v2466 = vld [vmem:[%s291 + $0x58] sm:$0xff]
      %v2467 = vld [vmem:[%s291 + $0x60] sm:$0xff]
      %v2468 = vld [vmem:[%s291 + $0x68] sm:$0xff]
      %v2469 = vld [vmem:[%s291 + $0x70] sm:$0xff]
      %v2470 = vld [vmem:[%s291 + $0x78] sm:$0xff]
      %v2471 = vld [vmem:[%s291 + $0x80] sm:$0xff]
      %v2472 = vld [vmem:[%s291 + $0x88] sm:$0xff]
      %v2473 = vld [vmem:[%s291 + $0x90] sm:$0xff]
      %v2474 = vld [vmem:[%s291 + $0x98] sm:$0xff]
      %v2475 = vld [vmem:[%s291 + $0xa0] sm:$0xff]
      %v2476 = vld [vmem:[%s291 + $0xa8] sm:$0xff]
      %v2477 = vld [vmem:[%s291 + $0xb0] sm:$0xff]
      %v2478 = vld [vmem:[%s291 + $0xb8] sm:$0xff]
      %v2479 = vld [vmem:[%s291 + $0xc0] sm:$0xff]
      %v2480 = vld [vmem:[%s291 + $0xc8] sm:$0xff]
      %v2481 = vld [vmem:[%s291 + $0xd0] sm:$0xff]
      %v2482 = vld [vmem:[%s291 + $0xd8] sm:$0xff]
      %v2483 = vld [vmem:[%s291 + $0xe0] sm:$0xff]
      %v2484 = vld [vmem:[%s291 + $0xe8] sm:$0xff]
      %v2485 = vld [vmem:[%s291 + $0xf0] sm:$0xff]
      %v2486 = vld [vmem:[%s291 + $0xf8] sm:$0xff]
      %v2487 = vld [vmem:[%s291 + $0x100] sm:$0xff]
      %v2488 = vld [vmem:[%s291 + $0x108] sm:$0xff]
      %v2489 = vld [vmem:[%s291 + $0x110] sm:$0xff]
      %v2490 = vld [vmem:[%s291 + $0x118] sm:$0xff]
      %v2491 = vld [vmem:[%s291 + $0x120] sm:$0xff]
      %v2492 = vld [vmem:[%s291 + $0x128] sm:$0xff]
      %v2493 = vld [vmem:[%s291 + $0x130] sm:$0xff]
      %v2494 = vld [vmem:[%s291 + $0x138] sm:$0xff]
      %v2495 = vld [vmem:[%s291 + $0x140] sm:$0xff]
      %v2496 = vld [vmem:[%s291 + $0x148] sm:$0xff]
      %v2497 = vld [vmem:[%s291 + $0x150] sm:$0xff]
      %v2498 = vld [vmem:[%s291 + $0x158] sm:$0xff]
      %v2499 = vld [vmem:[%s291 + $0x160] sm:$0xff]
      %v2500 = vld [vmem:[%s291 + $0x168] sm:$0xff]
      %v2501 = vld [vmem:[%s291 + $0x170] sm:$0xff]
      %v2502 = vld [vmem:[%s291 + $0x178] sm:$0xff]
      %v2503 = vld [vmem:[%s291 + $0x180] sm:$0xff]
      %v2504 = vld [vmem:[%s291 + $0x188] sm:$0xff]
      %v2505 = vld [vmem:[%s291 + $0x190] sm:$0xff]
      %v2506 = vld [vmem:[%s291 + $0x198] sm:$0xff]
      %v2507 = vld [vmem:[%s291 + $0x1a0] sm:$0xff]
      %v2508 = vld [vmem:[%s291 + $0x1a8] sm:$0xff]
      %v2509 = vld [vmem:[%s291 + $0x1b0] sm:$0xff]
      %v2510 = vld [vmem:[%s291 + $0x1b8] sm:$0xff]
      %2511 = vxpose.xlu0.b32.start [1/16] %v2455, 128
      %2512 = vxpose.xlu0.b32.cont [2/16] %v2457, 128
      %2513 = vxpose.xlu0.b32.cont [3/16] %v2459, 128
      %2514 = vxpose.xlu0.b32.cont [4/16] %v2461, 128
      %2515 = vxpose.xlu0.b32.cont [5/16] %v2463, 128
      %2516 = vxpose.xlu0.b32.cont [6/16] %v2465, 128
      %2517 = vxpose.xlu0.b32.cont [7/16] %v2467, 128
      %2518 = vxpose.xlu0.b32.cont [8/16] %v2469, 128
      %2519 = vxpose.xlu0.b32.cont [9/16] %v2471, 128
      %2520 = vxpose.xlu0.b32.cont [10/16] %v2473, 128
      %2521 = vxpose.xlu0.b32.cont [11/16] %v2475, 128
      %2522 = vxpose.xlu0.b32.cont [12/16] %v2477, 128
      %2523 = vxpose.xlu0.b32.cont [13/16] %v2479, 128
      %2524 = vxpose.xlu0.b32.cont [14/16] %v2481, 128
      %2525 = vxpose.xlu0.b32.cont [15/16] %v2483, 128
      %2526 = vxpose.xlu0.b32.end [16/16] %v2485, 128
      %v2527 = vpop.trf.xlu0
      %v2528 = vpop.trf.xlu0
      %v2529 = vpop.trf.xlu0
      %v2530 = vpop.trf.xlu0
      %v2531 = vpop.trf.xlu0
      %v2532 = vpop.trf.xlu0
      %v2533 = vpop.trf.xlu0
      %v2534 = vpop.trf.xlu0
      %v2535 = vpop.trf.xlu0
      %v2536 = vpop.trf.xlu0
      %v2537 = vpop.trf.xlu0
      %v2538 = vpop.trf.xlu0
      %v2539 = vpop.trf.xlu0
      %v2540 = vpop.trf.xlu0
      %v2541 = vpop.trf.xlu0
      %v2542 = vpop.trf.xlu0
      %2543 = vxpose.xlu0.b32.start [1/16] %v2456, 128
      %2544 = vxpose.xlu0.b32.cont [2/16] %v2458, 128
      %2545 = vxpose.xlu0.b32.cont [3/16] %v2460, 128
      %2546 = vxpose.xlu0.b32.cont [4/16] %v2462, 128
      %2547 = vxpose.xlu0.b32.cont [5/16] %v2464, 128
      %2548 = vxpose.xlu0.b32.cont [6/16] %v2466, 128
      %2549 = vxpose.xlu0.b32.cont [7/16] %v2468, 128
      %2550 = vxpose.xlu0.b32.cont [8/16] %v2470, 128
      %2551 = vxpose.xlu0.b32.cont [9/16] %v2472, 128
      %2552 = vxpose.xlu0.b32.cont [10/16] %v2474, 128
      %2553 = vxpose.xlu0.b32.cont [11/16] %v2476, 128
      %2554 = vxpose.xlu0.b32.cont [12/16] %v2478, 128
      %2555 = vxpose.xlu0.b32.cont [13/16] %v2480, 128
      %2556 = vxpose.xlu0.b32.cont [14/16] %v2482, 128
      %2557 = vxpose.xlu0.b32.cont [15/16] %v2484, 128
      %2558 = vxpose.xlu0.b32.end [16/16] %v2486, 128
      %v2559 = vpop.trf.xlu0
      %v2560 = vpop.trf.xlu0
      %v2561 = vpop.trf.xlu0
      %v2562 = vpop.trf.xlu0
      %v2563 = vpop.trf.xlu0
      %v2564 = vpop.trf.xlu0
      %v2565 = vpop.trf.xlu0
      %v2566 = vpop.trf.xlu0
      %v2567 = vpop.trf.xlu0
      %v2568 = vpop.trf.xlu0
      %v2569 = vpop.trf.xlu0
      %v2570 = vpop.trf.xlu0
      %v2571 = vpop.trf.xlu0
      %v2572 = vpop.trf.xlu0
      %v2573 = vpop.trf.xlu0
      %v2574 = vpop.trf.xlu0
      %2575 = vxpose.xlu0.b32.start [1/16] %v2487, 128
      %2576 = vxpose.xlu0.b32.cont [2/16] %v2489, 128
      %2577 = vxpose.xlu0.b32.cont [3/16] %v2491, 128
      %2578 = vxpose.xlu0.b32.cont [4/16] %v2493, 128
      %2579 = vxpose.xlu0.b32.cont [5/16] %v2495, 128
      %2580 = vxpose.xlu0.b32.cont [6/16] %v2497, 128
      %2581 = vxpose.xlu0.b32.cont [7/16] %v2499, 128
      %2582 = vxpose.xlu0.b32.cont [8/16] %v2501, 128
      %2583 = vxpose.xlu0.b32.cont [9/16] %v2503, 128
      %2584 = vxpose.xlu0.b32.cont [10/16] %v2505, 128
      %2585 = vxpose.xlu0.b32.cont [11/16] %v2507, 128
      %2586 = vxpose.xlu0.b32.cont [12/16] %v2509, 128
      %2587 = vxpose.xlu0.b32.cont [13/16] 0.0, 128
      %2588 = vxpose.xlu0.b32.cont [14/16] 0.0, 128
      %2589 = vxpose.xlu0.b32.cont [15/16] 0.0, 128
      %2590 = vxpose.xlu0.b32.end [16/16] 0.0, 128
      %v2591 = vpop.trf.xlu0
      %v2592 = vpop.trf.xlu0
      %v2593 = vpop.trf.xlu0
      %v2594 = vpop.trf.xlu0
      %v2595 = vpop.trf.xlu0
      %v2596 = vpop.trf.xlu0
      %v2597 = vpop.trf.xlu0
      %v2598 = vpop.trf.xlu0
      %v2599 = vpop.trf.xlu0
      %v2600 = vpop.trf.xlu0
      %v2601 = vpop.trf.xlu0
      %v2602 = vpop.trf.xlu0
      %v2603 = vpop.trf.xlu0
      %v2604 = vpop.trf.xlu0
      %v2605 = vpop.trf.xlu0
      %v2606 = vpop.trf.xlu0
      %2607 = vxpose.xlu0.b32.start [1/16] %v2488, 128
      %2608 = vxpose.xlu0.b32.cont [2/16] %v2490, 128
      %2609 = vxpose.xlu0.b32.cont [3/16] %v2492, 128
      %2610 = vxpose.xlu0.b32.cont [4/16] %v2494, 128
      %2611 = vxpose.xlu0.b32.cont [5/16] %v2496, 128
      %2612 = vxpose.xlu0.b32.cont [6/16] %v2498, 128
      %2613 = vxpose.xlu0.b32.cont [7/16] %v2500, 128
      %2614 = vxpose.xlu0.b32.cont [8/16] %v2502, 128
      %2615 = vxpose.xlu0.b32.cont [9/16] %v2504, 128
      %2616 = vxpose.xlu0.b32.cont [10/16] %v2506, 128
      %2617 = vxpose.xlu0.b32.cont [11/16] %v2508, 128
      %2618 = vxpose.xlu0.b32.cont [12/16] %v2510, 128
      %2619 = vxpose.xlu0.b32.cont [13/16] 0.0, 128
      %2620 = vxpose.xlu0.b32.cont [14/16] 0.0, 128
      %2621 = vxpose.xlu0.b32.cont [15/16] 0.0, 128
      %2622 = vxpose.xlu0.b32.end [16/16] 0.0, 128
      %v2623 = vpop.trf.xlu0
      %v2624 = vpop.trf.xlu0
      %v2625 = vpop.trf.xlu0
      %v2626 = vpop.trf.xlu0
      %v2627 = vpop.trf.xlu0
      %v2628 = vpop.trf.xlu0
      %v2629 = vpop.trf.xlu0
      %v2630 = vpop.trf.xlu0
      %v2631 = vpop.trf.xlu0
      %v2632 = vpop.trf.xlu0
      %v2633 = vpop.trf.xlu0
      %v2634 = vpop.trf.xlu0
      %v2635 = vpop.trf.xlu0
      %v2636 = vpop.trf.xlu0
      %v2637 = vpop.trf.xlu0
      %v2638 = vpop.trf.xlu0
      %vm2639 = vcmask 785408
      %v2641 = vsel %vm2639, %v2591, 0
      %v2644 = vsel %vm2639, %v2592, 0
      %v2647 = vsel %vm2639, %v2593, 0
      %v2650 = vsel %vm2639, %v2594, 0
      %v2653 = vsel %vm2639, %v2595, 0
      %v2656 = vsel %vm2639, %v2596, 0
      %v2659 = vsel %vm2639, %v2597, 0
      %v2662 = vsel %vm2639, %v2598, 0
      %v2665 = vsel %vm2639, %v2599, 0
      %v2668 = vsel %vm2639, %v2600, 0
      %v2671 = vsel %vm2639, %v2601, 0
      %v2674 = vsel %vm2639, %v2602, 0
      %v2677 = vsel %vm2639, %v2603, 0
      %v2680 = vsel %vm2639, %v2604, 0
      %v2683 = vsel %vm2639, %v2605, 0
      %v2686 = vsel %vm2639, %v2606, 0
      %v2689 = vsel %vm2639, %v2623, 0
      %v2692 = vsel %vm2639, %v2624, 0
      %v2695 = vsel %vm2639, %v2625, 0
      %v2698 = vsel %vm2639, %v2626, 0
      %v2701 = vsel %vm2639, %v2627, 0
      %v2704 = vsel %vm2639, %v2628, 0
      %v2707 = vsel %vm2639, %v2629, 0
      %v2710 = vsel %vm2639, %v2630, 0
      %2712 = vmatprep.subr.mxu0 %v2365
      %2713 = vmatpush1.msra.mxu0 %v2364
      %2714 = vmatprep.subr.mxu0 %v2358
      %2715 = vmatpush1.msra.mxu0 %v2357
      %2716 = vmatprep.subr.mxu0 %v2351
      %2717 = vmatpush1.msra.mxu0 %v2350
      %2718 = vmatprep.subr.mxu0 %v2344
      %2719 = vmatpush1.msra.mxu0 %v2343
      %2720 = vmatprep.subr.mxu0 %v2337
      %2721 = vmatpush1.msra.mxu0 %v2336
      %2722 = vmatprep.subr.mxu0 %v2330
      %2723 = vmatpush1.msra.mxu0 %v2329
      %2724 = vmatprep.subr.mxu0 %v2323
      %2725 = vmatpush1.msra.mxu0 %v2322
      %2726 = vmatprep.subr.mxu0 %v2316
      %2727 = vmatpush1.msra.mxu0 %v2315
      %2728 = vmatprep.subr.mxu0 %v2309
      %2729 = vmatpush1.msra.mxu0 %v2308
      %2730 = vmatprep.subr.mxu0 %v2302
      %2731 = vmatpush1.msra.mxu0 %v2301
      %2732 = vmatprep.subr.mxu0 %v2295
      %2733 = vmatpush1.msra.mxu0 %v2294
      %2734 = vmatprep.subr.mxu0 %v2288
      %2735 = vmatpush1.msra.mxu0 %v2287
      %2736 = vmatprep.subr.mxu0 %v2281
      %2737 = vmatpush1.msra.mxu0 %v2280
      %2738 = vmatprep.subr.mxu0 %v2274
      %2739 = vmatpush1.msra.mxu0 %v2273
      %2740 = vmatprep.subr.mxu0 %v2267
      %2741 = vmatpush1.msra.mxu0 %v2266
      %2742 = vmatprep.subr.mxu0 %v2260
      %2743 = vmatpush1.msra.mxu0 %v2259
      %2744 = vmatprep.subr.mxu0 0.0
      %2745 = vmatpush2.msra.mxu0 0.0
      %2746 = vmatprep.subr.mxu0 0.0
      %2747 = vmatpush2.msra.mxu0 0.0
      %2748 = vmatprep.subr.mxu0 0.0
      %2749 = vmatpush2.msra.mxu0 0.0
      %2750 = vmatprep.subr.mxu0 0.0
      %2751 = vmatpush2.msra.mxu0 0.0
      %2752 = vmatprep.subr.mxu0 %v2449
      %2753 = vmatpush2.msra.mxu0 %v2448
      %2754 = vmatprep.subr.mxu0 %v2442
      %2755 = vmatpush2.msra.mxu0 %v2441
      %2756 = vmatprep.subr.mxu0 %v2435
      %2757 = vmatpush2.msra.mxu0 %v2434
      %2758 = vmatprep.subr.mxu0 %v2428
      %2759 = vmatpush2.msra.mxu0 %v2427
      %2760 = vmatprep.subr.mxu0 %v2421
      %2761 = vmatpush2.msra.mxu0 %v2420
      %2762 = vmatprep.subr.mxu0 %v2414
      %2763 = vmatpush2.msra.mxu0 %v2413
      %2764 = vmatprep.subr.mxu0 %v2407
      %2765 = vmatpush2.msra.mxu0 %v2406
      %2766 = vmatprep.subr.mxu0 %v2400
      %2767 = vmatpush2.msra.mxu0 %v2399
      %2768 = vmatprep.subr.mxu0 %v2393
      %2769 = vmatpush2.msra.mxu0 %v2392
      %2770 = vmatprep.subr.mxu0 %v2386
      %2771 = vmatpush2.msra.mxu0 %v2385
      %2772 = vmatprep.subr.mxu0 %v2379
      %2773 = vmatpush2.msra.mxu0 %v2378
      %2774 = vmatprep.subr.mxu0 %v2372
      %2775 = vmatpush2.msra.mxu0 %v2371
      %2776 = vmatprep.mubr.f32.mxu0 %v2641
      %2777 = vmatmul.mubr.f32.gmra.mxu0 %v2527
      %v2778 = vpop.f32.mrf.mxu0
      %v2779 = vadd.f32 0.0, %v2778
      %v2780 = vpop.f32.mrf.mxu0
      %v2781 = vadd.f32 0.0, %v2780
      %2782 = vmatprep.mubr.f32.mxu0 %v2644
      %2783 = vmatmul.mubr.f32.gmra.mxu0 %v2528
      %v2784 = vpop.f32.mrf.mxu0
      %v2785 = vadd.f32 0.0, %v2784
      %v2786 = vpop.f32.mrf.mxu0
      %v2787 = vadd.f32 0.0, %v2786
      %2788 = vmatprep.mubr.f32.mxu0 %v2647
      %2789 = vmatmul.mubr.f32.gmra.mxu0 %v2529
      %v2790 = vpop.f32.mrf.mxu0
      %v2791 = vadd.f32 0.0, %v2790
      %v2792 = vpop.f32.mrf.mxu0
      %v2793 = vadd.f32 0.0, %v2792
      %2794 = vmatprep.mubr.f32.mxu0 %v2650
      %2795 = vmatmul.mubr.f32.gmra.mxu0 %v2530
      %v2796 = vpop.f32.mrf.mxu0
      %v2797 = vadd.f32 0.0, %v2796
      %v2798 = vpop.f32.mrf.mxu0
      %v2799 = vadd.f32 0.0, %v2798
      %2800 = vmatprep.mubr.f32.mxu0 %v2653
      %2801 = vmatmul.mubr.f32.gmra.mxu0 %v2531
      %v2802 = vpop.f32.mrf.mxu0
      %v2803 = vadd.f32 0.0, %v2802
      %v2804 = vpop.f32.mrf.mxu0
      %v2805 = vadd.f32 0.0, %v2804
      %2806 = vmatprep.mubr.f32.mxu0 %v2656
      %2807 = vmatmul.mubr.f32.gmra.mxu0 %v2532
      %v2808 = vpop.f32.mrf.mxu0
      %v2809 = vadd.f32 0.0, %v2808
      %v2810 = vpop.f32.mrf.mxu0
      %v2811 = vadd.f32 0.0, %v2810
      %2812 = vmatprep.mubr.f32.mxu0 %v2659
      %2813 = vmatmul.mubr.f32.gmra.mxu0 %v2533
      %v2814 = vpop.f32.mrf.mxu0
      %v2815 = vadd.f32 0.0, %v2814
      %v2816 = vpop.f32.mrf.mxu0
      %v2817 = vadd.f32 0.0, %v2816
      %2818 = vmatprep.mubr.f32.mxu0 %v2662
      %2819 = vmatmul.mubr.f32.gmra.mxu0 %v2534
      %v2820 = vpop.f32.mrf.mxu0
      %v2821 = vadd.f32 0.0, %v2820
      %v2822 = vpop.f32.mrf.mxu0
      %v2823 = vadd.f32 0.0, %v2822
      %2824 = vmatprep.mubr.f32.mxu0 %v2665
      %2825 = vmatmul.mubr.f32.gmra.mxu0 %v2535
      %v2826 = vpop.f32.mrf.mxu0
      %v2827 = vadd.f32 0.0, %v2826
      %v2828 = vpop.f32.mrf.mxu0
      %v2829 = vadd.f32 0.0, %v2828
      %2830 = vmatprep.mubr.f32.mxu0 %v2668
      %2831 = vmatmul.mubr.f32.gmra.mxu0 %v2536
      %v2832 = vpop.f32.mrf.mxu0
      %v2833 = vadd.f32 0.0, %v2832
      %v2834 = vpop.f32.mrf.mxu0
      %v2835 = vadd.f32 0.0, %v2834
      %2836 = vmatprep.mubr.f32.mxu0 %v2671
      %2837 = vmatmul.mubr.f32.gmra.mxu0 %v2537
      %v2838 = vpop.f32.mrf.mxu0
      %v2839 = vadd.f32 0.0, %v2838
      %v2840 = vpop.f32.mrf.mxu0
      %v2841 = vadd.f32 0.0, %v2840
      %2842 = vmatprep.mubr.f32.mxu0 %v2674
      %2843 = vmatmul.mubr.f32.gmra.mxu0 %v2538
      %v2844 = vpop.f32.mrf.mxu0
      %v2845 = vadd.f32 0.0, %v2844
      %v2846 = vpop.f32.mrf.mxu0
      %v2847 = vadd.f32 0.0, %v2846
      %2848 = vmatprep.mubr.f32.mxu0 %v2677
      %2849 = vmatmul.mubr.f32.gmra.mxu0 %v2539
      %v2850 = vpop.f32.mrf.mxu0
      %v2851 = vadd.f32 0.0, %v2850
      %v2852 = vpop.f32.mrf.mxu0
      %v2853 = vadd.f32 0.0, %v2852
      %2854 = vmatprep.mubr.f32.mxu0 %v2680
      %2855 = vmatmul.mubr.f32.gmra.mxu0 %v2540
      %v2856 = vpop.f32.mrf.mxu0
      %v2857 = vadd.f32 0.0, %v2856
      %v2858 = vpop.f32.mrf.mxu0
      %v2859 = vadd.f32 0.0, %v2858
      %2860 = vmatprep.mubr.f32.mxu0 %v2683
      %2861 = vmatmul.mubr.f32.gmra.mxu0 %v2541
      %v2862 = vpop.f32.mrf.mxu0
      %v2863 = vadd.f32 0.0, %v2862
      %v2864 = vpop.f32.mrf.mxu0
      %v2865 = vadd.f32 0.0, %v2864
      %2866 = vmatprep.mubr.f32.mxu0 %v2686
      %2867 = vmatmul.mubr.f32.gmra.mxu0 %v2542
      %v2868 = vpop.f32.mrf.mxu0
      %v2869 = vadd.f32 0.0, %v2868
      %v2870 = vpop.f32.mrf.mxu0
      %v2871 = vadd.f32 0.0, %v2870
      %2872 = vmatprep.mubr.f32.mxu0 %v2689
      %2873 = vmatmul.mubr.f32.gmra.mxu0 %v2559
      %v2874 = vpop.f32.mrf.mxu0
      %v2875 = vadd.f32 0.0, %v2874
      %v2876 = vpop.f32.mrf.mxu0
      %v2877 = vadd.f32 0.0, %v2876
      %2878 = vmatprep.mubr.f32.mxu0 %v2692
      %2879 = vmatmul.mubr.f32.gmra.mxu0 %v2560
      %v2880 = vpop.f32.mrf.mxu0
      %v2881 = vadd.f32 0.0, %v2880
      %v2882 = vpop.f32.mrf.mxu0
      %v2883 = vadd.f32 0.0, %v2882
      %2884 = vmatprep.mubr.f32.mxu0 %v2695
      %2885 = vmatmul.mubr.f32.gmra.mxu0 %v2561
      %v2886 = vpop.f32.mrf.mxu0
      %v2887 = vadd.f32 0.0, %v2886
      %v2888 = vpop.f32.mrf.mxu0
      %v2889 = vadd.f32 0.0, %v2888
      %2890 = vmatprep.mubr.f32.mxu0 %v2698
      %2891 = vmatmul.mubr.f32.gmra.mxu0 %v2562
      %v2892 = vpop.f32.mrf.mxu0
      %v2893 = vadd.f32 0.0, %v2892
      %v2894 = vpop.f32.mrf.mxu0
      %v2895 = vadd.f32 0.0, %v2894
      %2896 = vmatprep.mubr.f32.mxu0 %v2701
      %2897 = vmatmul.mubr.f32.gmra.mxu0 %v2563
      %v2898 = vpop.f32.mrf.mxu0
      %v2899 = vadd.f32 0.0, %v2898
      %v2900 = vpop.f32.mrf.mxu0
      %v2901 = vadd.f32 0.0, %v2900
      %2902 = vmatprep.mubr.f32.mxu0 %v2704
      %2903 = vmatmul.mubr.f32.gmra.mxu0 %v2564
      %v2904 = vpop.f32.mrf.mxu0
      %v2905 = vadd.f32 0.0, %v2904
      %v2906 = vpop.f32.mrf.mxu0
      %v2907 = vadd.f32 0.0, %v2906
      %2908 = vmatprep.mubr.f32.mxu0 %v2707
      %2909 = vmatmul.mubr.f32.gmra.mxu0 %v2565
      %v2910 = vpop.f32.mrf.mxu0
      %v2911 = vadd.f32 0.0, %v2910
      %v2912 = vpop.f32.mrf.mxu0
      %v2913 = vadd.f32 0.0, %v2912
      %2914 = vmatprep.mubr.f32.mxu0 %v2710
      %2915 = vmatmul.mubr.f32.gmra.mxu0 %v2566
      %v2916 = vpop.f32.mrf.mxu0
      %v2917 = vadd.f32 0.0, %v2916
      %v2918 = vpop.f32.mrf.mxu0
      %v2919 = vadd.f32 0.0, %v2918
      %2920 = vdwg.mxu0
      %2921 = vmatprep.subr.mxu0 %v2367
      %2922 = vmatpush1.msra.mxu0 %v2366
      %2923 = vmatprep.subr.mxu0 %v2360
      %2924 = vmatpush1.msra.mxu0 %v2359
      %2925 = vmatprep.subr.mxu0 %v2353
      %2926 = vmatpush1.msra.mxu0 %v2352
      %2927 = vmatprep.subr.mxu0 %v2346
      %2928 = vmatpush1.msra.mxu0 %v2345
      %2929 = vmatprep.subr.mxu0 %v2339
      %2930 = vmatpush1.msra.mxu0 %v2338
      %2931 = vmatprep.subr.mxu0 %v2332
      %2932 = vmatpush1.msra.mxu0 %v2331
      %2933 = vmatprep.subr.mxu0 %v2325
      %2934 = vmatpush1.msra.mxu0 %v2324
      %2935 = vmatprep.subr.mxu0 %v2318
      %2936 = vmatpush1.msra.mxu0 %v2317
      %2937 = vmatprep.subr.mxu0 %v2311
      %2938 = vmatpush1.msra.mxu0 %v2310
      %2939 = vmatprep.subr.mxu0 %v2304
      %2940 = vmatpush1.msra.mxu0 %v2303
      %2941 = vmatprep.subr.mxu0 %v2297
      %2942 = vmatpush1.msra.mxu0 %v2296
      %2943 = vmatprep.subr.mxu0 %v2290
      %2944 = vmatpush1.msra.mxu0 %v2289
      %2945 = vmatprep.subr.mxu0 %v2283
      %2946 = vmatpush1.msra.mxu0 %v2282
      %2947 = vmatprep.subr.mxu0 %v2276
      %2948 = vmatpush1.msra.mxu0 %v2275
      %2949 = vmatprep.subr.mxu0 %v2269
      %2950 = vmatpush1.msra.mxu0 %v2268
      %2951 = vmatprep.subr.mxu0 %v2262
      %2952 = vmatpush1.msra.mxu0 %v2261
      %2953 = vmatprep.subr.mxu0 0.0
      %2954 = vmatpush2.msra.mxu0 0.0
      %2955 = vmatprep.subr.mxu0 0.0
      %2956 = vmatpush2.msra.mxu0 0.0
      %2957 = vmatprep.subr.mxu0 0.0
      %2958 = vmatpush2.msra.mxu0 0.0
      %2959 = vmatprep.subr.mxu0 0.0
      %2960 = vmatpush2.msra.mxu0 0.0
      %2961 = vmatprep.subr.mxu0 %v2451
      %2962 = vmatpush2.msra.mxu0 %v2450
      %2963 = vmatprep.subr.mxu0 %v2444
      %2964 = vmatpush2.msra.mxu0 %v2443
      %2965 = vmatprep.subr.mxu0 %v2437
      %2966 = vmatpush2.msra.mxu0 %v2436
      %2967 = vmatprep.subr.mxu0 %v2430
      %2968 = vmatpush2.msra.mxu0 %v2429
      %2969 = vmatprep.subr.mxu0 %v2423
      %2970 = vmatpush2.msra.mxu0 %v2422
      %2971 = vmatprep.subr.mxu0 %v2416
      %2972 = vmatpush2.msra.mxu0 %v2415
      %2973 = vmatprep.subr.mxu0 %v2409
      %2974 = vmatpush2.msra.mxu0 %v2408
      %2975 = vmatprep.subr.mxu0 %v2402
      %2976 = vmatpush2.msra.mxu0 %v2401
      %2977 = vmatprep.subr.mxu0 %v2395
      %2978 = vmatpush2.msra.mxu0 %v2394
      %2979 = vmatprep.subr.mxu0 %v2388
      %2980 = vmatpush2.msra.mxu0 %v2387
      %2981 = vmatprep.subr.mxu0 %v2381
      %2982 = vmatpush2.msra.mxu0 %v2380
      %2983 = vmatprep.subr.mxu0 %v2374
      %2984 = vmatpush2.msra.mxu0 %v2373
      %2985 = vmatprep.mubr.f32.mxu0 %v2641
      %2986 = vmatmul.mubr.f32.gmra.mxu0 %v2527
      %v2987 = vpop.f32.mrf.mxu0
      %v2988 = vadd.f32 0.0, %v2987
      %v2989 = vpop.f32.mrf.mxu0
      %v2990 = vadd.f32 0.0, %v2989
      %2991 = vmatprep.mubr.f32.mxu0 %v2644
      %2992 = vmatmul.mubr.f32.gmra.mxu0 %v2528
      %v2993 = vpop.f32.mrf.mxu0
      %v2994 = vadd.f32 0.0, %v2993
      %v2995 = vpop.f32.mrf.mxu0
      %v2996 = vadd.f32 0.0, %v2995
      %2997 = vmatprep.mubr.f32.mxu0 %v2647
      %2998 = vmatmul.mubr.f32.gmra.mxu0 %v2529
      %v2999 = vpop.f32.mrf.mxu0
      %v3000 = vadd.f32 0.0, %v2999
      %v3001 = vpop.f32.mrf.mxu0
      %v3002 = vadd.f32 0.0, %v3001
      %3003 = vmatprep.mubr.f32.mxu0 %v2650
      %3004 = vmatmul.mubr.f32.gmra.mxu0 %v2530
      %v3005 = vpop.f32.mrf.mxu0
      %v3006 = vadd.f32 0.0, %v3005
      %v3007 = vpop.f32.mrf.mxu0
      %v3008 = vadd.f32 0.0, %v3007
      %3009 = vmatprep.mubr.f32.mxu0 %v2653
      %3010 = vmatmul.mubr.f32.gmra.mxu0 %v2531
      %v3011 = vpop.f32.mrf.mxu0
      %v3012 = vadd.f32 0.0, %v3011
      %v3013 = vpop.f32.mrf.mxu0
      %v3014 = vadd.f32 0.0, %v3013
      %3015 = vmatprep.mubr.f32.mxu0 %v2656
      %3016 = vmatmul.mubr.f32.gmra.mxu0 %v2532
      %v3017 = vpop.f32.mrf.mxu0
      %v3018 = vadd.f32 0.0, %v3017
      %v3019 = vpop.f32.mrf.mxu0
      %v3020 = vadd.f32 0.0, %v3019
      %3021 = vmatprep.mubr.f32.mxu0 %v2659
      %3022 = vmatmul.mubr.f32.gmra.mxu0 %v2533
      %v3023 = vpop.f32.mrf.mxu0
      %v3024 = vadd.f32 0.0, %v3023
      %v3025 = vpop.f32.mrf.mxu0
      %v3026 = vadd.f32 0.0, %v3025
      %3027 = vmatprep.mubr.f32.mxu0 %v2662
      %3028 = vmatmul.mubr.f32.gmra.mxu0 %v2534
      %v3029 = vpop.f32.mrf.mxu0
      %v3030 = vadd.f32 0.0, %v3029
      %v3031 = vpop.f32.mrf.mxu0
      %v3032 = vadd.f32 0.0, %v3031
      %3033 = vmatprep.mubr.f32.mxu0 %v2665
      %3034 = vmatmul.mubr.f32.gmra.mxu0 %v2535
      %v3035 = vpop.f32.mrf.mxu0
      %v3036 = vadd.f32 0.0, %v3035
      %v3037 = vpop.f32.mrf.mxu0
      %v3038 = vadd.f32 0.0, %v3037
      %3039 = vmatprep.mubr.f32.mxu0 %v2668
      %3040 = vmatmul.mubr.f32.gmra.mxu0 %v2536
      %v3041 = vpop.f32.mrf.mxu0
      %v3042 = vadd.f32 0.0, %v3041
      %v3043 = vpop.f32.mrf.mxu0
      %v3044 = vadd.f32 0.0, %v3043
      %3045 = vmatprep.mubr.f32.mxu0 %v2671
      %3046 = vmatmul.mubr.f32.gmra.mxu0 %v2537
      %v3047 = vpop.f32.mrf.mxu0
      %v3048 = vadd.f32 0.0, %v3047
      %v3049 = vpop.f32.mrf.mxu0
      %v3050 = vadd.f32 0.0, %v3049
      %3051 = vmatprep.mubr.f32.mxu0 %v2674
      %3052 = vmatmul.mubr.f32.gmra.mxu0 %v2538
      %v3053 = vpop.f32.mrf.mxu0
      %v3054 = vadd.f32 0.0, %v3053
      %v3055 = vpop.f32.mrf.mxu0
      %v3056 = vadd.f32 0.0, %v3055
      %3057 = vmatprep.mubr.f32.mxu0 %v2677
      %3058 = vmatmul.mubr.f32.gmra.mxu0 %v2539
      %v3059 = vpop.f32.mrf.mxu0
      %v3060 = vadd.f32 0.0, %v3059
      %v3061 = vpop.f32.mrf.mxu0
      %v3062 = vadd.f32 0.0, %v3061
      %3063 = vmatprep.mubr.f32.mxu0 %v2680
      %3064 = vmatmul.mubr.f32.gmra.mxu0 %v2540
      %v3065 = vpop.f32.mrf.mxu0
      %v3066 = vadd.f32 0.0, %v3065
      %v3067 = vpop.f32.mrf.mxu0
      %v3068 = vadd.f32 0.0, %v3067
      %3069 = vmatprep.mubr.f32.mxu0 %v2683
      %3070 = vmatmul.mubr.f32.gmra.mxu0 %v2541
      %v3071 = vpop.f32.mrf.mxu0
      %v3072 = vadd.f32 0.0, %v3071
      %v3073 = vpop.f32.mrf.mxu0
      %v3074 = vadd.f32 0.0, %v3073
      %3075 = vmatprep.mubr.f32.mxu0 %v2686
      %3076 = vmatmul.mubr.f32.gmra.mxu0 %v2542
      %v3077 = vpop.f32.mrf.mxu0
      %v3078 = vadd.f32 0.0, %v3077
      %v3079 = vpop.f32.mrf.mxu0
      %v3080 = vadd.f32 0.0, %v3079
      %3081 = vmatprep.mubr.f32.mxu0 %v2689
      %3082 = vmatmul.mubr.f32.gmra.mxu0 %v2559
      %v3083 = vpop.f32.mrf.mxu0
      %v3084 = vadd.f32 0.0, %v3083
      %v3085 = vpop.f32.mrf.mxu0
      %v3086 = vadd.f32 0.0, %v3085
      %3087 = vmatprep.mubr.f32.mxu0 %v2692
      %3088 = vmatmul.mubr.f32.gmra.mxu0 %v2560
      %v3089 = vpop.f32.mrf.mxu0
      %v3090 = vadd.f32 0.0, %v3089
      %v3091 = vpop.f32.mrf.mxu0
      %v3092 = vadd.f32 0.0, %v3091
      %3093 = vmatprep.mubr.f32.mxu0 %v2695
      %3094 = vmatmul.mubr.f32.gmra.mxu0 %v2561
      %v3095 = vpop.f32.mrf.mxu0
      %v3096 = vadd.f32 0.0, %v3095
      %v3097 = vpop.f32.mrf.mxu0
      %v3098 = vadd.f32 0.0, %v3097
      %3099 = vmatprep.mubr.f32.mxu0 %v2698
      %3100 = vmatmul.mubr.f32.gmra.mxu0 %v2562
      %v3101 = vpop.f32.mrf.mxu0
      %v3102 = vadd.f32 0.0, %v3101
      %v3103 = vpop.f32.mrf.mxu0
      %v3104 = vadd.f32 0.0, %v3103
      %3105 = vmatprep.mubr.f32.mxu0 %v2701
      %3106 = vmatmul.mubr.f32.gmra.mxu0 %v2563
      %v3107 = vpop.f32.mrf.mxu0
      %v3108 = vadd.f32 0.0, %v3107
      %v3109 = vpop.f32.mrf.mxu0
      %v3110 = vadd.f32 0.0, %v3109
      %3111 = vmatprep.mubr.f32.mxu0 %v2704
      %3112 = vmatmul.mubr.f32.gmra.mxu0 %v2564
      %v3113 = vpop.f32.mrf.mxu0
      %v3114 = vadd.f32 0.0, %v3113
      %v3115 = vpop.f32.mrf.mxu0
      %v3116 = vadd.f32 0.0, %v3115
      %3117 = vmatprep.mubr.f32.mxu0 %v2707
      %3118 = vmatmul.mubr.f32.gmra.mxu0 %v2565
      %v3119 = vpop.f32.mrf.mxu0
      %v3120 = vadd.f32 0.0, %v3119
      %v3121 = vpop.f32.mrf.mxu0
      %v3122 = vadd.f32 0.0, %v3121
      %3123 = vmatprep.mubr.f32.mxu0 %v2710
      %3124 = vmatmul.mubr.f32.gmra.mxu0 %v2566
      %v3125 = vpop.f32.mrf.mxu0
      %v3126 = vadd.f32 0.0, %v3125
      %v3127 = vpop.f32.mrf.mxu0
      %v3128 = vadd.f32 0.0, %v3127
      %3129 = vdwg.mxu0
      %3130 = vmatprep.subr.mxu0 %v2369
      %3131 = vmatpush1.msra.mxu0 %v2368
      %3132 = vmatprep.subr.mxu0 %v2362
      %3133 = vmatpush1.msra.mxu0 %v2361
      %3134 = vmatprep.subr.mxu0 %v2355
      %3135 = vmatpush1.msra.mxu0 %v2354
      %3136 = vmatprep.subr.mxu0 %v2348
      %3137 = vmatpush1.msra.mxu0 %v2347
      %3138 = vmatprep.subr.mxu0 %v2341
      %3139 = vmatpush1.msra.mxu0 %v2340
      %3140 = vmatprep.subr.mxu0 %v2334
      %3141 = vmatpush1.msra.mxu0 %v2333
      %3142 = vmatprep.subr.mxu0 %v2327
      %3143 = vmatpush1.msra.mxu0 %v2326
      %3144 = vmatprep.subr.mxu0 %v2320
      %3145 = vmatpush1.msra.mxu0 %v2319
      %3146 = vmatprep.subr.mxu0 %v2313
      %3147 = vmatpush1.msra.mxu0 %v2312
      %3148 = vmatprep.subr.mxu0 %v2306
      %3149 = vmatpush1.msra.mxu0 %v2305
      %3150 = vmatprep.subr.mxu0 %v2299
      %3151 = vmatpush1.msra.mxu0 %v2298
      %3152 = vmatprep.subr.mxu0 %v2292
      %3153 = vmatpush1.msra.mxu0 %v2291
      %3154 = vmatprep.subr.mxu0 %v2285
      %3155 = vmatpush1.msra.mxu0 %v2284
      %3156 = vmatprep.subr.mxu0 %v2278
      %3157 = vmatpush1.msra.mxu0 %v2277
      %3158 = vmatprep.subr.mxu0 %v2271
      %3159 = vmatpush1.msra.mxu0 %v2270
      %3160 = vmatprep.subr.mxu0 %v2264
      %3161 = vmatpush1.msra.mxu0 %v2263
      %3162 = vmatprep.subr.mxu0 0.0
      %3163 = vmatpush2.msra.mxu0 0.0
      %3164 = vmatprep.subr.mxu0 0.0
      %3165 = vmatpush2.msra.mxu0 0.0
      %3166 = vmatprep.subr.mxu0 0.0
      %3167 = vmatpush2.msra.mxu0 0.0
      %3168 = vmatprep.subr.mxu0 0.0
      %3169 = vmatpush2.msra.mxu0 0.0
      %3170 = vmatprep.subr.mxu0 %v2453
      %3171 = vmatpush2.msra.mxu0 %v2452
      %3172 = vmatprep.subr.mxu0 %v2446
      %3173 = vmatpush2.msra.mxu0 %v2445
      %3174 = vmatprep.subr.mxu0 %v2439
      %3175 = vmatpush2.msra.mxu0 %v2438
      %3176 = vmatprep.subr.mxu0 %v2432
      %3177 = vmatpush2.msra.mxu0 %v2431
      %3178 = vmatprep.subr.mxu0 %v2425
      %3179 = vmatpush2.msra.mxu0 %v2424
      %3180 = vmatprep.subr.mxu0 %v2418
      %3181 = vmatpush2.msra.mxu0 %v2417
      %3182 = vmatprep.subr.mxu0 %v2411
      %3183 = vmatpush2.msra.mxu0 %v2410
      %3184 = vmatprep.subr.mxu0 %v2404
      %3185 = vmatpush2.msra.mxu0 %v2403
      %3186 = vmatprep.subr.mxu0 %v2397
      %3187 = vmatpush2.msra.mxu0 %v2396
      %3188 = vmatprep.subr.mxu0 %v2390
      %3189 = vmatpush2.msra.mxu0 %v2389
      %3190 = vmatprep.subr.mxu0 %v2383
      %3191 = vmatpush2.msra.mxu0 %v2382
      %3192 = vmatprep.subr.mxu0 %v2376
      %3193 = vmatpush2.msra.mxu0 %v2375
      %3194 = vmatprep.mubr.f32.mxu0 %v2641
      %3195 = vmatmul.mubr.f32.gmra.mxu0 %v2527
      %v3196 = vpop.f32.mrf.mxu0
      %v3197 = vadd.f32 0.0, %v3196
      %v3198 = vpop.f32.mrf.mxu0
      %v3199 = vadd.f32 0.0, %v3198
      %3200 = vmatprep.mubr.f32.mxu0 %v2644
      %3201 = vmatmul.mubr.f32.gmra.mxu0 %v2528
      %v3202 = vpop.f32.mrf.mxu0
      %v3203 = vadd.f32 0.0, %v3202
      %v3204 = vpop.f32.mrf.mxu0
      %v3205 = vadd.f32 0.0, %v3204
      %3206 = vmatprep.mubr.f32.mxu0 %v2647
      %3207 = vmatmul.mubr.f32.gmra.mxu0 %v2529
      %v3208 = vpop.f32.mrf.mxu0
      %v3209 = vadd.f32 0.0, %v3208
      %v3210 = vpop.f32.mrf.mxu0
      %v3211 = vadd.f32 0.0, %v3210
      %3212 = vmatprep.mubr.f32.mxu0 %v2650
      %3213 = vmatmul.mubr.f32.gmra.mxu0 %v2530
      %v3214 = vpop.f32.mrf.mxu0
      %v3215 = vadd.f32 0.0, %v3214
      %v3216 = vpop.f32.mrf.mxu0
      %v3217 = vadd.f32 0.0, %v3216
      %3218 = vmatprep.mubr.f32.mxu0 %v2653
      %3219 = vmatmul.mubr.f32.gmra.mxu0 %v2531
      %v3220 = vpop.f32.mrf.mxu0
      %v3221 = vadd.f32 0.0, %v3220
      %v3222 = vpop.f32.mrf.mxu0
      %v3223 = vadd.f32 0.0, %v3222
      %3224 = vmatprep.mubr.f32.mxu0 %v2656
      %3225 = vmatmul.mubr.f32.gmra.mxu0 %v2532
      %v3226 = vpop.f32.mrf.mxu0
      %v3227 = vadd.f32 0.0, %v3226
      %v3228 = vpop.f32.mrf.mxu0
      %v3229 = vadd.f32 0.0, %v3228
      %3230 = vmatprep.mubr.f32.mxu0 %v2659
      %3231 = vmatmul.mubr.f32.gmra.mxu0 %v2533
      %v3232 = vpop.f32.mrf.mxu0
      %v3233 = vadd.f32 0.0, %v3232
      %v3234 = vpop.f32.mrf.mxu0
      %v3235 = vadd.f32 0.0, %v3234
      %3236 = vmatprep.mubr.f32.mxu0 %v2662
      %3237 = vmatmul.mubr.f32.gmra.mxu0 %v2534
      %v3238 = vpop.f32.mrf.mxu0
      %v3239 = vadd.f32 0.0, %v3238
      %v3240 = vpop.f32.mrf.mxu0
      %v3241 = vadd.f32 0.0, %v3240
      %3242 = vmatprep.mubr.f32.mxu0 %v2665
      %3243 = vmatmul.mubr.f32.gmra.mxu0 %v2535
      %v3244 = vpop.f32.mrf.mxu0
      %v3245 = vadd.f32 0.0, %v3244
      %v3246 = vpop.f32.mrf.mxu0
      %v3247 = vadd.f32 0.0, %v3246
      %3248 = vmatprep.mubr.f32.mxu0 %v2668
      %3249 = vmatmul.mubr.f32.gmra.mxu0 %v2536
      %v3250 = vpop.f32.mrf.mxu0
      %v3251 = vadd.f32 0.0, %v3250
      %v3252 = vpop.f32.mrf.mxu0
      %v3253 = vadd.f32 0.0, %v3252
      %3254 = vmatprep.mubr.f32.mxu0 %v2671
      %3255 = vmatmul.mubr.f32.gmra.mxu0 %v2537
      %v3256 = vpop.f32.mrf.mxu0
      %v3257 = vadd.f32 0.0, %v3256
      %v3258 = vpop.f32.mrf.mxu0
      %v3259 = vadd.f32 0.0, %v3258
      %3260 = vmatprep.mubr.f32.mxu0 %v2674
      %3261 = vmatmul.mubr.f32.gmra.mxu0 %v2538
      %v3262 = vpop.f32.mrf.mxu0
      %v3263 = vadd.f32 0.0, %v3262
      %v3264 = vpop.f32.mrf.mxu0
      %v3265 = vadd.f32 0.0, %v3264
      %3266 = vmatprep.mubr.f32.mxu0 %v2677
      %3267 = vmatmul.mubr.f32.gmra.mxu0 %v2539
      %v3268 = vpop.f32.mrf.mxu0
      %v3269 = vadd.f32 0.0, %v3268
      %v3270 = vpop.f32.mrf.mxu0
      %v3271 = vadd.f32 0.0, %v3270
      %3272 = vmatprep.mubr.f32.mxu0 %v2680
      %3273 = vmatmul.mubr.f32.gmra.mxu0 %v2540
      %v3274 = vpop.f32.mrf.mxu0
      %v3275 = vadd.f32 0.0, %v3274
      %v3276 = vpop.f32.mrf.mxu0
      %v3277 = vadd.f32 0.0, %v3276
      %3278 = vmatprep.mubr.f32.mxu0 %v2683
      %3279 = vmatmul.mubr.f32.gmra.mxu0 %v2541
      %v3280 = vpop.f32.mrf.mxu0
      %v3281 = vadd.f32 0.0, %v3280
      %v3282 = vpop.f32.mrf.mxu0
      %v3283 = vadd.f32 0.0, %v3282
      %3284 = vmatprep.mubr.f32.mxu0 %v2686
      %3285 = vmatmul.mubr.f32.gmra.mxu0 %v2542
      %v3286 = vpop.f32.mrf.mxu0
      %v3287 = vadd.f32 0.0, %v3286
      %v3288 = vpop.f32.mrf.mxu0
      %v3289 = vadd.f32 0.0, %v3288
      %3290 = vmatprep.mubr.f32.mxu0 %v2689
      %3291 = vmatmul.mubr.f32.gmra.mxu0 %v2559
      %v3292 = vpop.f32.mrf.mxu0
      %v3293 = vadd.f32 0.0, %v3292
      %v3294 = vpop.f32.mrf.mxu0
      %v3295 = vadd.f32 0.0, %v3294
      %3296 = vmatprep.mubr.f32.mxu0 %v2692
      %3297 = vmatmul.mubr.f32.gmra.mxu0 %v2560
      %v3298 = vpop.f32.mrf.mxu0
      %v3299 = vadd.f32 0.0, %v3298
      %v3300 = vpop.f32.mrf.mxu0
      %v3301 = vadd.f32 0.0, %v3300
      %3302 = vmatprep.mubr.f32.mxu0 %v2695
      %3303 = vmatmul.mubr.f32.gmra.mxu0 %v2561
      %v3304 = vpop.f32.mrf.mxu0
      %v3305 = vadd.f32 0.0, %v3304
      %v3306 = vpop.f32.mrf.mxu0
      %v3307 = vadd.f32 0.0, %v3306
      %3308 = vmatprep.mubr.f32.mxu0 %v2698
      %3309 = vmatmul.mubr.f32.gmra.mxu0 %v2562
      %v3310 = vpop.f32.mrf.mxu0
      %v3311 = vadd.f32 0.0, %v3310
      %v3312 = vpop.f32.mrf.mxu0
      %v3313 = vadd.f32 0.0, %v3312
      %3314 = vmatprep.mubr.f32.mxu0 %v2701
      %3315 = vmatmul.mubr.f32.gmra.mxu0 %v2563
      %v3316 = vpop.f32.mrf.mxu0
      %v3317 = vadd.f32 0.0, %v3316
      %v3318 = vpop.f32.mrf.mxu0
      %v3319 = vadd.f32 0.0, %v3318
      %3320 = vmatprep.mubr.f32.mxu0 %v2704
      %3321 = vmatmul.mubr.f32.gmra.mxu0 %v2564
      %v3322 = vpop.f32.mrf.mxu0
      %v3323 = vadd.f32 0.0, %v3322
      %v3324 = vpop.f32.mrf.mxu0
      %v3325 = vadd.f32 0.0, %v3324
      %3326 = vmatprep.mubr.f32.mxu0 %v2707
      %3327 = vmatmul.mubr.f32.gmra.mxu0 %v2565
      %v3328 = vpop.f32.mrf.mxu0
      %v3329 = vadd.f32 0.0, %v3328
      %v3330 = vpop.f32.mrf.mxu0
      %v3331 = vadd.f32 0.0, %v3330
      %3332 = vmatprep.mubr.f32.mxu0 %v2710
      %3333 = vmatmul.mubr.f32.gmra.mxu0 %v2566
      %v3334 = vpop.f32.mrf.mxu0
      %v3335 = vadd.f32 0.0, %v3334
      %v3336 = vpop.f32.mrf.mxu0
      %v3337 = vadd.f32 0.0, %v3336
      %3338 = vdwg.mxu0
      %3339 = vmatprep.subr.mxu0 0.0
      %3340 = vmatpush1.msra.mxu0 %v2370
      %3341 = vmatprep.subr.mxu0 0.0
      %3342 = vmatpush1.msra.mxu0 %v2363
      %3343 = vmatprep.subr.mxu0 0.0
      %3344 = vmatpush1.msra.mxu0 %v2356
      %3345 = vmatprep.subr.mxu0 0.0
      %3346 = vmatpush1.msra.mxu0 %v2349
      %3347 = vmatprep.subr.mxu0 0.0
      %3348 = vmatpush1.msra.mxu0 %v2342
      %3349 = vmatprep.subr.mxu0 0.0
      %3350 = vmatpush1.msra.mxu0 %v2335
      %3351 = vmatprep.subr.mxu0 0.0
      %3352 = vmatpush1.msra.mxu0 %v2328
      %3353 = vmatprep.subr.mxu0 0.0
      %3354 = vmatpush1.msra.mxu0 %v2321
      %3355 = vmatprep.subr.mxu0 0.0
      %3356 = vmatpush1.msra.mxu0 %v2314
      %3357 = vmatprep.subr.mxu0 0.0
      %3358 = vmatpush1.msra.mxu0 %v2307
      %3359 = vmatprep.subr.mxu0 0.0
      %3360 = vmatpush1.msra.mxu0 %v2300
      %3361 = vmatprep.subr.mxu0 0.0
      %3362 = vmatpush1.msra.mxu0 %v2293
      %3363 = vmatprep.subr.mxu0 0.0
      %3364 = vmatpush1.msra.mxu0 %v2286
      %3365 = vmatprep.subr.mxu0 0.0
      %3366 = vmatpush1.msra.mxu0 %v2279
      %3367 = vmatprep.subr.mxu0 0.0
      %3368 = vmatpush1.msra.mxu0 %v2272
      %3369 = vmatprep.subr.mxu0 0.0
      %3370 = vmatpush1.msra.mxu0 %v2265
      %3371 = vmatprep.subr.mxu0 0.0
      %3372 = vmatpush2.msra.mxu0 0.0
      %3373 = vmatprep.subr.mxu0 0.0
      %3374 = vmatpush2.msra.mxu0 0.0
      %3375 = vmatprep.subr.mxu0 0.0
      %3376 = vmatpush2.msra.mxu0 0.0
      %3377 = vmatprep.subr.mxu0 0.0
      %3378 = vmatpush2.msra.mxu0 0.0
      %3379 = vmatprep.subr.mxu0 0.0
      %3380 = vmatpush2.msra.mxu0 %v2454
      %3381 = vmatprep.subr.mxu0 0.0
      %3382 = vmatpush2.msra.mxu0 %v2447
      %3383 = vmatprep.subr.mxu0 0.0
      %3384 = vmatpush2.msra.mxu0 %v2440
      %3385 = vmatprep.subr.mxu0 0.0
      %3386 = vmatpush2.msra.mxu0 %v2433
      %3387 = vmatprep.subr.mxu0 0.0
      %3388 = vmatpush2.msra.mxu0 %v2426
      %3389 = vmatprep.subr.mxu0 0.0
      %3390 = vmatpush2.msra.mxu0 %v2419
      %3391 = vmatprep.subr.mxu0 0.0
      %3392 = vmatpush2.msra.mxu0 %v2412
      %3393 = vmatprep.subr.mxu0 0.0
      %3394 = vmatpush2.msra.mxu0 %v2405
      %3395 = vmatprep.subr.mxu0 0.0
      %3396 = vmatpush2.msra.mxu0 %v2398
      %3397 = vmatprep.subr.mxu0 0.0
      %3398 = vmatpush2.msra.mxu0 %v2391
      %3399 = vmatprep.subr.mxu0 0.0
      %3400 = vmatpush2.msra.mxu0 %v2384
      %3401 = vmatprep.subr.mxu0 0.0
      %3402 = vmatpush2.msra.mxu0 %v2377
      %3403 = vmatprep.mubr.f32.mxu0 %v2641
      %3404 = vmatmul.mubr.f32.gmra.mxu0 %v2527
      %v3405 = vpop.f32.mrf.mxu0
      %v3406 = vadd.f32 0.0, %v3405
      %v3407 = vpop.f32.mrf.mxu0
      %3408 = vmatprep.mubr.f32.mxu0 %v2644
      %3409 = vmatmul.mubr.f32.gmra.mxu0 %v2528
      %v3410 = vpop.f32.mrf.mxu0
      %v3411 = vadd.f32 0.0, %v3410
      %v3412 = vpop.f32.mrf.mxu0
      %3413 = vmatprep.mubr.f32.mxu0 %v2647
      %3414 = vmatmul.mubr.f32.gmra.mxu0 %v2529
      %v3415 = vpop.f32.mrf.mxu0
      %v3416 = vadd.f32 0.0, %v3415
      %v3417 = vpop.f32.mrf.mxu0
      %3418 = vmatprep.mubr.f32.mxu0 %v2650
      %3419 = vmatmul.mubr.f32.gmra.mxu0 %v2530
      %v3420 = vpop.f32.mrf.mxu0
      %v3421 = vadd.f32 0.0, %v3420
      %v3422 = vpop.f32.mrf.mxu0
      %3423 = vmatprep.mubr.f32.mxu0 %v2653
      %3424 = vmatmul.mubr.f32.gmra.mxu0 %v2531
      %v3425 = vpop.f32.mrf.mxu0
      %v3426 = vadd.f32 0.0, %v3425
      %v3427 = vpop.f32.mrf.mxu0
      %3428 = vmatprep.mubr.f32.mxu0 %v2656
      %3429 = vmatmul.mubr.f32.gmra.mxu0 %v2532
      %v3430 = vpop.f32.mrf.mxu0
      %v3431 = vadd.f32 0.0, %v3430
      %v3432 = vpop.f32.mrf.mxu0
      %3433 = vmatprep.mubr.f32.mxu0 %v2659
      %3434 = vmatmul.mubr.f32.gmra.mxu0 %v2533
      %v3435 = vpop.f32.mrf.mxu0
      %v3436 = vadd.f32 0.0, %v3435
      %v3437 = vpop.f32.mrf.mxu0
      %3438 = vmatprep.mubr.f32.mxu0 %v2662
      %3439 = vmatmul.mubr.f32.gmra.mxu0 %v2534
      %v3440 = vpop.f32.mrf.mxu0
      %v3441 = vadd.f32 0.0, %v3440
      %v3442 = vpop.f32.mrf.mxu0
      %3443 = vmatprep.mubr.f32.mxu0 %v2665
      %3444 = vmatmul.mubr.f32.gmra.mxu0 %v2535
      %v3445 = vpop.f32.mrf.mxu0
      %v3446 = vadd.f32 0.0, %v3445
      %v3447 = vpop.f32.mrf.mxu0
      %3448 = vmatprep.mubr.f32.mxu0 %v2668
      %3449 = vmatmul.mubr.f32.gmra.mxu0 %v2536
      %v3450 = vpop.f32.mrf.mxu0
      %v3451 = vadd.f32 0.0, %v3450
      %v3452 = vpop.f32.mrf.mxu0
      %3453 = vmatprep.mubr.f32.mxu0 %v2671
      %3454 = vmatmul.mubr.f32.gmra.mxu0 %v2537
      %v3455 = vpop.f32.mrf.mxu0
      %v3456 = vadd.f32 0.0, %v3455
      %v3457 = vpop.f32.mrf.mxu0
      %3458 = vmatprep.mubr.f32.mxu0 %v2674
      %3459 = vmatmul.mubr.f32.gmra.mxu0 %v2538
      %v3460 = vpop.f32.mrf.mxu0
      %v3461 = vadd.f32 0.0, %v3460
      %v3462 = vpop.f32.mrf.mxu0
      %3463 = vmatprep.mubr.f32.mxu0 %v2677
      %3464 = vmatmul.mubr.f32.gmra.mxu0 %v2539
      %v3465 = vpop.f32.mrf.mxu0
      %v3466 = vadd.f32 0.0, %v3465
      %v3467 = vpop.f32.mrf.mxu0
      %3468 = vmatprep.mubr.f32.mxu0 %v2680
      %3469 = vmatmul.mubr.f32.gmra.mxu0 %v2540
      %v3470 = vpop.f32.mrf.mxu0
      %v3471 = vadd.f32 0.0, %v3470
      %v3472 = vpop.f32.mrf.mxu0
      %3473 = vmatprep.mubr.f32.mxu0 %v2683
      %3474 = vmatmul.mubr.f32.gmra.mxu0 %v2541
      %v3475 = vpop.f32.mrf.mxu0
      %v3476 = vadd.f32 0.0, %v3475
      %v3477 = vpop.f32.mrf.mxu0
      %3478 = vmatprep.mubr.f32.mxu0 %v2686
      %3479 = vmatmul.mubr.f32.gmra.mxu0 %v2542
      %v3480 = vpop.f32.mrf.mxu0
      %v3481 = vadd.f32 0.0, %v3480
      %v3482 = vpop.f32.mrf.mxu0
      %3483 = vmatprep.mubr.f32.mxu0 %v2689
      %3484 = vmatmul.mubr.f32.gmra.mxu0 %v2559
      %v3485 = vpop.f32.mrf.mxu0
      %v3486 = vadd.f32 0.0, %v3485
      %v3487 = vpop.f32.mrf.mxu0
      %3488 = vmatprep.mubr.f32.mxu0 %v2692
      %3489 = vmatmul.mubr.f32.gmra.mxu0 %v2560
      %v3490 = vpop.f32.mrf.mxu0
      %v3491 = vadd.f32 0.0, %v3490
      %v3492 = vpop.f32.mrf.mxu0
      %3493 = vmatprep.mubr.f32.mxu0 %v2695
      %3494 = vmatmul.mubr.f32.gmra.mxu0 %v2561
      %v3495 = vpop.f32.mrf.mxu0
      %v3496 = vadd.f32 0.0, %v3495
      %v3497 = vpop.f32.mrf.mxu0
      %3498 = vmatprep.mubr.f32.mxu0 %v2698
      %3499 = vmatmul.mubr.f32.gmra.mxu0 %v2562
      %v3500 = vpop.f32.mrf.mxu0
      %v3501 = vadd.f32 0.0, %v3500
      %v3502 = vpop.f32.mrf.mxu0
      %3503 = vmatprep.mubr.f32.mxu0 %v2701
      %3504 = vmatmul.mubr.f32.gmra.mxu0 %v2563
      %v3505 = vpop.f32.mrf.mxu0
      %v3506 = vadd.f32 0.0, %v3505
      %v3507 = vpop.f32.mrf.mxu0
      %3508 = vmatprep.mubr.f32.mxu0 %v2704
      %3509 = vmatmul.mubr.f32.gmra.mxu0 %v2564
      %v3510 = vpop.f32.mrf.mxu0
      %v3511 = vadd.f32 0.0, %v3510
      %v3512 = vpop.f32.mrf.mxu0
      %3513 = vmatprep.mubr.f32.mxu0 %v2707
      %3514 = vmatmul.mubr.f32.gmra.mxu0 %v2565
      %v3515 = vpop.f32.mrf.mxu0
      %v3516 = vadd.f32 0.0, %v3515
      %v3517 = vpop.f32.mrf.mxu0
      %3518 = vmatprep.mubr.f32.mxu0 %v2710
      %3519 = vmatmul.mubr.f32.gmra.mxu0 %v2566
      %v3520 = vpop.f32.mrf.mxu0
      %v3521 = vadd.f32 0.0, %v3520
      %v3522 = vpop.f32.mrf.mxu0
      %3523 = vdwg.mxu0
      %p3524 = scmp.eq.s32.totalorder %s20, 0
      // Predicated region
      $region37: #{bn_relu_conv1x1.1} parent=35 // pred_check
        %p3525 = pneg %p3524
      $region38: #{bn_relu_conv1x1.1} parent=35 // pred_check_branch
        %3527 = sbr.rel (%p3525) target = $region40
      $region39: #{bn_relu_conv1x1.1} parent=35 // pred_region
        %3528 = vst [vmem:[#allocation2] sm:$0xff] 0.0
        %3529 = vst [vmem:[#allocation2 + $0x8] sm:$0xff] 0.0
        %3530 = vst [vmem:[#allocation2 + $0x10] sm:$0xff] 0.0
        %3531 = vst [vmem:[#allocation2 + $0x18] sm:$0xff] 0.0
        %3532 = vst [vmem:[#allocation2 + $0x20] sm:$0xff] 0.0
        %3533 = vst [vmem:[#allocation2 + $0x28] sm:$0xff] 0.0
        %3534 = vst.msk [vmem:[#allocation2 + $0x30] sm:$0xff] %vm499, 0.0
        %3535 = vst [vmem:[#allocation2 + $0x38] sm:$0xff] 0.0
        %3536 = vst [vmem:[#allocation2 + $0x40] sm:$0xff] 0.0
        %3537 = vst [vmem:[#allocation2 + $0x48] sm:$0xff] 0.0
        %3538 = vst [vmem:[#allocation2 + $0x50] sm:$0xff] 0.0
        %3539 = vst [vmem:[#allocation2 + $0x58] sm:$0xff] 0.0
        %3540 = vst [vmem:[#allocation2 + $0x60] sm:$0xff] 0.0
        %3541 = vst.msk [vmem:[#allocation2 + $0x68] sm:$0xff] %vm499, 0.0
        %3542 = vst [vmem:[#allocation2 + $0x70] sm:$0xff] 0.0
        %3543 = vst [vmem:[#allocation2 + $0x78] sm:$0xff] 0.0
        %3544 = vst [vmem:[#allocation2 + $0x80] sm:$0xff] 0.0
        %3545 = vst [vmem:[#allocation2 + $0x88] sm:$0xff] 0.0
        %3546 = vst [vmem:[#allocation2 + $0x90] sm:$0xff] 0.0
        %3547 = vst [vmem:[#allocation2 + $0x98] sm:$0xff] 0.0
        %3548 = vst.msk [vmem:[#allocation2 + $0xa0] sm:$0xff] %vm499, 0.0
        %3549 = vst [vmem:[#allocation2 + $0xa8] sm:$0xff] 0.0
        %3550 = vst [vmem:[#allocation2 + $0xb0] sm:$0xff] 0.0
        %3551 = vst [vmem:[#allocation2 + $0xb8] sm:$0xff] 0.0
        %3552 = vst [vmem:[#allocation2 + $0xc0] sm:$0xff] 0.0
        %3553 = vst [vmem:[#allocation2 + $0xc8] sm:$0xff] 0.0
        %3554 = vst [vmem:[#allocation2 + $0xd0] sm:$0xff] 0.0
        %3555 = vst.msk [vmem:[#allocation2 + $0xd8] sm:$0xff] %vm499, 0.0
        %3556 = vst [vmem:[#allocation2 + $0xe0] sm:$0xff] 0.0
        %3557 = vst [vmem:[#allocation2 + $0xe8] sm:$0xff] 0.0
        %3558 = vst [vmem:[#allocation2 + $0xf0] sm:$0xff] 0.0
        %3559 = vst [vmem:[#allocation2 + $0xf8] sm:$0xff] 0.0
        %3560 = vst [vmem:[#allocation2 + $0x100] sm:$0xff] 0.0
        %3561 = vst [vmem:[#allocation2 + $0x108] sm:$0xff] 0.0
        %3562 = vst.msk [vmem:[#allocation2 + $0x110] sm:$0xff] %vm499, 0.0
        %3563 = vst [vmem:[#allocation2 + $0x118] sm:$0xff] 0.0
        %3564 = vst [vmem:[#allocation2 + $0x120] sm:$0xff] 0.0
        %3565 = vst [vmem:[#allocation2 + $0x128] sm:$0xff] 0.0
        %3566 = vst [vmem:[#allocation2 + $0x130] sm:$0xff] 0.0
        %3567 = vst [vmem:[#allocation2 + $0x138] sm:$0xff] 0.0
        %3568 = vst [vmem:[#allocation2 + $0x140] sm:$0xff] 0.0
        %3569 = vst.msk [vmem:[#allocation2 + $0x148] sm:$0xff] %vm499, 0.0
        %3570 = vst [vmem:[#allocation2 + $0x150] sm:$0xff] 0.0
        %3571 = vst [vmem:[#allocation2 + $0x158] sm:$0xff] 0.0
        %3572 = vst [vmem:[#allocation2 + $0x160] sm:$0xff] 0.0
        %3573 = vst [vmem:[#allocation2 + $0x168] sm:$0xff] 0.0
        %3574 = vst [vmem:[#allocation2 + $0x170] sm:$0xff] 0.0
        %3575 = vst [vmem:[#allocation2 + $0x178] sm:$0xff] 0.0
        %3576 = vst.msk [vmem:[#allocation2 + $0x180] sm:$0xff] %vm499, 0.0
        %3577 = vst [vmem:[#allocation2 + $0x188] sm:$0xff] 0.0
        %3578 = vst [vmem:[#allocation2 + $0x190] sm:$0xff] 0.0
        %3579 = vst [vmem:[#allocation2 + $0x198] sm:$0xff] 0.0
        %3580 = vst [vmem:[#allocation2 + $0x1a0] sm:$0xff] 0.0
        %3581 = vst [vmem:[#allocation2 + $0x1a8] sm:$0xff] 0.0
        %3582 = vst [vmem:[#allocation2 + $0x1b0] sm:$0xff] 0.0
        %3583 = vst.msk [vmem:[#allocation2 + $0x1b8] sm:$0xff] %vm499, 0.0
        %3584 = vst [vmem:[#allocation2 + $0x1c0] sm:$0xff] 0.0
        %3585 = vst [vmem:[#allocation2 + $0x1c8] sm:$0xff] 0.0
        %3586 = vst [vmem:[#allocation2 + $0x1d0] sm:$0xff] 0.0
        %3587 = vst [vmem:[#allocation2 + $0x1d8] sm:$0xff] 0.0
        %3588 = vst [vmem:[#allocation2 + $0x1e0] sm:$0xff] 0.0
        %3589 = vst [vmem:[#allocation2 + $0x1e8] sm:$0xff] 0.0
        %3590 = vst.msk [vmem:[#allocation2 + $0x1f0] sm:$0xff] %vm499, 0.0
        %3591 = vst [vmem:[#allocation2 + $0x1f8] sm:$0xff] 0.0
        %3592 = vst [vmem:[#allocation2 + $0x200] sm:$0xff] 0.0
        %3593 = vst [vmem:[#allocation2 + $0x208] sm:$0xff] 0.0
        %3594 = vst [vmem:[#allocation2 + $0x210] sm:$0xff] 0.0
        %3595 = vst [vmem:[#allocation2 + $0x218] sm:$0xff] 0.0
        %3596 = vst [vmem:[#allocation2 + $0x220] sm:$0xff] 0.0
        %3597 = vst.msk [vmem:[#allocation2 + $0x228] sm:$0xff] %vm499, 0.0
        %3598 = vst [vmem:[#allocation2 + $0x230] sm:$0xff] 0.0
        %3599 = vst [vmem:[#allocation2 + $0x238] sm:$0xff] 0.0
        %3600 = vst [vmem:[#allocation2 + $0x240] sm:$0xff] 0.0
        %3601 = vst [vmem:[#allocation2 + $0x248] sm:$0xff] 0.0
        %3602 = vst [vmem:[#allocation2 + $0x250] sm:$0xff] 0.0
        %3603 = vst [vmem:[#allocation2 + $0x258] sm:$0xff] 0.0
        %3604 = vst.msk [vmem:[#allocation2 + $0x260] sm:$0xff] %vm499, 0.0
        %3605 = vst [vmem:[#allocation2 + $0x268] sm:$0xff] 0.0
        %3606 = vst [vmem:[#allocation2 + $0x270] sm:$0xff] 0.0
        %3607 = vst [vmem:[#allocation2 + $0x278] sm:$0xff] 0.0
        %3608 = vst [vmem:[#allocation2 + $0x280] sm:$0xff] 0.0
        %3609 = vst [vmem:[#allocation2 + $0x288] sm:$0xff] 0.0
        %3610 = vst [vmem:[#allocation2 + $0x290] sm:$0xff] 0.0
        %3611 = vst.msk [vmem:[#allocation2 + $0x298] sm:$0xff] %vm499, 0.0
        %3612 = vst [vmem:[#allocation2 + $0x2a0] sm:$0xff] 0.0
        %3613 = vst [vmem:[#allocation2 + $0x2a8] sm:$0xff] 0.0
        %3614 = vst [vmem:[#allocation2 + $0x2b0] sm:$0xff] 0.0
        %3615 = vst [vmem:[#allocation2 + $0x2b8] sm:$0xff] 0.0
        %3616 = vst [vmem:[#allocation2 + $0x2c0] sm:$0xff] 0.0
        %3617 = vst [vmem:[#allocation2 + $0x2c8] sm:$0xff] 0.0
        %3618 = vst.msk [vmem:[#allocation2 + $0x2d0] sm:$0xff] %vm499, 0.0
        %3619 = vst [vmem:[#allocation2 + $0x2d8] sm:$0xff] 0.0
        %3620 = vst [vmem:[#allocation2 + $0x2e0] sm:$0xff] 0.0
        %3621 = vst [vmem:[#allocation2 + $0x2e8] sm:$0xff] 0.0
        %3622 = vst [vmem:[#allocation2 + $0x2f0] sm:$0xff] 0.0
        %3623 = vst [vmem:[#allocation2 + $0x2f8] sm:$0xff] 0.0
        %3624 = vst [vmem:[#allocation2 + $0x300] sm:$0xff] 0.0
        %3625 = vst.msk [vmem:[#allocation2 + $0x308] sm:$0xff] %vm499, 0.0
        %3626 = vst [vmem:[#allocation2 + $0x310] sm:$0xff] 0.0
        %3627 = vst [vmem:[#allocation2 + $0x318] sm:$0xff] 0.0
        %3628 = vst [vmem:[#allocation2 + $0x320] sm:$0xff] 0.0
        %3629 = vst [vmem:[#allocation2 + $0x328] sm:$0xff] 0.0
        %3630 = vst [vmem:[#allocation2 + $0x330] sm:$0xff] 0.0
        %3631 = vst [vmem:[#allocation2 + $0x338] sm:$0xff] 0.0
        %3632 = vst.msk [vmem:[#allocation2 + $0x340] sm:$0xff] %vm499, 0.0
        %3633 = vst [vmem:[#allocation2 + $0x348] sm:$0xff] 0.0
        %3634 = vst [vmem:[#allocation2 + $0x350] sm:$0xff] 0.0
        %3635 = vst [vmem:[#allocation2 + $0x358] sm:$0xff] 0.0
        %3636 = vst [vmem:[#allocation2 + $0x360] sm:$0xff] 0.0
        %3637 = vst [vmem:[#allocation2 + $0x368] sm:$0xff] 0.0
        %3638 = vst [vmem:[#allocation2 + $0x370] sm:$0xff] 0.0
        %3639 = vst.msk [vmem:[#allocation2 + $0x378] sm:$0xff] %vm499, 0.0
        %3640 = vst [vmem:[#allocation2 + $0x380] sm:$0xff] 0.0
        %3641 = vst [vmem:[#allocation2 + $0x388] sm:$0xff] 0.0
        %3642 = vst [vmem:[#allocation2 + $0x390] sm:$0xff] 0.0
        %3643 = vst [vmem:[#allocation2 + $0x398] sm:$0xff] 0.0
        %3644 = vst [vmem:[#allocation2 + $0x3a0] sm:$0xff] 0.0
        %3645 = vst [vmem:[#allocation2 + $0x3a8] sm:$0xff] 0.0
        %3646 = vst.msk [vmem:[#allocation2 + $0x3b0] sm:$0xff] %vm499, 0.0
        %3647 = vst [vmem:[#allocation2 + $0x3b8] sm:$0xff] 0.0
        %3648 = vst [vmem:[#allocation2 + $0x3c0] sm:$0xff] 0.0
        %3649 = vst [vmem:[#allocation2 + $0x3c8] sm:$0xff] 0.0
        %3650 = vst [vmem:[#allocation2 + $0x3d0] sm:$0xff] 0.0
        %3651 = vst [vmem:[#allocation2 + $0x3d8] sm:$0xff] 0.0
        %3652 = vst [vmem:[#allocation2 + $0x3e0] sm:$0xff] 0.0
        %3653 = vst.msk [vmem:[#allocation2 + $0x3e8] sm:$0xff] %vm499, 0.0
        %3654 = vst [vmem:[#allocation2 + $0x3f0] sm:$0xff] 0.0
        %3655 = vst [vmem:[#allocation2 + $0x3f8] sm:$0xff] 0.0
        %3656 = vst [vmem:[#allocation2 + $0x400] sm:$0xff] 0.0
        %3657 = vst [vmem:[#allocation2 + $0x408] sm:$0xff] 0.0
        %3658 = vst [vmem:[#allocation2 + $0x410] sm:$0xff] 0.0
        %3659 = vst [vmem:[#allocation2 + $0x418] sm:$0xff] 0.0
        %3660 = vst.msk [vmem:[#allocation2 + $0x420] sm:$0xff] %vm499, 0.0
        %3661 = vst [vmem:[#allocation2 + $0x428] sm:$0xff] 0.0
        %3662 = vst [vmem:[#allocation2 + $0x430] sm:$0xff] 0.0
        %3663 = vst [vmem:[#allocation2 + $0x438] sm:$0xff] 0.0
        %3664 = vst [vmem:[#allocation2 + $0x440] sm:$0xff] 0.0
        %3665 = vst [vmem:[#allocation2 + $0x448] sm:$0xff] 0.0
        %3666 = vst [vmem:[#allocation2 + $0x450] sm:$0xff] 0.0
        %3667 = vst.msk [vmem:[#allocation2 + $0x458] sm:$0xff] %vm499, 0.0
        %3668 = vst [vmem:[#allocation2 + $0x460] sm:$0xff] 0.0
        %3669 = vst [vmem:[#allocation2 + $0x468] sm:$0xff] 0.0
        %3670 = vst [vmem:[#allocation2 + $0x470] sm:$0xff] 0.0
        %3671 = vst [vmem:[#allocation2 + $0x478] sm:$0xff] 0.0
        %3672 = vst [vmem:[#allocation2 + $0x480] sm:$0xff] 0.0
        %3673 = vst [vmem:[#allocation2 + $0x488] sm:$0xff] 0.0
        %3674 = vst.msk [vmem:[#allocation2 + $0x490] sm:$0xff] %vm499, 0.0
        %3675 = vst [vmem:[#allocation2 + $0x498] sm:$0xff] 0.0
        %3676 = vst [vmem:[#allocation2 + $0x4a0] sm:$0xff] 0.0
        %3677 = vst [vmem:[#allocation2 + $0x4a8] sm:$0xff] 0.0
        %3678 = vst [vmem:[#allocation2 + $0x4b0] sm:$0xff] 0.0
        %3679 = vst [vmem:[#allocation2 + $0x4b8] sm:$0xff] 0.0
        %3680 = vst [vmem:[#allocation2 + $0x4c0] sm:$0xff] 0.0
        %3681 = vst.msk [vmem:[#allocation2 + $0x4c8] sm:$0xff] %vm499, 0.0
        %3682 = vst [vmem:[#allocation2 + $0x4d0] sm:$0xff] 0.0
        %3683 = vst [vmem:[#allocation2 + $0x4d8] sm:$0xff] 0.0
        %3684 = vst [vmem:[#allocation2 + $0x4e0] sm:$0xff] 0.0
        %3685 = vst [vmem:[#allocation2 + $0x4e8] sm:$0xff] 0.0
        %3686 = vst [vmem:[#allocation2 + $0x4f0] sm:$0xff] 0.0
        %3687 = vst [vmem:[#allocation2 + $0x4f8] sm:$0xff] 0.0
        %3688 = vst.msk [vmem:[#allocation2 + $0x500] sm:$0xff] %vm499, 0.0
        %3689 = vst [vmem:[#allocation2 + $0x508] sm:$0xff] 0.0
        %3690 = vst [vmem:[#allocation2 + $0x510] sm:$0xff] 0.0
        %3691 = vst [vmem:[#allocation2 + $0x518] sm:$0xff] 0.0
        %3692 = vst [vmem:[#allocation2 + $0x520] sm:$0xff] 0.0
        %3693 = vst [vmem:[#allocation2 + $0x528] sm:$0xff] 0.0
        %3694 = vst [vmem:[#allocation2 + $0x530] sm:$0xff] 0.0
        %3695 = vst.msk [vmem:[#allocation2 + $0x538] sm:$0xff] %vm499, 0.0
      $region40: #{bn_relu_conv1x1.1} parent=35 // pred_fallthru
        _
      %v3696 = vld [vmem:[#allocation2] sm:$0xff]
      %v3697 = vld [vmem:[#allocation2 + $0x8] sm:$0xff]
      %v3698 = vld [vmem:[#allocation2 + $0x10] sm:$0xff]
      %v3699 = vld [vmem:[#allocation2 + $0x18] sm:$0xff]
      %v3700 = vld [vmem:[#allocation2 + $0x20] sm:$0xff]
      %v3701 = vld [vmem:[#allocation2 + $0x28] sm:$0xff]
      %v3702 = vld [vmem:[#allocation2 + $0x30] sm:$0xff]
      %v3703 = vld [vmem:[#allocation2 + $0x38] sm:$0xff]
      %v3704 = vld [vmem:[#allocation2 + $0x40] sm:$0xff]
      %v3705 = vld [vmem:[#allocation2 + $0x48] sm:$0xff]
      %v3706 = vld [vmem:[#allocation2 + $0x50] sm:$0xff]
      %v3707 = vld [vmem:[#allocation2 + $0x58] sm:$0xff]
      %v3708 = vld [vmem:[#allocation2 + $0x60] sm:$0xff]
      %v3709 = vld [vmem:[#allocation2 + $0x68] sm:$0xff]
      %v3710 = vld [vmem:[#allocation2 + $0x70] sm:$0xff]
      %v3711 = vld [vmem:[#allocation2 + $0x78] sm:$0xff]
      %v3712 = vld [vmem:[#allocation2 + $0x80] sm:$0xff]
      %v3713 = vld [vmem:[#allocation2 + $0x88] sm:$0xff]
      %v3714 = vld [vmem:[#allocation2 + $0x90] sm:$0xff]
      %v3715 = vld [vmem:[#allocation2 + $0x98] sm:$0xff]
      %v3716 = vld [vmem:[#allocation2 + $0xa0] sm:$0xff]
      %v3717 = vld [vmem:[#allocation2 + $0xa8] sm:$0xff]
      %v3718 = vld [vmem:[#allocation2 + $0xb0] sm:$0xff]
      %v3719 = vld [vmem:[#allocation2 + $0xb8] sm:$0xff]
      %v3720 = vld [vmem:[#allocation2 + $0xc0] sm:$0xff]
      %v3721 = vld [vmem:[#allocation2 + $0xc8] sm:$0xff]
      %v3722 = vld [vmem:[#allocation2 + $0xd0] sm:$0xff]
      %v3723 = vld [vmem:[#allocation2 + $0xd8] sm:$0xff]
      %v3724 = vld [vmem:[#allocation2 + $0xe0] sm:$0xff]
      %v3725 = vld [vmem:[#allocation2 + $0xe8] sm:$0xff]
      %v3726 = vld [vmem:[#allocation2 + $0xf0] sm:$0xff]
      %v3727 = vld [vmem:[#allocation2 + $0xf8] sm:$0xff]
      %v3728 = vld [vmem:[#allocation2 + $0x100] sm:$0xff]
      %v3729 = vld [vmem:[#allocation2 + $0x108] sm:$0xff]
      %v3730 = vld [vmem:[#allocation2 + $0x110] sm:$0xff]
      %v3731 = vld [vmem:[#allocation2 + $0x118] sm:$0xff]
      %v3732 = vld [vmem:[#allocation2 + $0x120] sm:$0xff]
      %v3733 = vld [vmem:[#allocation2 + $0x128] sm:$0xff]
      %v3734 = vld [vmem:[#allocation2 + $0x130] sm:$0xff]
      %v3735 = vld [vmem:[#allocation2 + $0x138] sm:$0xff]
      %v3736 = vld [vmem:[#allocation2 + $0x140] sm:$0xff]
      %v3737 = vld [vmem:[#allocation2 + $0x148] sm:$0xff]
      %v3738 = vld [vmem:[#allocation2 + $0x150] sm:$0xff]
      %v3739 = vld [vmem:[#allocation2 + $0x158] sm:$0xff]
      %v3740 = vld [vmem:[#allocation2 + $0x160] sm:$0xff]
      %v3741 = vld [vmem:[#allocation2 + $0x168] sm:$0xff]
      %v3742 = vld [vmem:[#allocation2 + $0x170] sm:$0xff]
      %v3743 = vld [vmem:[#allocation2 + $0x178] sm:$0xff]
      %v3744 = vld [vmem:[#allocation2 + $0x180] sm:$0xff]
      %v3745 = vld [vmem:[#allocation2 + $0x188] sm:$0xff]
      %v3746 = vld [vmem:[#allocation2 + $0x190] sm:$0xff]
      %v3747 = vld [vmem:[#allocation2 + $0x198] sm:$0xff]
      %v3748 = vld [vmem:[#allocation2 + $0x1a0] sm:$0xff]
      %v3749 = vld [vmem:[#allocation2 + $0x1a8] sm:$0xff]
      %v3750 = vld [vmem:[#allocation2 + $0x1b0] sm:$0xff]
      %v3751 = vld [vmem:[#allocation2 + $0x1b8] sm:$0xff]
      %v3752 = vld [vmem:[#allocation2 + $0x1c0] sm:$0xff]
      %v3753 = vld [vmem:[#allocation2 + $0x1c8] sm:$0xff]
      %v3754 = vld [vmem:[#allocation2 + $0x1d0] sm:$0xff]
      %v3755 = vld [vmem:[#allocation2 + $0x1d8] sm:$0xff]
      %v3756 = vld [vmem:[#allocation2 + $0x1e0] sm:$0xff]
      %v3757 = vld [vmem:[#allocation2 + $0x1e8] sm:$0xff]
      %v3758 = vld [vmem:[#allocation2 + $0x1f0] sm:$0xff]
      %v3759 = vld [vmem:[#allocation2 + $0x1f8] sm:$0xff]
      %v3760 = vld [vmem:[#allocation2 + $0x200] sm:$0xff]
      %v3761 = vld [vmem:[#allocation2 + $0x208] sm:$0xff]
      %v3762 = vld [vmem:[#allocation2 + $0x210] sm:$0xff]
      %v3763 = vld [vmem:[#allocation2 + $0x218] sm:$0xff]
      %v3764 = vld [vmem:[#allocation2 + $0x220] sm:$0xff]
      %v3765 = vld [vmem:[#allocation2 + $0x228] sm:$0xff]
      %v3766 = vld [vmem:[#allocation2 + $0x230] sm:$0xff]
      %v3767 = vld [vmem:[#allocation2 + $0x238] sm:$0xff]
      %v3768 = vld [vmem:[#allocation2 + $0x240] sm:$0xff]
      %v3769 = vld [vmem:[#allocation2 + $0x248] sm:$0xff]
      %v3770 = vld [vmem:[#allocation2 + $0x250] sm:$0xff]
      %v3771 = vld [vmem:[#allocation2 + $0x258] sm:$0xff]
      %v3772 = vld [vmem:[#allocation2 + $0x260] sm:$0xff]
      %v3773 = vld [vmem:[#allocation2 + $0x268] sm:$0xff]
      %v3774 = vld [vmem:[#allocation2 + $0x270] sm:$0xff]
      %v3775 = vld [vmem:[#allocation2 + $0x278] sm:$0xff]
      %v3776 = vld [vmem:[#allocation2 + $0x280] sm:$0xff]
      %v3777 = vld [vmem:[#allocation2 + $0x288] sm:$0xff]
      %v3778 = vld [vmem:[#allocation2 + $0x290] sm:$0xff]
      %v3779 = vld [vmem:[#allocation2 + $0x298] sm:$0xff]
      %v3780 = vld [vmem:[#allocation2 + $0x2a0] sm:$0xff]
      %v3781 = vld [vmem:[#allocation2 + $0x2a8] sm:$0xff]
      %v3782 = vld [vmem:[#allocation2 + $0x2b0] sm:$0xff]
      %v3783 = vld [vmem:[#allocation2 + $0x2b8] sm:$0xff]
      %v3784 = vld [vmem:[#allocation2 + $0x2c0] sm:$0xff]
      %v3785 = vld [vmem:[#allocation2 + $0x2c8] sm:$0xff]
      %v3786 = vld [vmem:[#allocation2 + $0x2d0] sm:$0xff]
      %v3787 = vld [vmem:[#allocation2 + $0x2d8] sm:$0xff]
      %v3788 = vld [vmem:[#allocation2 + $0x2e0] sm:$0xff]
      %v3789 = vld [vmem:[#allocation2 + $0x2e8] sm:$0xff]
      %v3790 = vld [vmem:[#allocation2 + $0x2f0] sm:$0xff]
      %v3791 = vld [vmem:[#allocation2 + $0x2f8] sm:$0xff]
      %v3792 = vld [vmem:[#allocation2 + $0x300] sm:$0xff]
      %v3793 = vld [vmem:[#allocation2 + $0x308] sm:$0xff]
      %v3794 = vld [vmem:[#allocation2 + $0x310] sm:$0xff]
      %v3795 = vld [vmem:[#allocation2 + $0x318] sm:$0xff]
      %v3796 = vld [vmem:[#allocation2 + $0x320] sm:$0xff]
      %v3797 = vld [vmem:[#allocation2 + $0x328] sm:$0xff]
      %v3798 = vld [vmem:[#allocation2 + $0x330] sm:$0xff]
      %v3799 = vld [vmem:[#allocation2 + $0x338] sm:$0xff]
      %v3800 = vld [vmem:[#allocation2 + $0x340] sm:$0xff]
      %v3801 = vld [vmem:[#allocation2 + $0x348] sm:$0xff]
      %v3802 = vld [vmem:[#allocation2 + $0x350] sm:$0xff]
      %v3803 = vld [vmem:[#allocation2 + $0x358] sm:$0xff]
      %v3804 = vld [vmem:[#allocation2 + $0x360] sm:$0xff]
      %v3805 = vld [vmem:[#allocation2 + $0x368] sm:$0xff]
      %v3806 = vld [vmem:[#allocation2 + $0x370] sm:$0xff]
      %v3807 = vld [vmem:[#allocation2 + $0x378] sm:$0xff]
      %v3808 = vld [vmem:[#allocation2 + $0x380] sm:$0xff]
      %v3809 = vld [vmem:[#allocation2 + $0x388] sm:$0xff]
      %v3810 = vld [vmem:[#allocation2 + $0x390] sm:$0xff]
      %v3811 = vld [vmem:[#allocation2 + $0x398] sm:$0xff]
      %v3812 = vld [vmem:[#allocation2 + $0x3a0] sm:$0xff]
      %v3813 = vld [vmem:[#allocation2 + $0x3a8] sm:$0xff]
      %v3814 = vld [vmem:[#allocation2 + $0x3b0] sm:$0xff]
      %v3815 = vld [vmem:[#allocation2 + $0x3b8] sm:$0xff]
      %v3816 = vld [vmem:[#allocation2 + $0x3c0] sm:$0xff]
      %v3817 = vld [vmem:[#allocation2 + $0x3c8] sm:$0xff]
      %v3818 = vld [vmem:[#allocation2 + $0x3d0] sm:$0xff]
      %v3819 = vld [vmem:[#allocation2 + $0x3d8] sm:$0xff]
      %v3820 = vld [vmem:[#allocation2 + $0x3e0] sm:$0xff]
      %v3821 = vld [vmem:[#allocation2 + $0x3e8] sm:$0xff]
      %v3822 = vld [vmem:[#allocation2 + $0x3f0] sm:$0xff]
      %v3823 = vld [vmem:[#allocation2 + $0x3f8] sm:$0xff]
      %v3824 = vld [vmem:[#allocation2 + $0x400] sm:$0xff]
      %v3825 = vld [vmem:[#allocation2 + $0x408] sm:$0xff]
      %v3826 = vld [vmem:[#allocation2 + $0x410] sm:$0xff]
      %v3827 = vld [vmem:[#allocation2 + $0x418] sm:$0xff]
      %v3828 = vld [vmem:[#allocation2 + $0x420] sm:$0xff]
      %v3829 = vld [vmem:[#allocation2 + $0x428] sm:$0xff]
      %v3830 = vld [vmem:[#allocation2 + $0x430] sm:$0xff]
      %v3831 = vld [vmem:[#allocation2 + $0x438] sm:$0xff]
      %v3832 = vld [vmem:[#allocation2 + $0x440] sm:$0xff]
      %v3833 = vld [vmem:[#allocation2 + $0x448] sm:$0xff]
      %v3834 = vld [vmem:[#allocation2 + $0x450] sm:$0xff]
      %v3835 = vld [vmem:[#allocation2 + $0x458] sm:$0xff]
      %v3836 = vld [vmem:[#allocation2 + $0x460] sm:$0xff]
      %v3837 = vld [vmem:[#allocation2 + $0x468] sm:$0xff]
      %v3838 = vld [vmem:[#allocation2 + $0x470] sm:$0xff]
      %v3839 = vld [vmem:[#allocation2 + $0x478] sm:$0xff]
      %v3840 = vld [vmem:[#allocation2 + $0x480] sm:$0xff]
      %v3841 = vld [vmem:[#allocation2 + $0x488] sm:$0xff]
      %v3842 = vld [vmem:[#allocation2 + $0x490] sm:$0xff]
      %v3843 = vld [vmem:[#allocation2 + $0x498] sm:$0xff]
      %v3844 = vld [vmem:[#allocation2 + $0x4a0] sm:$0xff]
      %v3845 = vld [vmem:[#allocation2 + $0x4a8] sm:$0xff]
      %v3846 = vld [vmem:[#allocation2 + $0x4b0] sm:$0xff]
      %v3847 = vld [vmem:[#allocation2 + $0x4b8] sm:$0xff]
      %v3848 = vld [vmem:[#allocation2 + $0x4c0] sm:$0xff]
      %v3849 = vld [vmem:[#allocation2 + $0x4c8] sm:$0xff]
      %v3850 = vld [vmem:[#allocation2 + $0x4d0] sm:$0xff]
      %v3851 = vld [vmem:[#allocation2 + $0x4d8] sm:$0xff]
      %v3852 = vld [vmem:[#allocation2 + $0x4e0] sm:$0xff]
      %v3853 = vld [vmem:[#allocation2 + $0x4e8] sm:$0xff]
      %v3854 = vld [vmem:[#allocation2 + $0x4f0] sm:$0xff]
      %v3855 = vld [vmem:[#allocation2 + $0x4f8] sm:$0xff]
      %v3856 = vld [vmem:[#allocation2 + $0x500] sm:$0xff]
      %v3857 = vld [vmem:[#allocation2 + $0x508] sm:$0xff]
      %v3858 = vld [vmem:[#allocation2 + $0x510] sm:$0xff]
      %v3859 = vld [vmem:[#allocation2 + $0x518] sm:$0xff]
      %v3860 = vld [vmem:[#allocation2 + $0x520] sm:$0xff]
      %v3861 = vld [vmem:[#allocation2 + $0x528] sm:$0xff]
      %v3862 = vld [vmem:[#allocation2 + $0x530] sm:$0xff]
      %v3863 = vld [vmem:[#allocation2 + $0x538] sm:$0xff]
      %v3864 = vadd.f32 %v3696, %v2779
      %v3865 = vadd.f32 %v3697, %v2781
      %v3866 = vadd.f32 %v3698, %v2988
      %v3867 = vadd.f32 %v3699, %v2990
      %v3868 = vadd.f32 %v3700, %v3197
      %v3869 = vadd.f32 %v3701, %v3199
      %v3870 = vadd.f32 %v3702, %v3406
      %v3871 = vadd.f32 %v3703, %v2785
      %v3872 = vadd.f32 %v3704, %v2787
      %v3873 = vadd.f32 %v3705, %v2994
      %v3874 = vadd.f32 %v3706, %v2996
      %v3875 = vadd.f32 %v3707, %v3203
      %v3876 = vadd.f32 %v3708, %v3205
      %v3877 = vadd.f32 %v3709, %v3411
      %v3878 = vadd.f32 %v3710, %v2791
      %v3879 = vadd.f32 %v3711, %v2793
      %v3880 = vadd.f32 %v3712, %v3000
      %v3881 = vadd.f32 %v3713, %v3002
      %v3882 = vadd.f32 %v3714, %v3209
      %v3883 = vadd.f32 %v3715, %v3211
      %v3884 = vadd.f32 %v3716, %v3416
      %v3885 = vadd.f32 %v3717, %v2797
      %v3886 = vadd.f32 %v3718, %v2799
      %v3887 = vadd.f32 %v3719, %v3006
      %v3888 = vadd.f32 %v3720, %v3008
      %v3889 = vadd.f32 %v3721, %v3215
      %v3890 = vadd.f32 %v3722, %v3217
      %v3891 = vadd.f32 %v3723, %v3421
      %v3892 = vadd.f32 %v3724, %v2803
      %v3893 = vadd.f32 %v3725, %v2805
      %v3894 = vadd.f32 %v3726, %v3012
      %v3895 = vadd.f32 %v3727, %v3014
      %v3896 = vadd.f32 %v3728, %v3221
      %v3897 = vadd.f32 %v3729, %v3223
      %v3898 = vadd.f32 %v3730, %v3426
      %v3899 = vadd.f32 %v3731, %v2809
      %v3900 = vadd.f32 %v3732, %v2811
      %v3901 = vadd.f32 %v3733, %v3018
      %v3902 = vadd.f32 %v3734, %v3020
      %v3903 = vadd.f32 %v3735, %v3227
      %v3904 = vadd.f32 %v3736, %v3229
      %v3905 = vadd.f32 %v3737, %v3431
      %v3906 = vadd.f32 %v3738, %v2815
      %v3907 = vadd.f32 %v3739, %v2817
      %v3908 = vadd.f32 %v3740, %v3024
      %v3909 = vadd.f32 %v3741, %v3026
      %v3910 = vadd.f32 %v3742, %v3233
      %v3911 = vadd.f32 %v3743, %v3235
      %v3912 = vadd.f32 %v3744, %v3436
      %v3913 = vadd.f32 %v3745, %v2821
      %v3914 = vadd.f32 %v3746, %v2823
      %v3915 = vadd.f32 %v3747, %v3030
      %v3916 = vadd.f32 %v3748, %v3032
      %v3917 = vadd.f32 %v3749, %v3239
      %v3918 = vadd.f32 %v3750, %v3241
      %v3919 = vadd.f32 %v3751, %v3441
      %v3920 = vadd.f32 %v3752, %v2827
      %v3921 = vadd.f32 %v3753, %v2829
      %v3922 = vadd.f32 %v3754, %v3036
      %v3923 = vadd.f32 %v3755, %v3038
      %v3924 = vadd.f32 %v3756, %v3245
      %v3925 = vadd.f32 %v3757, %v3247
      %v3926 = vadd.f32 %v3758, %v3446
      %v3927 = vadd.f32 %v3759, %v2833
      %v3928 = vadd.f32 %v3760, %v2835
      %v3929 = vadd.f32 %v3761, %v3042
      %v3930 = vadd.f32 %v3762, %v3044
      %v3931 = vadd.f32 %v3763, %v3251
      %v3932 = vadd.f32 %v3764, %v3253
      %v3933 = vadd.f32 %v3765, %v3451
      %v3934 = vadd.f32 %v3766, %v2839
      %v3935 = vadd.f32 %v3767, %v2841
      %v3936 = vadd.f32 %v3768, %v3048
      %v3937 = vadd.f32 %v3769, %v3050
      %v3938 = vadd.f32 %v3770, %v3257
      %v3939 = vadd.f32 %v3771, %v3259
      %v3940 = vadd.f32 %v3772, %v3456
      %v3941 = vadd.f32 %v3773, %v2845
      %v3942 = vadd.f32 %v3774, %v2847
      %v3943 = vadd.f32 %v3775, %v3054
      %v3944 = vadd.f32 %v3776, %v3056
      %v3945 = vadd.f32 %v3777, %v3263
      %v3946 = vadd.f32 %v3778, %v3265
      %v3947 = vadd.f32 %v3779, %v3461
      %v3948 = vadd.f32 %v3780, %v2851
      %v3949 = vadd.f32 %v3781, %v2853
      %v3950 = vadd.f32 %v3782, %v3060
      %v3951 = vadd.f32 %v3783, %v3062
      %v3952 = vadd.f32 %v3784, %v3269
      %v3953 = vadd.f32 %v3785, %v3271
      %v3954 = vadd.f32 %v3786, %v3466
      %v3955 = vadd.f32 %v3787, %v2857
      %v3956 = vadd.f32 %v3788, %v2859
      %v3957 = vadd.f32 %v3789, %v3066
      %v3958 = vadd.f32 %v3790, %v3068
      %v3959 = vadd.f32 %v3791, %v3275
      %v3960 = vadd.f32 %v3792, %v3277
      %v3961 = vadd.f32 %v3793, %v3471
      %v3962 = vadd.f32 %v3794, %v2863
      %v3963 = vadd.f32 %v3795, %v2865
      %v3964 = vadd.f32 %v3796, %v3072
      %v3965 = vadd.f32 %v3797, %v3074
      %v3966 = vadd.f32 %v3798, %v3281
      %v3967 = vadd.f32 %v3799, %v3283
      %v3968 = vadd.f32 %v3800, %v3476
      %v3969 = vadd.f32 %v3801, %v2869
      %v3970 = vadd.f32 %v3802, %v2871
      %v3971 = vadd.f32 %v3803, %v3078
      %v3972 = vadd.f32 %v3804, %v3080
      %v3973 = vadd.f32 %v3805, %v3287
      %v3974 = vadd.f32 %v3806, %v3289
      %v3975 = vadd.f32 %v3807, %v3481
      %v3976 = vadd.f32 %v3808, %v2875
      %v3977 = vadd.f32 %v3809, %v2877
      %v3978 = vadd.f32 %v3810, %v3084
      %v3979 = vadd.f32 %v3811, %v3086
      %v3980 = vadd.f32 %v3812, %v3293
      %v3981 = vadd.f32 %v3813, %v3295
      %v3982 = vadd.f32 %v3814, %v3486
      %v3983 = vadd.f32 %v3815, %v2881
      %v3984 = vadd.f32 %v3816, %v2883
      %v3985 = vadd.f32 %v3817, %v3090
      %v3986 = vadd.f32 %v3818, %v3092
      %v3987 = vadd.f32 %v3819, %v3299
      %v3988 = vadd.f32 %v3820, %v3301
      %v3989 = vadd.f32 %v3821, %v3491
      %v3990 = vadd.f32 %v3822, %v2887
      %v3991 = vadd.f32 %v3823, %v2889
      %v3992 = vadd.f32 %v3824, %v3096
      %v3993 = vadd.f32 %v3825, %v3098
      %v3994 = vadd.f32 %v3826, %v3305
      %v3995 = vadd.f32 %v3827, %v3307
      %v3996 = vadd.f32 %v3828, %v3496
      %v3997 = vadd.f32 %v3829, %v2893
      %v3998 = vadd.f32 %v3830, %v2895
      %v3999 = vadd.f32 %v3831, %v3102
      %v4000 = vadd.f32 %v3832, %v3104
      %v4001 = vadd.f32 %v3833, %v3311
      %v4002 = vadd.f32 %v3834, %v3313
      %v4003 = vadd.f32 %v3835, %v3501
      %v4004 = vadd.f32 %v3836, %v2899
      %v4005 = vadd.f32 %v3837, %v2901
      %v4006 = vadd.f32 %v3838, %v3108
      %v4007 = vadd.f32 %v3839, %v3110
      %v4008 = vadd.f32 %v3840, %v3317
      %v4009 = vadd.f32 %v3841, %v3319
      %v4010 = vadd.f32 %v3842, %v3506
      %v4011 = vadd.f32 %v3843, %v2905
      %v4012 = vadd.f32 %v3844, %v2907
      %v4013 = vadd.f32 %v3845, %v3114
      %v4014 = vadd.f32 %v3846, %v3116
      %v4015 = vadd.f32 %v3847, %v3323
      %v4016 = vadd.f32 %v3848, %v3325
      %v4017 = vadd.f32 %v3849, %v3511
      %v4018 = vadd.f32 %v3850, %v2911
      %v4019 = vadd.f32 %v3851, %v2913
      %v4020 = vadd.f32 %v3852, %v3120
      %v4021 = vadd.f32 %v3853, %v3122
      %v4022 = vadd.f32 %v3854, %v3329
      %v4023 = vadd.f32 %v3855, %v3331
      %v4024 = vadd.f32 %v3856, %v3516
      %v4025 = vadd.f32 %v3857, %v2917
      %v4026 = vadd.f32 %v3858, %v2919
      %v4027 = vadd.f32 %v3859, %v3126
      %v4028 = vadd.f32 %v3860, %v3128
      %v4029 = vadd.f32 %v3861, %v3335
      %v4030 = vadd.f32 %v3862, %v3337
      %v4031 = vadd.f32 %v3863, %v3521
      %4032 = vst [vmem:[#allocation2] sm:$0xff] %v3864
      %4033 = vst [vmem:[#allocation2 + $0x8] sm:$0xff] %v3865
      %4034 = vst [vmem:[#allocation2 + $0x10] sm:$0xff] %v3866
      %4035 = vst [vmem:[#allocation2 + $0x18] sm:$0xff] %v3867
      %4036 = vst [vmem:[#allocation2 + $0x20] sm:$0xff] %v3868
      %4037 = vst [vmem:[#allocation2 + $0x28] sm:$0xff] %v3869
      %4038 = vst.msk [vmem:[#allocation2 + $0x30] sm:$0xff] %vm499, %v3870
      %4039 = vst [vmem:[#allocation2 + $0x38] sm:$0xff] %v3871
      %4040 = vst [vmem:[#allocation2 + $0x40] sm:$0xff] %v3872
      %4041 = vst [vmem:[#allocation2 + $0x48] sm:$0xff] %v3873
      %4042 = vst [vmem:[#allocation2 + $0x50] sm:$0xff] %v3874
      %4043 = vst [vmem:[#allocation2 + $0x58] sm:$0xff] %v3875
      %4044 = vst [vmem:[#allocation2 + $0x60] sm:$0xff] %v3876
      %4045 = vst.msk [vmem:[#allocation2 + $0x68] sm:$0xff] %vm499, %v3877
      %4046 = vst [vmem:[#allocation2 + $0x70] sm:$0xff] %v3878
      %4047 = vst [vmem:[#allocation2 + $0x78] sm:$0xff] %v3879
      %4048 = vst [vmem:[#allocation2 + $0x80] sm:$0xff] %v3880
      %4049 = vst [vmem:[#allocation2 + $0x88] sm:$0xff] %v3881
      %4050 = vst [vmem:[#allocation2 + $0x90] sm:$0xff] %v3882
      %4051 = vst [vmem:[#allocation2 + $0x98] sm:$0xff] %v3883
      %4052 = vst.msk [vmem:[#allocation2 + $0xa0] sm:$0xff] %vm499, %v3884
      %4053 = vst [vmem:[#allocation2 + $0xa8] sm:$0xff] %v3885
      %4054 = vst [vmem:[#allocation2 + $0xb0] sm:$0xff] %v3886
      %4055 = vst [vmem:[#allocation2 + $0xb8] sm:$0xff] %v3887
      %4056 = vst [vmem:[#allocation2 + $0xc0] sm:$0xff] %v3888
      %4057 = vst [vmem:[#allocation2 + $0xc8] sm:$0xff] %v3889
      %4058 = vst [vmem:[#allocation2 + $0xd0] sm:$0xff] %v3890
      %4059 = vst.msk [vmem:[#allocation2 + $0xd8] sm:$0xff] %vm499, %v3891
      %4060 = vst [vmem:[#allocation2 + $0xe0] sm:$0xff] %v3892
      %4061 = vst [vmem:[#allocation2 + $0xe8] sm:$0xff] %v3893
      %4062 = vst [vmem:[#allocation2 + $0xf0] sm:$0xff] %v3894
      %4063 = vst [vmem:[#allocation2 + $0xf8] sm:$0xff] %v3895
      %4064 = vst [vmem:[#allocation2 + $0x100] sm:$0xff] %v3896
      %4065 = vst [vmem:[#allocation2 + $0x108] sm:$0xff] %v3897
      %4066 = vst.msk [vmem:[#allocation2 + $0x110] sm:$0xff] %vm499, %v3898
      %4067 = vst [vmem:[#allocation2 + $0x118] sm:$0xff] %v3899
      %4068 = vst [vmem:[#allocation2 + $0x120] sm:$0xff] %v3900
      %4069 = vst [vmem:[#allocation2 + $0x128] sm:$0xff] %v3901
      %4070 = vst [vmem:[#allocation2 + $0x130] sm:$0xff] %v3902
      %4071 = vst [vmem:[#allocation2 + $0x138] sm:$0xff] %v3903
      %4072 = vst [vmem:[#allocation2 + $0x140] sm:$0xff] %v3904
      %4073 = vst.msk [vmem:[#allocation2 + $0x148] sm:$0xff] %vm499, %v3905
      %4074 = vst [vmem:[#allocation2 + $0x150] sm:$0xff] %v3906
      %4075 = vst [vmem:[#allocation2 + $0x158] sm:$0xff] %v3907
      %4076 = vst [vmem:[#allocation2 + $0x160] sm:$0xff] %v3908
      %4077 = vst [vmem:[#allocation2 + $0x168] sm:$0xff] %v3909
      %4078 = vst [vmem:[#allocation2 + $0x170] sm:$0xff] %v3910
      %4079 = vst [vmem:[#allocation2 + $0x178] sm:$0xff] %v3911
      %4080 = vst.msk [vmem:[#allocation2 + $0x180] sm:$0xff] %vm499, %v3912
      %4081 = vst [vmem:[#allocation2 + $0x188] sm:$0xff] %v3913
      %4082 = vst [vmem:[#allocation2 + $0x190] sm:$0xff] %v3914
      %4083 = vst [vmem:[#allocation2 + $0x198] sm:$0xff] %v3915
      %4084 = vst [vmem:[#allocation2 + $0x1a0] sm:$0xff] %v3916
      %4085 = vst [vmem:[#allocation2 + $0x1a8] sm:$0xff] %v3917
      %4086 = vst [vmem:[#allocation2 + $0x1b0] sm:$0xff] %v3918
      %4087 = vst.msk [vmem:[#allocation2 + $0x1b8] sm:$0xff] %vm499, %v3919
      %4088 = vst [vmem:[#allocation2 + $0x1c0] sm:$0xff] %v3920
      %4089 = vst [vmem:[#allocation2 + $0x1c8] sm:$0xff] %v3921
      %4090 = vst [vmem:[#allocation2 + $0x1d0] sm:$0xff] %v3922
      %4091 = vst [vmem:[#allocation2 + $0x1d8] sm:$0xff] %v3923
      %4092 = vst [vmem:[#allocation2 + $0x1e0] sm:$0xff] %v3924
      %4093 = vst [vmem:[#allocation2 + $0x1e8] sm:$0xff] %v3925
      %4094 = vst.msk [vmem:[#allocation2 + $0x1f0] sm:$0xff] %vm499, %v3926
      %4095 = vst [vmem:[#allocation2 + $0x1f8] sm:$0xff] %v3927
      %4096 = vst [vmem:[#allocation2 + $0x200] sm:$0xff] %v3928
      %4097 = vst [vmem:[#allocation2 + $0x208] sm:$0xff] %v3929
      %4098 = vst [vmem:[#allocation2 + $0x210] sm:$0xff] %v3930
      %4099 = vst [vmem:[#allocation2 + $0x218] sm:$0xff] %v3931
      %4100 = vst [vmem:[#allocation2 + $0x220] sm:$0xff] %v3932
      %4101 = vst.msk [vmem:[#allocation2 + $0x228] sm:$0xff] %vm499, %v3933
      %4102 = vst [vmem:[#allocation2 + $0x230] sm:$0xff] %v3934
      %4103 = vst [vmem:[#allocation2 + $0x238] sm:$0xff] %v3935
      %4104 = vst [vmem:[#allocation2 + $0x240] sm:$0xff] %v3936
      %4105 = vst [vmem:[#allocation2 + $0x248] sm:$0xff] %v3937
      %4106 = vst [vmem:[#allocation2 + $0x250] sm:$0xff] %v3938
      %4107 = vst [vmem:[#allocation2 + $0x258] sm:$0xff] %v3939
      %4108 = vst.msk [vmem:[#allocation2 + $0x260] sm:$0xff] %vm499, %v3940
      %4109 = vst [vmem:[#allocation2 + $0x268] sm:$0xff] %v3941
      %4110 = vst [vmem:[#allocation2 + $0x270] sm:$0xff] %v3942
      %4111 = vst [vmem:[#allocation2 + $0x278] sm:$0xff] %v3943
      %4112 = vst [vmem:[#allocation2 + $0x280] sm:$0xff] %v3944
      %4113 = vst [vmem:[#allocation2 + $0x288] sm:$0xff] %v3945
      %4114 = vst [vmem:[#allocation2 + $0x290] sm:$0xff] %v3946
      %4115 = vst.msk [vmem:[#allocation2 + $0x298] sm:$0xff] %vm499, %v3947
      %4116 = vst [vmem:[#allocation2 + $0x2a0] sm:$0xff] %v3948
      %4117 = vst [vmem:[#allocation2 + $0x2a8] sm:$0xff] %v3949
      %4118 = vst [vmem:[#allocation2 + $0x2b0] sm:$0xff] %v3950
      %4119 = vst [vmem:[#allocation2 + $0x2b8] sm:$0xff] %v3951
      %4120 = vst [vmem:[#allocation2 + $0x2c0] sm:$0xff] %v3952
      %4121 = vst [vmem:[#allocation2 + $0x2c8] sm:$0xff] %v3953
      %4122 = vst.msk [vmem:[#allocation2 + $0x2d0] sm:$0xff] %vm499, %v3954
      %4123 = vst [vmem:[#allocation2 + $0x2d8] sm:$0xff] %v3955
      %4124 = vst [vmem:[#allocation2 + $0x2e0] sm:$0xff] %v3956
      %4125 = vst [vmem:[#allocation2 + $0x2e8] sm:$0xff] %v3957
      %4126 = vst [vmem:[#allocation2 + $0x2f0] sm:$0xff] %v3958
      %4127 = vst [vmem:[#allocation2 + $0x2f8] sm:$0xff] %v3959
      %4128 = vst [vmem:[#allocation2 + $0x300] sm:$0xff] %v3960
      %4129 = vst.msk [vmem:[#allocation2 + $0x308] sm:$0xff] %vm499, %v3961
      %4130 = vst [vmem:[#allocation2 + $0x310] sm:$0xff] %v3962
      %4131 = vst [vmem:[#allocation2 + $0x318] sm:$0xff] %v3963
      %4132 = vst [vmem:[#allocation2 + $0x320] sm:$0xff] %v3964
      %4133 = vst [vmem:[#allocation2 + $0x328] sm:$0xff] %v3965
      %4134 = vst [vmem:[#allocation2 + $0x330] sm:$0xff] %v3966
      %4135 = vst [vmem:[#allocation2 + $0x338] sm:$0xff] %v3967
      %4136 = vst.msk [vmem:[#allocation2 + $0x340] sm:$0xff] %vm499, %v3968
      %4137 = vst [vmem:[#allocation2 + $0x348] sm:$0xff] %v3969
      %4138 = vst [vmem:[#allocation2 + $0x350] sm:$0xff] %v3970
      %4139 = vst [vmem:[#allocation2 + $0x358] sm:$0xff] %v3971
      %4140 = vst [vmem:[#allocation2 + $0x360] sm:$0xff] %v3972
      %4141 = vst [vmem:[#allocation2 + $0x368] sm:$0xff] %v3973
      %4142 = vst [vmem:[#allocation2 + $0x370] sm:$0xff] %v3974
      %4143 = vst.msk [vmem:[#allocation2 + $0x378] sm:$0xff] %vm499, %v3975
      %4144 = vst [vmem:[#allocation2 + $0x380] sm:$0xff] %v3976
      %4145 = vst [vmem:[#allocation2 + $0x388] sm:$0xff] %v3977
      %4146 = vst [vmem:[#allocation2 + $0x390] sm:$0xff] %v3978
      %4147 = vst [vmem:[#allocation2 + $0x398] sm:$0xff] %v3979
      %4148 = vst [vmem:[#allocation2 + $0x3a0] sm:$0xff] %v3980
      %4149 = vst [vmem:[#allocation2 + $0x3a8] sm:$0xff] %v3981
      %4150 = vst.msk [vmem:[#allocation2 + $0x3b0] sm:$0xff] %vm499, %v3982
      %4151 = vst [vmem:[#allocation2 + $0x3b8] sm:$0xff] %v3983
      %4152 = vst [vmem:[#allocation2 + $0x3c0] sm:$0xff] %v3984
      %4153 = vst [vmem:[#allocation2 + $0x3c8] sm:$0xff] %v3985
      %4154 = vst [vmem:[#allocation2 + $0x3d0] sm:$0xff] %v3986
      %4155 = vst [vmem:[#allocation2 + $0x3d8] sm:$0xff] %v3987
      %4156 = vst [vmem:[#allocation2 + $0x3e0] sm:$0xff] %v3988
      %4157 = vst.msk [vmem:[#allocation2 + $0x3e8] sm:$0xff] %vm499, %v3989
      %4158 = vst [vmem:[#allocation2 + $0x3f0] sm:$0xff] %v3990
      %4159 = vst [vmem:[#allocation2 + $0x3f8] sm:$0xff] %v3991
      %4160 = vst [vmem:[#allocation2 + $0x400] sm:$0xff] %v3992
      %4161 = vst [vmem:[#allocation2 + $0x408] sm:$0xff] %v3993
      %4162 = vst [vmem:[#allocation2 + $0x410] sm:$0xff] %v3994
      %4163 = vst [vmem:[#allocation2 + $0x418] sm:$0xff] %v3995
      %4164 = vst.msk [vmem:[#allocation2 + $0x420] sm:$0xff] %vm499, %v3996
      %4165 = vst [vmem:[#allocation2 + $0x428] sm:$0xff] %v3997
      %4166 = vst [vmem:[#allocation2 + $0x430] sm:$0xff] %v3998
      %4167 = vst [vmem:[#allocation2 + $0x438] sm:$0xff] %v3999
      %4168 = vst [vmem:[#allocation2 + $0x440] sm:$0xff] %v4000
      %4169 = vst [vmem:[#allocation2 + $0x448] sm:$0xff] %v4001
      %4170 = vst [vmem:[#allocation2 + $0x450] sm:$0xff] %v4002
      %4171 = vst.msk [vmem:[#allocation2 + $0x458] sm:$0xff] %vm499, %v4003
      %4172 = vst [vmem:[#allocation2 + $0x460] sm:$0xff] %v4004
      %4173 = vst [vmem:[#allocation2 + $0x468] sm:$0xff] %v4005
      %4174 = vst [vmem:[#allocation2 + $0x470] sm:$0xff] %v4006
      %4175 = vst [vmem:[#allocation2 + $0x478] sm:$0xff] %v4007
      %4176 = vst [vmem:[#allocation2 + $0x480] sm:$0xff] %v4008
      %4177 = vst [vmem:[#allocation2 + $0x488] sm:$0xff] %v4009
      %4178 = vst.msk [vmem:[#allocation2 + $0x490] sm:$0xff] %vm499, %v4010
      %4179 = vst [vmem:[#allocation2 + $0x498] sm:$0xff] %v4011
      %4180 = vst [vmem:[#allocation2 + $0x4a0] sm:$0xff] %v4012
      %4181 = vst [vmem:[#allocation2 + $0x4a8] sm:$0xff] %v4013
      %4182 = vst [vmem:[#allocation2 + $0x4b0] sm:$0xff] %v4014
      %4183 = vst [vmem:[#allocation2 + $0x4b8] sm:$0xff] %v4015
      %4184 = vst [vmem:[#allocation2 + $0x4c0] sm:$0xff] %v4016
      %4185 = vst.msk [vmem:[#allocation2 + $0x4c8] sm:$0xff] %vm499, %v4017
      %4186 = vst [vmem:[#allocation2 + $0x4d0] sm:$0xff] %v4018
      %4187 = vst [vmem:[#allocation2 + $0x4d8] sm:$0xff] %v4019
      %4188 = vst [vmem:[#allocation2 + $0x4e0] sm:$0xff] %v4020
      %4189 = vst [vmem:[#allocation2 + $0x4e8] sm:$0xff] %v4021
      %4190 = vst [vmem:[#allocation2 + $0x4f0] sm:$0xff] %v4022
      %4191 = vst [vmem:[#allocation2 + $0x4f8] sm:$0xff] %v4023
      %4192 = vst.msk [vmem:[#allocation2 + $0x500] sm:$0xff] %vm499, %v4024
      %4193 = vst [vmem:[#allocation2 + $0x508] sm:$0xff] %v4025
      %4194 = vst [vmem:[#allocation2 + $0x510] sm:$0xff] %v4026
      %4195 = vst [vmem:[#allocation2 + $0x518] sm:$0xff] %v4027
      %4196 = vst [vmem:[#allocation2 + $0x520] sm:$0xff] %v4028
      %4197 = vst [vmem:[#allocation2 + $0x528] sm:$0xff] %v4029
      %4198 = vst [vmem:[#allocation2 + $0x530] sm:$0xff] %v4030
      %4199 = vst.msk [vmem:[#allocation2 + $0x538] sm:$0xff] %vm499, %v4031
      %p4200 = scmp.eq.s32.totalorder %s20, 2
      // Predicated region
      $region41: #{bn_relu_conv1x1.1} parent=35 // pred_check
        %p4201 = pneg %p4200
      $region42: #{bn_relu_conv1x1.1} parent=35 // pred_check_branch
        %4203 = sbr.rel (%p4201) target = $region44
      $region43: #{bn_relu_conv1x1.1} parent=35 // pred_region
        %v4204 = vld [vmem:[#allocation2] sm:$0xff]
        %v4205 = vld [vmem:[#allocation2 + $0x8] sm:$0xff]
        %v4206 = vld [vmem:[#allocation2 + $0x10] sm:$0xff]
        %v4207 = vld [vmem:[#allocation2 + $0x18] sm:$0xff]
        %v4208 = vld [vmem:[#allocation2 + $0x20] sm:$0xff]
        %v4209 = vld [vmem:[#allocation2 + $0x28] sm:$0xff]
        %v4210 = vld [vmem:[#allocation2 + $0x30] sm:$0xff]
        %v4211 = vld [vmem:[#allocation2 + $0x38] sm:$0xff]
        %v4212 = vld [vmem:[#allocation2 + $0x40] sm:$0xff]
        %v4213 = vld [vmem:[#allocation2 + $0x48] sm:$0xff]
        %v4214 = vld [vmem:[#allocation2 + $0x50] sm:$0xff]
        %v4215 = vld [vmem:[#allocation2 + $0x58] sm:$0xff]
        %v4216 = vld [vmem:[#allocation2 + $0x60] sm:$0xff]
        %v4217 = vld [vmem:[#allocation2 + $0x68] sm:$0xff]
        %v4218 = vld [vmem:[#allocation2 + $0x70] sm:$0xff]
        %v4219 = vld [vmem:[#allocation2 + $0x78] sm:$0xff]
        %v4220 = vld [vmem:[#allocation2 + $0x80] sm:$0xff]
        %v4221 = vld [vmem:[#allocation2 + $0x88] sm:$0xff]
        %v4222 = vld [vmem:[#allocation2 + $0x90] sm:$0xff]
        %v4223 = vld [vmem:[#allocation2 + $0x98] sm:$0xff]
        %v4224 = vld [vmem:[#allocation2 + $0xa0] sm:$0xff]
        %v4225 = vld [vmem:[#allocation2 + $0xa8] sm:$0xff]
        %v4226 = vld [vmem:[#allocation2 + $0xb0] sm:$0xff]
        %v4227 = vld [vmem:[#allocation2 + $0xb8] sm:$0xff]
        %v4228 = vld [vmem:[#allocation2 + $0xc0] sm:$0xff]
        %v4229 = vld [vmem:[#allocation2 + $0xc8] sm:$0xff]
        %v4230 = vld [vmem:[#allocation2 + $0xd0] sm:$0xff]
        %v4231 = vld [vmem:[#allocation2 + $0xd8] sm:$0xff]
        %v4232 = vld [vmem:[#allocation2 + $0xe0] sm:$0xff]
        %v4233 = vld [vmem:[#allocation2 + $0xe8] sm:$0xff]
        %v4234 = vld [vmem:[#allocation2 + $0xf0] sm:$0xff]
        %v4235 = vld [vmem:[#allocation2 + $0xf8] sm:$0xff]
        %v4236 = vld [vmem:[#allocation2 + $0x100] sm:$0xff]
        %v4237 = vld [vmem:[#allocation2 + $0x108] sm:$0xff]
        %v4238 = vld [vmem:[#allocation2 + $0x110] sm:$0xff]
        %v4239 = vld [vmem:[#allocation2 + $0x118] sm:$0xff]
        %v4240 = vld [vmem:[#allocation2 + $0x120] sm:$0xff]
        %v4241 = vld [vmem:[#allocation2 + $0x128] sm:$0xff]
        %v4242 = vld [vmem:[#allocation2 + $0x130] sm:$0xff]
        %v4243 = vld [vmem:[#allocation2 + $0x138] sm:$0xff]
        %v4244 = vld [vmem:[#allocation2 + $0x140] sm:$0xff]
        %v4245 = vld [vmem:[#allocation2 + $0x148] sm:$0xff]
        %v4246 = vld [vmem:[#allocation2 + $0x150] sm:$0xff]
        %v4247 = vld [vmem:[#allocation2 + $0x158] sm:$0xff]
        %v4248 = vld [vmem:[#allocation2 + $0x160] sm:$0xff]
        %v4249 = vld [vmem:[#allocation2 + $0x168] sm:$0xff]
        %v4250 = vld [vmem:[#allocation2 + $0x170] sm:$0xff]
        %v4251 = vld [vmem:[#allocation2 + $0x178] sm:$0xff]
        %v4252 = vld [vmem:[#allocation2 + $0x180] sm:$0xff]
        %v4253 = vld [vmem:[#allocation2 + $0x188] sm:$0xff]
        %v4254 = vld [vmem:[#allocation2 + $0x190] sm:$0xff]
        %v4255 = vld [vmem:[#allocation2 + $0x198] sm:$0xff]
        %v4256 = vld [vmem:[#allocation2 + $0x1a0] sm:$0xff]
        %v4257 = vld [vmem:[#allocation2 + $0x1a8] sm:$0xff]
        %v4258 = vld [vmem:[#allocation2 + $0x1b0] sm:$0xff]
        %v4259 = vld [vmem:[#allocation2 + $0x1b8] sm:$0xff]
        %v4260 = vld [vmem:[#allocation2 + $0x1c0] sm:$0xff]
        %v4261 = vld [vmem:[#allocation2 + $0x1c8] sm:$0xff]
        %v4262 = vld [vmem:[#allocation2 + $0x1d0] sm:$0xff]
        %v4263 = vld [vmem:[#allocation2 + $0x1d8] sm:$0xff]
        %v4264 = vld [vmem:[#allocation2 + $0x1e0] sm:$0xff]
        %v4265 = vld [vmem:[#allocation2 + $0x1e8] sm:$0xff]
        %v4266 = vld [vmem:[#allocation2 + $0x1f0] sm:$0xff]
        %v4267 = vld [vmem:[#allocation2 + $0x1f8] sm:$0xff]
        %v4268 = vld [vmem:[#allocation2 + $0x200] sm:$0xff]
        %v4269 = vld [vmem:[#allocation2 + $0x208] sm:$0xff]
        %v4270 = vld [vmem:[#allocation2 + $0x210] sm:$0xff]
        %v4271 = vld [vmem:[#allocation2 + $0x218] sm:$0xff]
        %v4272 = vld [vmem:[#allocation2 + $0x220] sm:$0xff]
        %v4273 = vld [vmem:[#allocation2 + $0x228] sm:$0xff]
        %v4274 = vld [vmem:[#allocation2 + $0x230] sm:$0xff]
        %v4275 = vld [vmem:[#allocation2 + $0x238] sm:$0xff]
        %v4276 = vld [vmem:[#allocation2 + $0x240] sm:$0xff]
        %v4277 = vld [vmem:[#allocation2 + $0x248] sm:$0xff]
        %v4278 = vld [vmem:[#allocation2 + $0x250] sm:$0xff]
        %v4279 = vld [vmem:[#allocation2 + $0x258] sm:$0xff]
        %v4280 = vld [vmem:[#allocation2 + $0x260] sm:$0xff]
        %v4281 = vld [vmem:[#allocation2 + $0x268] sm:$0xff]
        %v4282 = vld [vmem:[#allocation2 + $0x270] sm:$0xff]
        %v4283 = vld [vmem:[#allocation2 + $0x278] sm:$0xff]
        %v4284 = vld [vmem:[#allocation2 + $0x280] sm:$0xff]
        %v4285 = vld [vmem:[#allocation2 + $0x288] sm:$0xff]
        %v4286 = vld [vmem:[#allocation2 + $0x290] sm:$0xff]
        %v4287 = vld [vmem:[#allocation2 + $0x298] sm:$0xff]
        %v4288 = vld [vmem:[#allocation2 + $0x2a0] sm:$0xff]
        %v4289 = vld [vmem:[#allocation2 + $0x2a8] sm:$0xff]
        %v4290 = vld [vmem:[#allocation2 + $0x2b0] sm:$0xff]
        %v4291 = vld [vmem:[#allocation2 + $0x2b8] sm:$0xff]
        %v4292 = vld [vmem:[#allocation2 + $0x2c0] sm:$0xff]
        %v4293 = vld [vmem:[#allocation2 + $0x2c8] sm:$0xff]
        %v4294 = vld [vmem:[#allocation2 + $0x2d0] sm:$0xff]
        %v4295 = vld [vmem:[#allocation2 + $0x2d8] sm:$0xff]
        %v4296 = vld [vmem:[#allocation2 + $0x2e0] sm:$0xff]
        %v4297 = vld [vmem:[#allocation2 + $0x2e8] sm:$0xff]
        %v4298 = vld [vmem:[#allocation2 + $0x2f0] sm:$0xff]
        %v4299 = vld [vmem:[#allocation2 + $0x2f8] sm:$0xff]
        %v4300 = vld [vmem:[#allocation2 + $0x300] sm:$0xff]
        %v4301 = vld [vmem:[#allocation2 + $0x308] sm:$0xff]
        %v4302 = vld [vmem:[#allocation2 + $0x310] sm:$0xff]
        %v4303 = vld [vmem:[#allocation2 + $0x318] sm:$0xff]
        %v4304 = vld [vmem:[#allocation2 + $0x320] sm:$0xff]
        %v4305 = vld [vmem:[#allocation2 + $0x328] sm:$0xff]
        %v4306 = vld [vmem:[#allocation2 + $0x330] sm:$0xff]
        %v4307 = vld [vmem:[#allocation2 + $0x338] sm:$0xff]
        %v4308 = vld [vmem:[#allocation2 + $0x340] sm:$0xff]
        %v4309 = vld [vmem:[#allocation2 + $0x348] sm:$0xff]
        %v4310 = vld [vmem:[#allocation2 + $0x350] sm:$0xff]
        %v4311 = vld [vmem:[#allocation2 + $0x358] sm:$0xff]
        %v4312 = vld [vmem:[#allocation2 + $0x360] sm:$0xff]
        %v4313 = vld [vmem:[#allocation2 + $0x368] sm:$0xff]
        %v4314 = vld [vmem:[#allocation2 + $0x370] sm:$0xff]
        %v4315 = vld [vmem:[#allocation2 + $0x378] sm:$0xff]
        %v4316 = vld [vmem:[#allocation2 + $0x380] sm:$0xff]
        %v4317 = vld [vmem:[#allocation2 + $0x388] sm:$0xff]
        %v4318 = vld [vmem:[#allocation2 + $0x390] sm:$0xff]
        %v4319 = vld [vmem:[#allocation2 + $0x398] sm:$0xff]
        %v4320 = vld [vmem:[#allocation2 + $0x3a0] sm:$0xff]
        %v4321 = vld [vmem:[#allocation2 + $0x3a8] sm:$0xff]
        %v4322 = vld [vmem:[#allocation2 + $0x3b0] sm:$0xff]
        %v4323 = vld [vmem:[#allocation2 + $0x3b8] sm:$0xff]
        %v4324 = vld [vmem:[#allocation2 + $0x3c0] sm:$0xff]
        %v4325 = vld [vmem:[#allocation2 + $0x3c8] sm:$0xff]
        %v4326 = vld [vmem:[#allocation2 + $0x3d0] sm:$0xff]
        %v4327 = vld [vmem:[#allocation2 + $0x3d8] sm:$0xff]
        %v4328 = vld [vmem:[#allocation2 + $0x3e0] sm:$0xff]
        %v4329 = vld [vmem:[#allocation2 + $0x3e8] sm:$0xff]
        %v4330 = vld [vmem:[#allocation2 + $0x3f0] sm:$0xff]
        %v4331 = vld [vmem:[#allocation2 + $0x3f8] sm:$0xff]
        %v4332 = vld [vmem:[#allocation2 + $0x400] sm:$0xff]
        %v4333 = vld [vmem:[#allocation2 + $0x408] sm:$0xff]
        %v4334 = vld [vmem:[#allocation2 + $0x410] sm:$0xff]
        %v4335 = vld [vmem:[#allocation2 + $0x418] sm:$0xff]
        %v4336 = vld [vmem:[#allocation2 + $0x420] sm:$0xff]
        %v4337 = vld [vmem:[#allocation2 + $0x428] sm:$0xff]
        %v4338 = vld [vmem:[#allocation2 + $0x430] sm:$0xff]
        %v4339 = vld [vmem:[#allocation2 + $0x438] sm:$0xff]
        %v4340 = vld [vmem:[#allocation2 + $0x440] sm:$0xff]
        %v4341 = vld [vmem:[#allocation2 + $0x448] sm:$0xff]
        %v4342 = vld [vmem:[#allocation2 + $0x450] sm:$0xff]
        %v4343 = vld [vmem:[#allocation2 + $0x458] sm:$0xff]
        %v4344 = vld [vmem:[#allocation2 + $0x460] sm:$0xff]
        %v4345 = vld [vmem:[#allocation2 + $0x468] sm:$0xff]
        %v4346 = vld [vmem:[#allocation2 + $0x470] sm:$0xff]
        %v4347 = vld [vmem:[#allocation2 + $0x478] sm:$0xff]
        %v4348 = vld [vmem:[#allocation2 + $0x480] sm:$0xff]
        %v4349 = vld [vmem:[#allocation2 + $0x488] sm:$0xff]
        %v4350 = vld [vmem:[#allocation2 + $0x490] sm:$0xff]
        %v4351 = vld [vmem:[#allocation2 + $0x498] sm:$0xff]
        %v4352 = vld [vmem:[#allocation2 + $0x4a0] sm:$0xff]
        %v4353 = vld [vmem:[#allocation2 + $0x4a8] sm:$0xff]
        %v4354 = vld [vmem:[#allocation2 + $0x4b0] sm:$0xff]
        %v4355 = vld [vmem:[#allocation2 + $0x4b8] sm:$0xff]
        %v4356 = vld [vmem:[#allocation2 + $0x4c0] sm:$0xff]
        %v4357 = vld [vmem:[#allocation2 + $0x4c8] sm:$0xff]
        %v4358 = vld [vmem:[#allocation2 + $0x4d0] sm:$0xff]
        %v4359 = vld [vmem:[#allocation2 + $0x4d8] sm:$0xff]
        %v4360 = vld [vmem:[#allocation2 + $0x4e0] sm:$0xff]
        %v4361 = vld [vmem:[#allocation2 + $0x4e8] sm:$0xff]
        %v4362 = vld [vmem:[#allocation2 + $0x4f0] sm:$0xff]
        %v4363 = vld [vmem:[#allocation2 + $0x4f8] sm:$0xff]
        %v4364 = vld [vmem:[#allocation2 + $0x500] sm:$0xff]
        %v4365 = vld [vmem:[#allocation2 + $0x508] sm:$0xff]
        %v4366 = vld [vmem:[#allocation2 + $0x510] sm:$0xff]
        %v4367 = vld [vmem:[#allocation2 + $0x518] sm:$0xff]
        %v4368 = vld [vmem:[#allocation2 + $0x520] sm:$0xff]
        %v4369 = vld [vmem:[#allocation2 + $0x528] sm:$0xff]
        %v4370 = vld [vmem:[#allocation2 + $0x530] sm:$0xff]
        %v4371 = vld [vmem:[#allocation2 + $0x538] sm:$0xff]
        %4372 = vst [vmem:[%s297] sm:$0xff] %v4204
        %4373 = vst [vmem:[%s297 + $0x8] sm:$0xff] %v4205
        %4374 = vst [vmem:[%s297 + $0x10] sm:$0xff] %v4206
        %4375 = vst [vmem:[%s297 + $0x18] sm:$0xff] %v4207
        %4376 = vst [vmem:[%s297 + $0x20] sm:$0xff] %v4208
        %4377 = vst [vmem:[%s297 + $0x28] sm:$0xff] %v4209
        %4378 = vst.msk [vmem:[%s297 + $0x30] sm:$0xff] %vm499, %v4210
        %4379 = vst [vmem:[%s297 + $0x38] sm:$0xff] %v4211
        %4380 = vst [vmem:[%s297 + $0x40] sm:$0xff] %v4212
        %4381 = vst [vmem:[%s297 + $0x48] sm:$0xff] %v4213
        %4382 = vst [vmem:[%s297 + $0x50] sm:$0xff] %v4214
        %4383 = vst [vmem:[%s297 + $0x58] sm:$0xff] %v4215
        %4384 = vst [vmem:[%s297 + $0x60] sm:$0xff] %v4216
        %4385 = vst.msk [vmem:[%s297 + $0x68] sm:$0xff] %vm499, %v4217
        %4386 = vst [vmem:[%s297 + $0x70] sm:$0xff] %v4218
        %4387 = vst [vmem:[%s297 + $0x78] sm:$0xff] %v4219
        %4388 = vst [vmem:[%s297 + $0x80] sm:$0xff] %v4220
        %4389 = vst [vmem:[%s297 + $0x88] sm:$0xff] %v4221
        %4390 = vst [vmem:[%s297 + $0x90] sm:$0xff] %v4222
        %4391 = vst [vmem:[%s297 + $0x98] sm:$0xff] %v4223
        %4392 = vst.msk [vmem:[%s297 + $0xa0] sm:$0xff] %vm499, %v4224
        %4393 = vst [vmem:[%s297 + $0xa8] sm:$0xff] %v4225
        %4394 = vst [vmem:[%s297 + $0xb0] sm:$0xff] %v4226
        %4395 = vst [vmem:[%s297 + $0xb8] sm:$0xff] %v4227
        %4396 = vst [vmem:[%s297 + $0xc0] sm:$0xff] %v4228
        %4397 = vst [vmem:[%s297 + $0xc8] sm:$0xff] %v4229
        %4398 = vst [vmem:[%s297 + $0xd0] sm:$0xff] %v4230
        %4399 = vst.msk [vmem:[%s297 + $0xd8] sm:$0xff] %vm499, %v4231
        %4400 = vst [vmem:[%s297 + $0xe0] sm:$0xff] %v4232
        %4401 = vst [vmem:[%s297 + $0xe8] sm:$0xff] %v4233
        %4402 = vst [vmem:[%s297 + $0xf0] sm:$0xff] %v4234
        %4403 = vst [vmem:[%s297 + $0xf8] sm:$0xff] %v4235
        %4404 = vst [vmem:[%s297 + $0x100] sm:$0xff] %v4236
        %4405 = vst [vmem:[%s297 + $0x108] sm:$0xff] %v4237
        %4406 = vst.msk [vmem:[%s297 + $0x110] sm:$0xff] %vm499, %v4238
        %4407 = vst [vmem:[%s297 + $0x118] sm:$0xff] %v4239
        %4408 = vst [vmem:[%s297 + $0x120] sm:$0xff] %v4240
        %4409 = vst [vmem:[%s297 + $0x128] sm:$0xff] %v4241
        %4410 = vst [vmem:[%s297 + $0x130] sm:$0xff] %v4242
        %4411 = vst [vmem:[%s297 + $0x138] sm:$0xff] %v4243
        %4412 = vst [vmem:[%s297 + $0x140] sm:$0xff] %v4244
        %4413 = vst.msk [vmem:[%s297 + $0x148] sm:$0xff] %vm499, %v4245
        %4414 = vst [vmem:[%s297 + $0x150] sm:$0xff] %v4246
        %4415 = vst [vmem:[%s297 + $0x158] sm:$0xff] %v4247
        %4416 = vst [vmem:[%s297 + $0x160] sm:$0xff] %v4248
        %4417 = vst [vmem:[%s297 + $0x168] sm:$0xff] %v4249
        %4418 = vst [vmem:[%s297 + $0x170] sm:$0xff] %v4250
        %4419 = vst [vmem:[%s297 + $0x178] sm:$0xff] %v4251
        %4420 = vst.msk [vmem:[%s297 + $0x180] sm:$0xff] %vm499, %v4252
        %4421 = vst [vmem:[%s297 + $0x188] sm:$0xff] %v4253
        %4422 = vst [vmem:[%s297 + $0x190] sm:$0xff] %v4254
        %4423 = vst [vmem:[%s297 + $0x198] sm:$0xff] %v4255
        %4424 = vst [vmem:[%s297 + $0x1a0] sm:$0xff] %v4256
        %4425 = vst [vmem:[%s297 + $0x1a8] sm:$0xff] %v4257
        %4426 = vst [vmem:[%s297 + $0x1b0] sm:$0xff] %v4258
        %4427 = vst.msk [vmem:[%s297 + $0x1b8] sm:$0xff] %vm499, %v4259
        %4428 = vst [vmem:[%s297 + $0x1c0] sm:$0xff] %v4260
        %4429 = vst [vmem:[%s297 + $0x1c8] sm:$0xff] %v4261
        %4430 = vst [vmem:[%s297 + $0x1d0] sm:$0xff] %v4262
        %4431 = vst [vmem:[%s297 + $0x1d8] sm:$0xff] %v4263
        %4432 = vst [vmem:[%s297 + $0x1e0] sm:$0xff] %v4264
        %4433 = vst [vmem:[%s297 + $0x1e8] sm:$0xff] %v4265
        %4434 = vst.msk [vmem:[%s297 + $0x1f0] sm:$0xff] %vm499, %v4266
        %4435 = vst [vmem:[%s297 + $0x1f8] sm:$0xff] %v4267
        %4436 = vst [vmem:[%s297 + $0x200] sm:$0xff] %v4268
        %4437 = vst [vmem:[%s297 + $0x208] sm:$0xff] %v4269
        %4438 = vst [vmem:[%s297 + $0x210] sm:$0xff] %v4270
        %4439 = vst [vmem:[%s297 + $0x218] sm:$0xff] %v4271
        %4440 = vst [vmem:[%s297 + $0x220] sm:$0xff] %v4272
        %4441 = vst.msk [vmem:[%s297 + $0x228] sm:$0xff] %vm499, %v4273
        %4442 = vst [vmem:[%s297 + $0x230] sm:$0xff] %v4274
        %4443 = vst [vmem:[%s297 + $0x238] sm:$0xff] %v4275
        %4444 = vst [vmem:[%s297 + $0x240] sm:$0xff] %v4276
        %4445 = vst [vmem:[%s297 + $0x248] sm:$0xff] %v4277
        %4446 = vst [vmem:[%s297 + $0x250] sm:$0xff] %v4278
        %4447 = vst [vmem:[%s297 + $0x258] sm:$0xff] %v4279
        %4448 = vst.msk [vmem:[%s297 + $0x260] sm:$0xff] %vm499, %v4280
        %4449 = vst [vmem:[%s297 + $0x268] sm:$0xff] %v4281
        %4450 = vst [vmem:[%s297 + $0x270] sm:$0xff] %v4282
        %4451 = vst [vmem:[%s297 + $0x278] sm:$0xff] %v4283
        %4452 = vst [vmem:[%s297 + $0x280] sm:$0xff] %v4284
        %4453 = vst [vmem:[%s297 + $0x288] sm:$0xff] %v4285
        %4454 = vst [vmem:[%s297 + $0x290] sm:$0xff] %v4286
        %4455 = vst.msk [vmem:[%s297 + $0x298] sm:$0xff] %vm499, %v4287
        %4456 = vst [vmem:[%s297 + $0x2a0] sm:$0xff] %v4288
        %4457 = vst [vmem:[%s297 + $0x2a8] sm:$0xff] %v4289
        %4458 = vst [vmem:[%s297 + $0x2b0] sm:$0xff] %v4290
        %4459 = vst [vmem:[%s297 + $0x2b8] sm:$0xff] %v4291
        %4460 = vst [vmem:[%s297 + $0x2c0] sm:$0xff] %v4292
        %4461 = vst [vmem:[%s297 + $0x2c8] sm:$0xff] %v4293
        %4462 = vst.msk [vmem:[%s297 + $0x2d0] sm:$0xff] %vm499, %v4294
        %4463 = vst [vmem:[%s297 + $0x2d8] sm:$0xff] %v4295
        %4464 = vst [vmem:[%s297 + $0x2e0] sm:$0xff] %v4296
        %4465 = vst [vmem:[%s297 + $0x2e8] sm:$0xff] %v4297
        %4466 = vst [vmem:[%s297 + $0x2f0] sm:$0xff] %v4298
        %4467 = vst [vmem:[%s297 + $0x2f8] sm:$0xff] %v4299
        %4468 = vst [vmem:[%s297 + $0x300] sm:$0xff] %v4300
        %4469 = vst.msk [vmem:[%s297 + $0x308] sm:$0xff] %vm499, %v4301
        %4470 = vst [vmem:[%s297 + $0x310] sm:$0xff] %v4302
        %4471 = vst [vmem:[%s297 + $0x318] sm:$0xff] %v4303
        %4472 = vst [vmem:[%s297 + $0x320] sm:$0xff] %v4304
        %4473 = vst [vmem:[%s297 + $0x328] sm:$0xff] %v4305
        %4474 = vst [vmem:[%s297 + $0x330] sm:$0xff] %v4306
        %4475 = vst [vmem:[%s297 + $0x338] sm:$0xff] %v4307
        %4476 = vst.msk [vmem:[%s297 + $0x340] sm:$0xff] %vm499, %v4308
        %4477 = vst [vmem:[%s297 + $0x348] sm:$0xff] %v4309
        %4478 = vst [vmem:[%s297 + $0x350] sm:$0xff] %v4310
        %4479 = vst [vmem:[%s297 + $0x358] sm:$0xff] %v4311
        %4480 = vst [vmem:[%s297 + $0x360] sm:$0xff] %v4312
        %4481 = vst [vmem:[%s297 + $0x368] sm:$0xff] %v4313
        %4482 = vst [vmem:[%s297 + $0x370] sm:$0xff] %v4314
        %4483 = vst.msk [vmem:[%s297 + $0x378] sm:$0xff] %vm499, %v4315
        %4484 = vst [vmem:[%s297 + $0x380] sm:$0xff] %v4316
        %4485 = vst [vmem:[%s297 + $0x388] sm:$0xff] %v4317
        %4486 = vst [vmem:[%s297 + $0x390] sm:$0xff] %v4318
        %4487 = vst [vmem:[%s297 + $0x398] sm:$0xff] %v4319
        %4488 = vst [vmem:[%s297 + $0x3a0] sm:$0xff] %v4320
        %4489 = vst [vmem:[%s297 + $0x3a8] sm:$0xff] %v4321
        %4490 = vst.msk [vmem:[%s297 + $0x3b0] sm:$0xff] %vm499, %v4322
        %4491 = vst [vmem:[%s297 + $0x3b8] sm:$0xff] %v4323
        %4492 = vst [vmem:[%s297 + $0x3c0] sm:$0xff] %v4324
        %4493 = vst [vmem:[%s297 + $0x3c8] sm:$0xff] %v4325
        %4494 = vst [vmem:[%s297 + $0x3d0] sm:$0xff] %v4326
        %4495 = vst [vmem:[%s297 + $0x3d8] sm:$0xff] %v4327
        %4496 = vst [vmem:[%s297 + $0x3e0] sm:$0xff] %v4328
        %4497 = vst.msk [vmem:[%s297 + $0x3e8] sm:$0xff] %vm499, %v4329
        %4498 = vst [vmem:[%s297 + $0x3f0] sm:$0xff] %v4330
        %4499 = vst [vmem:[%s297 + $0x3f8] sm:$0xff] %v4331
        %4500 = vst [vmem:[%s297 + $0x400] sm:$0xff] %v4332
        %4501 = vst [vmem:[%s297 + $0x408] sm:$0xff] %v4333
        %4502 = vst [vmem:[%s297 + $0x410] sm:$0xff] %v4334
        %4503 = vst [vmem:[%s297 + $0x418] sm:$0xff] %v4335
        %4504 = vst.msk [vmem:[%s297 + $0x420] sm:$0xff] %vm499, %v4336
        %4505 = vst [vmem:[%s297 + $0x428] sm:$0xff] %v4337
        %4506 = vst [vmem:[%s297 + $0x430] sm:$0xff] %v4338
        %4507 = vst [vmem:[%s297 + $0x438] sm:$0xff] %v4339
        %4508 = vst [vmem:[%s297 + $0x440] sm:$0xff] %v4340
        %4509 = vst [vmem:[%s297 + $0x448] sm:$0xff] %v4341
        %4510 = vst [vmem:[%s297 + $0x450] sm:$0xff] %v4342
        %4511 = vst.msk [vmem:[%s297 + $0x458] sm:$0xff] %vm499, %v4343
        %4512 = vst [vmem:[%s297 + $0x460] sm:$0xff] %v4344
        %4513 = vst [vmem:[%s297 + $0x468] sm:$0xff] %v4345
        %4514 = vst [vmem:[%s297 + $0x470] sm:$0xff] %v4346
        %4515 = vst [vmem:[%s297 + $0x478] sm:$0xff] %v4347
        %4516 = vst [vmem:[%s297 + $0x480] sm:$0xff] %v4348
        %4517 = vst [vmem:[%s297 + $0x488] sm:$0xff] %v4349
        %4518 = vst.msk [vmem:[%s297 + $0x490] sm:$0xff] %vm499, %v4350
        %4519 = vst [vmem:[%s297 + $0x498] sm:$0xff] %v4351
        %4520 = vst [vmem:[%s297 + $0x4a0] sm:$0xff] %v4352
        %4521 = vst [vmem:[%s297 + $0x4a8] sm:$0xff] %v4353
        %4522 = vst [vmem:[%s297 + $0x4b0] sm:$0xff] %v4354
        %4523 = vst [vmem:[%s297 + $0x4b8] sm:$0xff] %v4355
        %4524 = vst [vmem:[%s297 + $0x4c0] sm:$0xff] %v4356
        %4525 = vst.msk [vmem:[%s297 + $0x4c8] sm:$0xff] %vm499, %v4357
        %4526 = vst [vmem:[%s297 + $0x4d0] sm:$0xff] %v4358
        %4527 = vst [vmem:[%s297 + $0x4d8] sm:$0xff] %v4359
        %4528 = vst [vmem:[%s297 + $0x4e0] sm:$0xff] %v4360
        %4529 = vst [vmem:[%s297 + $0x4e8] sm:$0xff] %v4361
        %4530 = vst [vmem:[%s297 + $0x4f0] sm:$0xff] %v4362
        %4531 = vst [vmem:[%s297 + $0x4f8] sm:$0xff] %v4363
        %4532 = vst.msk [vmem:[%s297 + $0x500] sm:$0xff] %vm499, %v4364
        %4533 = vst [vmem:[%s297 + $0x508] sm:$0xff] %v4365
        %4534 = vst [vmem:[%s297 + $0x510] sm:$0xff] %v4366
        %4535 = vst [vmem:[%s297 + $0x518] sm:$0xff] %v4367
        %4536 = vst [vmem:[%s297 + $0x520] sm:$0xff] %v4368
        %4537 = vst [vmem:[%s297 + $0x528] sm:$0xff] %v4369
        %4538 = vst [vmem:[%s297 + $0x530] sm:$0xff] %v4370
        %4539 = vst.msk [vmem:[%s297 + $0x538] sm:$0xff] %vm499, %v4371
      $region44: #{bn_relu_conv1x1.1} parent=35 // pred_fallthru
        _
      %p4540 = scmp.lt.s32.totalorder %s19, 0
      %s4541 = scalar_select %p4540, %s19, 0
      %s4542 = smul.addr %s4541, 168
      %s4543 = smul.addr %s4542, 8
      %s4544 = scalar_lea.vmem %s4, %s4543
      // Predicated region
      $region45: #{bn_relu_conv1x1.1} parent=35 // pred_check
        %p4545 = pneg %p151
      $region46: #{bn_relu_conv1x1.1} parent=35 // pred_check_branch
        %4547 = sbr.rel (%p4545) target = $region48
      $region47: #{bn_relu_conv1x1.1} parent=35 // pred_region
        _
      $region48: #{bn_relu_conv1x1.1} parent=35 // pred_fallthru
        _
      // Predicated region
      $region49: #{bn_relu_conv1x1.1} parent=35 // pred_check
        %p4548 = pneg %p151
      $region50: #{bn_relu_conv1x1.1} parent=35 // pred_check_branch
        %4550 = sbr.rel (%p4548) target = $region52
      $region51: #{bn_relu_conv1x1.1} parent=35 // pred_region
        %p4551 = scmp.lt.s32.totalorder %s19, 0
        %s4552 = scalar_select %p4551, %s19, 0
        %s4553 = smul.addr %s4552, 168
        %s4554 = smul.addr %s4553, 8
        %s4555 = scalar_lea.vmem %s4, %s4554
      $region52: #{bn_relu_conv1x1.1} parent=35 // pred_fallthru
        _
    $region36: #{bn_relu_conv1x1.1} parent=5 // pred_fallthru
      _
    %p4556 = scmp.le.s32.totalorder 2, %s10
    // Predicated region
    $region53: #{bn_relu_conv1x1.1} parent=5 // pred_check
      %p4557 = pneg %p4556
    $region54: #{bn_relu_conv1x1.1} parent=5 // pred_check_branch
      %4559 = sbr.rel (%p4557) target = $region56
    $region55: #{bn_relu_conv1x1.1} parent=5 // pred_region
      %s4560 = ssub.s32 %s10, 2
    $region56: #{bn_relu_conv1x1.1} parent=5 // pred_fallthru
      _
  $region6: #{bn_relu_conv1x1.1} parent=0 // loop_footer
    %s14 = sadd.s32 1, %s10
  $region7: #{bn_relu_conv1x1.1} parent=0 // loop_footer_branch
    %9 = sbr.rel target = $region3
  $region8: #{bn_relu_conv1x1.1} parent=0 // loop_exit
    _

</llo_original>
